<compile_context>
chip_gen: v6e
topology: v6e:2x2x1
jax: 0.10.0
libtpu: 0.0.40
codegen_flags: <defaults>
</compile_context>

<pallas_src>
import jax
import jax.numpy as jnp
from jax.experimental import pallas as pl
from jax.experimental.pallas import tpu as pltpu

HIDDEN = 768          # LSTM hidden size (== input size in the module)
N_CLASSES = 2
NG = 3 * HIDDEN       # i, g, o gate columns only (f gate is dead with c0 == 0)


def _classifier_kernel(x_ref, wq_ref, s_ref, b_ref, wo_ref, bo_ref, out_ref):
    """One grid step == one LSTM direction: single-step LSTM + its share of the Linear."""
    d = pl.program_id(0)

    x = x_ref[...].astype(jnp.bfloat16)                    # (B, 768) bf16 (cast in-kernel)
    w = wq_ref[0].astype(jnp.bfloat16)                     # (768, 3H) int8 -> bf16 (exact)

    # gates = (x @ W_igo_q) * col_scale + (b_ih + b_hh); W_hh @ h0 term vanishes (h0 == 0).
    acc = jnp.dot(x, w, preferred_element_type=jnp.float32)          # (B, 3H) f32
    gates = acc * s_ref[0] + b_ref[0]                                # dequant + fused bias

    i = jax.nn.sigmoid(gates[:, 0 * HIDDEN:1 * HIDDEN])
    g = jnp.tanh(gates[:, 1 * HIDDEN:2 * HIDDEN])
    o = jax.nn.sigmoid(gates[:, 2 * HIDDEN:3 * HIDDEN])
    h = (o * jnp.tanh(i * g)).astype(jnp.bfloat16)                   # (B, 768) this direction

    # Accumulate this direction's partial logits into the resident output block.
    @pl.when(d == 0)
    def _():
        out_ref[...] = jnp.broadcast_to(bo_ref[...], out_ref.shape)  # init with Linear bias

    out_ref[...] += jnp.dot(h, wo_ref[0], preferred_element_type=jnp.float32)


def sentence_classifier_forward(x, params):
    """x: (B, 768) float32 sentence embeddings. Returns (B, 2) logits."""
    B = x.shape[0]

    grid_spec = pltpu.PrefetchScalarGridSpec(
        num_scalar_prefetch=0,
        grid=(2,),                                                   # direction axis (reduction)
        in_specs=[
            pl.BlockSpec((B, HIDDEN), lambda d: (0, 0)),             # x, resident across steps
            pl.BlockSpec((1, HIDDEN, NG), lambda d: (d, 0, 0)),      # int8 gate weights
            pl.BlockSpec((1, 1, NG), lambda d: (d, 0, 0)),           # per-column scales (f32)
            pl.BlockSpec((1, 1, NG), lambda d: (d, 0, 0)),           # fused biases (f32)
            pl.BlockSpec((1, HIDDEN, N_CLASSES), lambda d: (d, 0, 0)),  # W_out half (bf16)
            pl.BlockSpec((1, N_CLASSES), lambda d: (0, 0)),          # Linear bias
        ],
        out_specs=pl.BlockSpec((B, N_CLASSES), lambda d: (0, 0)),    # same block both steps
    )

    return pl.pallas_call(
        _classifier_kernel,
        out_shape=jax.ShapeDtypeStruct((B, N_CLASSES), jnp.float32),
        grid_spec=grid_spec,
        compiler_params=pltpu.CompilerParams(
            dimension_semantics=("arbitrary",),      # direction axis is an accumulation
            vmem_limit_bytes=32 << 20,               # working set ~4 MiB; safe on v5e/v6e/v7x
        ),
    )(x, params["wq_gates"], params["s_gates"], params["b_gates"],
      params["w_out"], params["b_out"])


def init_params(key):
    """Deterministic synthetic parameters matching the module's shapes."""
    ks = jax.random.split(key, 8)
    bound_lstm = 1.0 / jnp.sqrt(HIDDEN)
    bound_out = 1.0 / jnp.sqrt(2 * HIDDEN)

    def u(k, shape, bound):
        return jax.random.uniform(k, shape, jnp.float32, -bound, bound)

    # PyTorch nn.LSTM weights: weight_ih_l0* is (4H, H), gate order i, f, g, o.
    w_ih_fwd = u(ks[0], (4 * HIDDEN, HIDDEN), bound_lstm)
    w_ih_rev = u(ks[1], (4 * HIDDEN, HIDDEN), bound_lstm)
    b_ih_fwd = u(ks[2], (4 * HIDDEN,), bound_lstm)
    b_hh_fwd = u(ks[3], (4 * HIDDEN,), bound_lstm)
    b_ih_rev = u(ks[4], (4 * HIDDEN,), bound_lstm)
    b_hh_rev = u(ks[5], (4 * HIDDEN,), bound_lstm)
    # nn.Linear(1536, 2): weight (2, 1536), bias (2,).
    w_out = u(ks[6], (N_CLASSES, 2 * HIDDEN), bound_out)
    b_out = u(ks[7], (N_CLASSES,), bound_out)

    def igo_cols(w):                 # (4H, H) -> keep i, g, o rows, transpose -> (H, 3H)
        return jnp.concatenate(
            [w[0:HIDDEN], w[2 * HIDDEN:3 * HIDDEN], w[3 * HIDDEN:4 * HIDDEN]], axis=0).T

    def igo_bias(b):                 # (4H,) -> (3H,)
        return jnp.concatenate(
            [b[0:HIDDEN], b[2 * HIDDEN:3 * HIDDEN], b[3 * HIDDEN:4 * HIDDEN]])

    def quantize(w):                 # (H, 3H) f32 -> int8 weights + per-column f32 scales
        amax = jnp.max(jnp.abs(w), axis=0, keepdims=True)            # (1, 3H)
        scale = jnp.maximum(amax, 1e-12) / 127.0
        q = jnp.clip(jnp.round(w / scale), -127.0, 127.0).astype(jnp.int8)
        return q, scale

    qf, sf = quantize(igo_cols(w_ih_fwd))
    qr, sr = quantize(igo_cols(w_ih_rev))

    wq_gates = jnp.stack([qf, qr])                                   # int8 (2, 768, 2304)
    s_gates = jnp.stack([sf, sr])                                    # f32  (2, 1, 2304)
    b_gates = jnp.stack([igo_bias(b_ih_fwd + b_hh_fwd),
                         igo_bias(b_ih_rev + b_hh_rev)])[:, None, :]  # f32 (2, 1, 2304)

    w_out_t = w_out.T                                                # (1536, 2)
    w_out_split = jnp.stack([w_out_t[:HIDDEN], w_out_t[HIDDEN:]]).astype(jnp.bfloat16)

    return {
        "wq_gates": wq_gates,                        # int8 (2, 768, 2304)  i|g|o columns
        "s_gates": s_gates,                          # f32  (2, 1, 2304)    dequant scales
        "b_gates": b_gates,                          # f32  (2, 1, 2304)    b_ih + b_hh
        "w_out": w_out_split,                        # bf16 (2, 768, 2)
        "b_out": b_out.reshape(1, N_CLASSES),        # f32  (1, 2)
    }


def reference_forward(x, params):
    """Pure-JAX reference with the same quantized math (f32 accumulation everywhere)."""
    hp = jax.lax.Precision.HIGHEST
    x32 = x.astype(jnp.bfloat16).astype(jnp.float32)
    logits = jnp.broadcast_to(params["b_out"], (x.shape[0], N_CLASSES))
    for d in range(2):
        w = params["wq_gates"][d].astype(jnp.float32)                 # dequant target of bf16 cast
        gates = (jnp.dot(x32, w, precision=hp) * params["s_gates"][d, 0]
                 + params["b_gates"][d, 0])
        i = jax.nn.sigmoid(gates[:, 0 * HIDDEN:1 * HIDDEN])
        g = jnp.tanh(gates[:, 1 * HIDDEN:2 * HIDDEN])
        o = jax.nn.sigmoid(gates[:, 2 * HIDDEN:3 * HIDDEN])
        h = (o * jnp.tanh(i * g)).astype(jnp.bfloat16).astype(jnp.float32)
        logits = logits + jnp.dot(h, params["w_out"][d].astype(jnp.float32), precision=hp)
    return logits


if __name__ == "__main__":
    key = jax.random.PRNGKey(0)
    k_x, k_p = jax.random.split(key)

    B = 2
    # Stand-in for SentenceTransformer.encode(sentence): (B, 768) embeddings.
    x = jax.random.normal(k_x, (B, HIDDEN), jnp.float32)
    params = init_params(k_p)

    out = sentence_classifier_forward(x, params)
    out = jax.block_until_ready(out)

    ref = reference_forward(x, params)
    assert out.shape == (B, N_CLASSES)
    assert jnp.allclose(out, ref, atol=2e-3, rtol=2e-3), "mismatch vs reference"

    print("KERNEL_OK")
</pallas_src>

<mosaic_0001>
module attributes {stable_mosaic.version = 11 : i64} {
  func.func @_classifier_kernel(%arg0: i32, %arg1: memref<2x768xf32, #tpu.memory_space<vmem>>, %arg2: memref<1x768x2304xi8, #tpu.memory_space<vmem>>, %arg3: memref<1x1x2304xf32, #tpu.memory_space<vmem>>, %arg4: memref<1x1x2304xf32, #tpu.memory_space<vmem>>, %arg5: memref<1x768x2xbf16, #tpu.memory_space<vmem>>, %arg6: memref<1x2xf32, #tpu.memory_space<vmem>>, %arg7: memref<2x2xf32, #tpu.memory_space<vmem>>) attributes {dimension_semantics = [#tpu.dimension_semantics<arbitrary>], iteration_bounds = array<i64: 2>, scalar_prefetch = 0 : i64, scratch_operands = 0 : i64, tpu.core_type = #tpu.core_type<tc>, window_params = [{pipeline_mode = #tpu.pipeline_mode<synchronous>, transform_indices = @transform_0, window_bounds = array<i64: 2, 768>}, {transform_indices = @transform_1, window_bounds = array<i64: 1, 768, 2304>}, {transform_indices = @transform_2, window_bounds = array<i64: 1, 1, 2304>}, {transform_indices = @transform_3, window_bounds = array<i64: 1, 1, 2304>}, {transform_indices = @transform_4, window_bounds = array<i64: 1, 768, 2>}, {pipeline_mode = #tpu.pipeline_mode<synchronous>, transform_indices = @transform_5, window_bounds = array<i64: 1, 2>}, {pipeline_mode = #tpu.pipeline_mode<synchronous>, transform_indices = @transform_6, window_bounds = array<i64: 2, 2>}]} {
    %c0 = arith.constant 0 : index
    %c0_0 = arith.constant 0 : index
    %0 = vector.load %arg1[%c0, %c0_0] : memref<2x768xf32, #tpu.memory_space<vmem>>, vector<2x768xf32>
    %1 = arith.truncf %0 : vector<2x768xf32> to vector<2x768xbf16>
    %c0_1 = arith.constant 0 : index
    %c0_2 = arith.constant 0 : index
    %c0_3 = arith.constant 0 : index
    %2 = vector.load %arg2[%c0_1, %c0_2, %c0_3] : memref<1x768x2304xi8, #tpu.memory_space<vmem>>, vector<1x768x2304xi8>
    %3 = vector.shape_cast %2 : vector<1x768x2304xi8> to vector<768x2304xi8>
    %4 = arith.sitofp %3 : vector<768x2304xi8> to vector<768x2304xbf16>
    %cst = arith.constant dense<0.000000e+00> : vector<2x2304xf32>
    %5 = tpu.matmul %1, %4, %cst {dimension_numbers = #tpu.dot_dimension_numbers<[1], [0], [0], [1], [0, 0, 1, 1], [], []>} : vector<2x768xbf16>, vector<768x2304xbf16>, vector<2x2304xf32> -> vector<2x2304xf32>
    %c0_4 = arith.constant 0 : index
    %c0_5 = arith.constant 0 : index
    %c0_6 = arith.constant 0 : index
    %6 = vector.load %arg3[%c0_4, %c0_5, %c0_6] : memref<1x1x2304xf32, #tpu.memory_space<vmem>>, vector<1x1x2304xf32>
    %7 = vector.shape_cast %6 : vector<1x1x2304xf32> to vector<1x2304xf32>
    %8 = vector.broadcast %7 : vector<1x2304xf32> to vector<2x2304xf32>
    %9 = arith.mulf %5, %8 : vector<2x2304xf32>
    %c0_7 = arith.constant 0 : index
    %c0_8 = arith.constant 0 : index
    %c0_9 = arith.constant 0 : index
    %10 = vector.load %arg4[%c0_7, %c0_8, %c0_9] : memref<1x1x2304xf32, #tpu.memory_space<vmem>>, vector<1x1x2304xf32>
    %11 = vector.shape_cast %10 : vector<1x1x2304xf32> to vector<1x2304xf32>
    %12 = vector.broadcast %11 : vector<1x2304xf32> to vector<2x2304xf32>
    %13 = arith.addf %9, %12 : vector<2x2304xf32>
    %14 = vector.extract_strided_slice %13 {offsets = [0, 0], sizes = [2, 768], strides = [1, 1]} : vector<2x2304xf32> to vector<2x768xf32>
    %15 = arith.negf %14 : vector<2x768xf32>
    %16 = math.exp %15 : vector<2x768xf32>
    %cst_10 = arith.constant 1.000000e+00 : f32
    %17 = vector.broadcast %cst_10 : f32 to vector<2x768xf32>
    %18 = arith.addf %17, %16 : vector<2x768xf32>
    %19 = arith.divf %17, %18 : vector<2x768xf32>
    %20 = vector.extract_strided_slice %13 {offsets = [0, 768], sizes = [2, 768], strides = [1, 1]} : vector<2x2304xf32> to vector<2x768xf32>
    %21 = math.tanh %20 : vector<2x768xf32>
    %22 = vector.extract_strided_slice %13 {offsets = [0, 1536], sizes = [2, 768], strides = [1, 1]} : vector<2x2304xf32> to vector<2x768xf32>
    %23 = arith.negf %22 : vector<2x768xf32>
    %24 = math.exp %23 : vector<2x768xf32>
    %cst_11 = arith.constant 1.000000e+00 : f32
    %25 = vector.broadcast %cst_11 : f32 to vector<2x768xf32>
    %26 = arith.addf %25, %24 : vector<2x768xf32>
    %27 = arith.divf %25, %26 : vector<2x768xf32>
    %28 = arith.mulf %19, %21 : vector<2x768xf32>
    %29 = math.tanh %28 : vector<2x768xf32>
    %30 = arith.mulf %27, %29 : vector<2x768xf32>
    %31 = arith.truncf %30 : vector<2x768xf32> to vector<2x768xbf16>
    %c0_i32 = arith.constant 0 : i32
    %32 = arith.cmpi eq, %arg0, %c0_i32 : i32
    %33 = arith.extui %32 : i1 to i32
    %c0_i32_12 = arith.constant 0 : i32
    %34 = arith.cmpi ne, %33, %c0_i32_12 : i32
    scf.if %34 {
      %c0_21 = arith.constant 0 : index
      %c0_22 = arith.constant 0 : index
      %41 = vector.load %arg6[%c0_21, %c0_22] : memref<1x2xf32, #tpu.memory_space<vmem>>, vector<1x2xf32>
      %42 = vector.shape_cast %41 : vector<1x2xf32> to vector<1x2xf32>
      %43 = vector.broadcast %42 : vector<1x2xf32> to vector<2x2xf32>
      %c0_23 = arith.constant 0 : index
      %c0_24 = arith.constant 0 : index
      %44 = vector.load %arg7[%c0_23, %c0_24] : memref<2x2xf32, #tpu.memory_space<vmem>>, vector<2x2xf32>
      tpu.vector_store %arg7[%c0_23, %c0_24], %43 {strides = array<i32>} : memref<2x2xf32, #tpu.memory_space<vmem>>, vector<2x2xf32>,
    } else {
    }
    %c0_13 = arith.constant 0 : index
    %c0_14 = arith.constant 0 : index
    %35 = vector.load %arg7[%c0_13, %c0_14] : memref<2x2xf32, #tpu.memory_space<vmem>>, vector<2x2xf32>
    %c0_15 = arith.constant 0 : index
    %c0_16 = arith.constant 0 : index
    %c0_17 = arith.constant 0 : index
    %36 = vector.load %arg5[%c0_15, %c0_16, %c0_17] : memref<1x768x2xbf16, #tpu.memory_space<vmem>>, vector<1x768x2xbf16>
    %37 = vector.shape_cast %36 : vector<1x768x2xbf16> to vector<768x2xbf16>
    %cst_18 = arith.constant dense<0.000000e+00> : vector<2x2xf32>
    %38 = tpu.matmul %31, %37, %cst_18 {dimension_numbers = #tpu.dot_dimension_numbers<[1], [0], [0], [1], [0, 0, 1, 1], [], []>} : vector<2x768xbf16>, vector<768x2xbf16>, vector<2x2xf32> -> vector<2x2xf32>
    %39 = arith.addf %35, %38 : vector<2x2xf32>
    %c0_19 = arith.constant 0 : index
    %c0_20 = arith.constant 0 : index
    %40 = vector.load %arg7[%c0_19, %c0_20] : memref<2x2xf32, #tpu.memory_space<vmem>>, vector<2x2xf32>
    tpu.vector_store %arg7[%c0_19, %c0_20], %39 {strides = array<i32>} : memref<2x2xf32, #tpu.memory_space<vmem>>, vector<2x2xf32>,
    return
  }
  func.func @transform_0(%arg0: i32) -> (i32, i32) {
    %c0_i32 = arith.constant 0 : i32
    %c0_i32_0 = arith.constant 0 : i32
    %c0_i32_1 = arith.constant 0 : i32
    return %c0_i32, %c0_i32_0 : i32, i32
  }
  func.func @transform_1(%arg0: i32) -> (i32, i32, i32) {
    %c0_i32 = arith.constant 0 : i32
    %c0_i32_0 = arith.constant 0 : i32
    %c0_i32_1 = arith.constant 0 : i32
    return %arg0, %c0_i32, %c0_i32_0 : i32, i32, i32
  }
  func.func @transform_2(%arg0: i32) -> (i32, i32, i32) {
    %c0_i32 = arith.constant 0 : i32
    %c0_i32_0 = arith.constant 0 : i32
    %c0_i32_1 = arith.constant 0 : i32
    return %arg0, %c0_i32, %c0_i32_0 : i32, i32, i32
  }
  func.func @transform_3(%arg0: i32) -> (i32, i32, i32) {
    %c0_i32 = arith.constant 0 : i32
    %c0_i32_0 = arith.constant 0 : i32
    %c0_i32_1 = arith.constant 0 : i32
    return %arg0, %c0_i32, %c0_i32_0 : i32, i32, i32
  }
  func.func @transform_4(%arg0: i32) -> (i32, i32, i32) {
    %c0_i32 = arith.constant 0 : i32
    %c0_i32_0 = arith.constant 0 : i32
    %c0_i32_1 = arith.constant 0 : i32
    return %arg0, %c0_i32, %c0_i32_0 : i32, i32, i32
  }
  func.func @transform_5(%arg0: i32) -> (i32, i32) {
    %c0_i32 = arith.constant 0 : i32
    %c0_i32_0 = arith.constant 0 : i32
    %c0_i32_1 = arith.constant 0 : i32
    return %c0_i32, %c0_i32_0 : i32, i32
  }
  func.func @transform_6(%arg0: i32) -> (i32, i32) {
    %c0_i32 = arith.constant 0 : i32
    %c0_i32_0 = arith.constant 0 : i32
    %c0_i32_1 = arith.constant 0 : i32
    return %c0_i32, %c0_i32_0 : i32, i32
  }
}

</mosaic_0001>

<llo_original>
// kernel: tpu_custom_call.1
$region0: #{tpu_custom_call.1}
  #allocation0 [shape = 'u32[]', space=smem, size = 0x4, offset = 0x4, fixed_abs, tag = 'smem constant byte address 0x4 - core index']
  #allocation1 [shape = 'u32[144,128]{1,0:T(1,128)}', space=vmem, size = 0x12000, scoped, tag = 'internal scratch']
  %s0 = inlined_call_operand.hbm [shape: f32[2,768], index: 0, kind: input, shape index: {}]
  %s1 = inlined_call_operand.hbm [shape: s8[2,768,2304], index: 1, kind: input, shape index: {}]
  %s2 = inlined_call_operand.hbm [shape: f32[2,1,2304], index: 2, kind: input, shape index: {}]
  %s3 = inlined_call_operand.hbm [shape: f32[2,1,2304], index: 3, kind: input, shape index: {}]
  %s4 = inlined_call_operand.vmem [shape: bf16[2,768,2], index: 4, kind: input, shape index: {}]
  %s5 = inlined_call_operand.hbm [shape: f32[1,2], index: 5, kind: input, shape index: {}]
  %s6 = inlined_call_operand.hbm [shape: f32[2,2], index: 6, kind: output, shape index: {}]
  %s7 = sld [smem:[#allocation0]]
  $region81: #{tpu_custom_call.1} parent=0
    _
  %s9 = ssub.s32 1, %s7
  %s10 = scalar_select 0, %s9, %s7
  $region1: #{tpu_custom_call.1} parent=0
    #allocation2 [shape = 'u8[6144]{0}', space=vmem, size = 0x1800, scoped, tag = 'input window, operand 0, single buffered']
    #allocation3 [shape = 's32[2]{0}', space=sflag, size = 0x8, scoped, tag = 'scoped memory for tpu_custom_call.1']
    #allocation4 [shape = 's32[2]{0}', space=sflag, size = 0x8, scoped, tag = 'scoped memory for tpu_custom_call.1']
    #allocation5 [shape = 'u8[3538944]{0}', space=vmem, size = 0x360000, scoped, tag = 'input window, operand 1']
    #allocation6 [shape = 's32[2]{0}', space=sflag, size = 0x8, scoped, tag = 'scoped memory for tpu_custom_call.1']
    #allocation7 [shape = 'u8[18432]{0}', space=vmem, size = 0x4800, scoped, tag = 'input window, operand 2']
    #allocation8 [shape = 'u8[18432]{0}', space=vmem, size = 0x4800, scoped, tag = 'input window, operand 3']
    #allocation9 [shape = 's32[2]{0}', space=sflag, size = 0x8, scoped, tag = 'scoped memory for tpu_custom_call.1']
    #allocation10 [shape = 'u8[512]{0}', space=vmem, size = 0x400, scoped, tag = 'input window, operand 5, single buffered']
    #allocation11 [shape = 'u8[1024]{0}', space=vmem, size = 0x400, scoped, tag = 'output window, operand 0, single buffered']
    %11 = vsyncpa [#allocation3], 0
    %12 = vsyncpa [#allocation6], 0
    %s13 = scalar_lea.sflag [#allocation6], 1
    %14 = vsyncpa %s13, 0
    %15 = vsyncpa [#allocation9], 0
    %s16 = scalar_lea.sflag [#allocation9], 1
    %17 = vsyncpa %s16, 0
    %18 = vsyncpa [#allocation4], 0
    loop: start=0, step=1, limit=4
    $region2: #{tpu_custom_call.1} parent=1 // loop_pre_header
      _
    $region3: #{tpu_custom_call.1} parent=1 // loop_header
      %s20 = sphi 0, %s24
      %p21 = scmp.ge.s32.totalorder %s20, 4
      %s28 = sphi 0, %s28
      %s30 = sphi 0, %s28
      %s31 = sphi 0, %s30
      %s45 = sphi 0, %s31
      %s51 = sphi 0, %s53
      %s54 = sphi 0, %s51
      %s55 = sphi 0, %s54
      %s71 = sphi 0, %s55
      %s77 = sphi 0, %s79
      %s80 = sphi 0, %s77
      %s81 = sphi 0, %s80
      %s97 = sphi 0, %s81
      %s103 = sphi 0, %s105
      %s106 = sphi 0, %s103
      %s107 = sphi 0, %s106
      %s123 = sphi 0, %s107
      %s129 = sphi 0, %s131
      %s132 = sphi 0, %s129
      %s133 = sphi 0, %s132
      %s149 = sphi 0, %s133
      %s153 = sphi 0, %s153
      %s155 = sphi 0, %s153
      %s156 = sphi 0, %s155
      %s170 = sphi 0, %s156
      %s174 = sphi 0, %s174
      %s176 = sphi 0, %s174
      %s177 = sphi 0, %s176
      %s191 = sphi 0, %s177
    $region4: #{tpu_custom_call.1} parent=1 // loop_header_branch
      %23 = sbr.rel (%p21) target = $region8
    $region5: #{tpu_custom_call.1} parent=1 // loop_body
      %s25 = ssub.s32 %s20, 1
      %s26 = ssub.s32 %s20, 2
      %s27 = sadd.s32 %s20, 1
      %s29 = sadd.s32 %s28, 1
      %p32 = scmp.eq.s32.totalorder %s20, 1
      %p33 = scmp.ne.s32.totalorder %s28, %s30
      %p34 = scmp.eq.s32.totalorder %s20, 0
      %p35 = por %p33, %p34
      %p36 = scmp.ne.s32.totalorder %s28, %s30
      %p37 = scmp.eq.s32.totalorder %s25, 1
      %p38 = por %p36, %p37
      %p39 = scmp.ne.s32.totalorder %s30, %s31
      %p40 = scmp.eq.s32.totalorder %s25, 0
      %p41 = por %p39, %p40
      %p42 = scmp.ne.s32.totalorder %s30, %s31
      %p43 = scmp.eq.s32.totalorder %s26, 1
      %p44 = por %p42, %p43
      %p46 = scmp.ne.s32.totalorder %s31, %s45
      %p47 = scmp.eq.s32.totalorder %s26, 0
      %p48 = por %p46, %p47
      %s49 = ssub.s32 %s20, %s27
      %p50 = scmp.eq.s32.totalorder %s49, 0
      %s52 = sadd.s32 %s51, 1
      %s53 = scalar_select %p50, %s51, %s52
      %p56 = pneg %p50
      %p57 = scmp.eq.s32.totalorder %s20, 1
      %p58 = por %p56, %p57
      %p59 = scmp.ne.s32.totalorder %s51, %s54
      %p60 = scmp.eq.s32.totalorder %s20, 0
      %p61 = por %p59, %p60
      %p62 = scmp.ne.s32.totalorder %s51, %s54
      %p63 = scmp.eq.s32.totalorder %s25, 1
      %p64 = por %p62, %p63
      %p65 = scmp.ne.s32.totalorder %s54, %s55
      %p66 = scmp.eq.s32.totalorder %s25, 0
      %p67 = por %p65, %p66
      %p68 = scmp.ne.s32.totalorder %s54, %s55
      %p69 = scmp.eq.s32.totalorder %s26, 1
      %p70 = por %p68, %p69
      %p72 = scmp.ne.s32.totalorder %s55, %s71
      %p73 = scmp.eq.s32.totalorder %s26, 0
      %p74 = por %p72, %p73
      %s75 = ssub.s32 %s20, %s27
      %p76 = scmp.eq.s32.totalorder %s75, 0
      %s78 = sadd.s32 %s77, 1
      %s79 = scalar_select %p76, %s77, %s78
      %p82 = pneg %p76
      %p83 = scmp.eq.s32.totalorder %s20, 1
      %p84 = por %p82, %p83
      %p85 = scmp.ne.s32.totalorder %s77, %s80
      %p86 = scmp.eq.s32.totalorder %s20, 0
      %p87 = por %p85, %p86
      %p88 = scmp.ne.s32.totalorder %s77, %s80
      %p89 = scmp.eq.s32.totalorder %s25, 1
      %p90 = por %p88, %p89
      %p91 = scmp.ne.s32.totalorder %s80, %s81
      %p92 = scmp.eq.s32.totalorder %s25, 0
      %p93 = por %p91, %p92
      %p94 = scmp.ne.s32.totalorder %s80, %s81
      %p95 = scmp.eq.s32.totalorder %s26, 1
      %p96 = por %p94, %p95
      %p98 = scmp.ne.s32.totalorder %s81, %s97
      %p99 = scmp.eq.s32.totalorder %s26, 0
      %p100 = por %p98, %p99
      %s101 = ssub.s32 %s20, %s27
      %p102 = scmp.eq.s32.totalorder %s101, 0
      %s104 = sadd.s32 %s103, 1
      %s105 = scalar_select %p102, %s103, %s104
      %p108 = pneg %p102
      %p109 = scmp.eq.s32.totalorder %s20, 1
      %p110 = por %p108, %p109
      %p111 = scmp.ne.s32.totalorder %s103, %s106
      %p112 = scmp.eq.s32.totalorder %s20, 0
      %p113 = por %p111, %p112
      %p114 = scmp.ne.s32.totalorder %s103, %s106
      %p115 = scmp.eq.s32.totalorder %s25, 1
      %p116 = por %p114, %p115
      %p117 = scmp.ne.s32.totalorder %s106, %s107
      %p118 = scmp.eq.s32.totalorder %s25, 0
      %p119 = por %p117, %p118
      %p120 = scmp.ne.s32.totalorder %s106, %s107
      %p121 = scmp.eq.s32.totalorder %s26, 1
      %p122 = por %p120, %p121
      %p124 = scmp.ne.s32.totalorder %s107, %s123
      %p125 = scmp.eq.s32.totalorder %s26, 0
      %p126 = por %p124, %p125
      %s127 = ssub.s32 %s20, %s27
      %p128 = scmp.eq.s32.totalorder %s127, 0
      %s130 = sadd.s32 %s129, 1
      %s131 = scalar_select %p128, %s129, %s130
      %p134 = pneg %p128
      %p135 = scmp.eq.s32.totalorder %s20, 1
      %p136 = por %p134, %p135
      %p137 = scmp.ne.s32.totalorder %s129, %s132
      %p138 = scmp.eq.s32.totalorder %s20, 0
      %p139 = por %p137, %p138
      %p140 = scmp.ne.s32.totalorder %s129, %s132
      %p141 = scmp.eq.s32.totalorder %s25, 1
      %p142 = por %p140, %p141
      %p143 = scmp.ne.s32.totalorder %s132, %s133
      %p144 = scmp.eq.s32.totalorder %s25, 0
      %p145 = por %p143, %p144
      %p146 = scmp.ne.s32.totalorder %s132, %s133
      %p147 = scmp.eq.s32.totalorder %s26, 1
      %p148 = por %p146, %p147
      %p150 = scmp.ne.s32.totalorder %s133, %s149
      %p151 = scmp.eq.s32.totalorder %s26, 0
      %p152 = por %p150, %p151
      %s154 = sadd.s32 %s153, 1
      %p157 = scmp.eq.s32.totalorder %s20, 1
      %p158 = scmp.ne.s32.totalorder %s153, %s155
      %p159 = scmp.eq.s32.totalorder %s20, 0
      %p160 = por %p158, %p159
      %p161 = scmp.ne.s32.totalorder %s153, %s155
      %p162 = scmp.eq.s32.totalorder %s25, 1
      %p163 = por %p161, %p162
      %p164 = scmp.ne.s32.totalorder %s155, %s156
      %p165 = scmp.eq.s32.totalorder %s25, 0
      %p166 = por %p164, %p165
      %p167 = scmp.ne.s32.totalorder %s155, %s156
      %p168 = scmp.eq.s32.totalorder %s26, 1
      %p169 = por %p167, %p168
      %p171 = scmp.ne.s32.totalorder %s156, %s170
      %p172 = scmp.eq.s32.totalorder %s26, 0
      %p173 = por %p171, %p172
      %s175 = sadd.s32 %s174, 1
      %p178 = scmp.eq.s32.totalorder %s20, 1
      %p179 = scmp.ne.s32.totalorder %s174, %s176
      %p180 = scmp.eq.s32.totalorder %s20, 0
      %p181 = por %p179, %p180
      %p182 = scmp.ne.s32.totalorder %s174, %s176
      %p183 = scmp.eq.s32.totalorder %s25, 1
      %p184 = por %p182, %p183
      %p185 = scmp.ne.s32.totalorder %s176, %s177
      %p186 = scmp.eq.s32.totalorder %s25, 0
      %p187 = por %p185, %p186
      %p188 = scmp.ne.s32.totalorder %s176, %s177
      %p189 = scmp.eq.s32.totalorder %s26, 1
      %p190 = por %p188, %p189
      %p192 = scmp.ne.s32.totalorder %s177, %s191
      %p193 = scmp.eq.s32.totalorder %s26, 0
      %p194 = por %p192, %p193
      %p195 = scmp.le.s32.totalorder 1, %s20
      %p196 = scmp.lt.s32.totalorder %s20, 3
      %p197 = pnand %p195, %p196
      %p198 = pneg %p197
      // Predicated region
      $region9: #{tpu_custom_call.1} parent=5 // pred_check
        _
      $region10: #{tpu_custom_call.1} parent=5 // pred_check_branch
        %200 = sbr.rel (%p197) target = $region12
      $region11: #{tpu_custom_call.1} parent=5 // pred_region
        %s201 = ssub.s32 %s20, 1
        // Predicated region
        $region13: #{tpu_custom_call.1} parent=11 // pred_check
          %p202 = pneg %p41
        $region14: #{tpu_custom_call.1} parent=11 // pred_check_branch
          %204 = sbr.rel (%p202) target = $region16
        $region15: #{tpu_custom_call.1} parent=11 // pred_region
          %s206 = ssub.s32 192, 192
          %207 = vsyncadd [#allocation3], %s206
          %s209 = sshll.u32 [#allocation2], 4
          %s210 = int_to_ptr.vmem [resolvable:$true] %s209
          %212 = dma.hbm_to_vmem [thread:$0]  %s0, 192, %s210, [#allocation3]
        $region16: #{tpu_custom_call.1} parent=11 // pred_fallthru
          _
        // Predicated region
        $region17: #{tpu_custom_call.1} parent=11 // pred_check
          %p213 = pneg %p166
        $region18: #{tpu_custom_call.1} parent=11 // pred_check_branch
          %215 = sbr.rel (%p213) target = $region20
        $region19: #{tpu_custom_call.1} parent=11 // pred_region
          %s217 = ssub.s32 16, 16
          %218 = vsyncadd [#allocation9], %s217
          %s220 = sshll.u32 [#allocation10], 4
          %s221 = int_to_ptr.vmem [resolvable:$true] %s220
          %223 = dma.hbm_to_vmem [thread:$0]  %s5, 16, %s221, [#allocation9]
        $region20: #{tpu_custom_call.1} parent=11 // pred_fallthru
          _
      $region12: #{tpu_custom_call.1} parent=5 // pred_fallthru
        _
      %p224 = scmp.lt.s32.totalorder %s20, 2
      // Predicated region
      $region21: #{tpu_custom_call.1} parent=5 // pred_check
        %p225 = pneg %p224
      $region22: #{tpu_custom_call.1} parent=5 // pred_check_branch
        %227 = sbr.rel (%p225) target = $region24
      $region23: #{tpu_custom_call.1} parent=5 // pred_region
        // Predicated region
        $region25: #{tpu_custom_call.1} parent=23 // pred_check
          %p228 = pneg %p61
        $region26: #{tpu_custom_call.1} parent=23 // pred_check_branch
          %230 = sbr.rel (%p228) target = $region28
        $region27: #{tpu_custom_call.1} parent=23 // pred_region
          %s231 = sand.u32 %s20, 1
          %s232 = scalar_lea.sflag [#allocation6], %s231
          %s233 = sand.u32 %s51, 1
          %s234 = smul.addr %s233, 3456
          %s235 = scalar_lea.vmem [#allocation5], %s234
          %s237 = ssub.s32 55296, 55296
          %238 = vsyncadd %s232, %s237
          %s239 = smul.addr %s20, 432
          %s240 = smul.addr %s239, 128
          %s241 = scalar_lea.hbm %s1, %s240
          %s242 = sshll.u32 %s235, 4
          %s243 = int_to_ptr.vmem [resolvable:$true] %s242
          %248 = dma.hbm_to_vmem [thread:$0]  %s241, 55296, %s243, %s232, 2304, 2304, 144
        $region28: #{tpu_custom_call.1} parent=23 // pred_fallthru
          _
        // Predicated region
        $region29: #{tpu_custom_call.1} parent=23 // pred_check
          %p249 = pneg %p87
        $region30: #{tpu_custom_call.1} parent=23 // pred_check_branch
          %251 = sbr.rel (%p249) target = $region32
        $region31: #{tpu_custom_call.1} parent=23 // pred_region
          %s252 = sand.u32 %s20, 1
          %s253 = scalar_lea.sflag [#allocation6], %s252
          %s254 = sand.u32 %s77, 1
          %s255 = smul.addr %s254, 18
          %s256 = scalar_lea.vmem [#allocation7], %s255
          %s258 = ssub.s32 288, 288
          %259 = vsyncadd %s253, %s258
          %s260 = smul.addr %s20, 18
          %s261 = smul.addr %s260, 16
          %s262 = scalar_lea.hbm %s2, %s261
          %s264 = sshll.u32 %s256, 4
          %s265 = int_to_ptr.vmem [resolvable:$true] %s264
          %267 = dma.hbm_to_vmem [thread:$0]  %s262, 288, %s265, %s253
        $region32: #{tpu_custom_call.1} parent=23 // pred_fallthru
          _
        // Predicated region
        $region33: #{tpu_custom_call.1} parent=23 // pred_check
          %p268 = pneg %p113
        $region34: #{tpu_custom_call.1} parent=23 // pred_check_branch
          %270 = sbr.rel (%p268) target = $region36
        $region35: #{tpu_custom_call.1} parent=23 // pred_region
          %s271 = sand.u32 %s20, 1
          %s272 = scalar_lea.sflag [#allocation9], %s271
          %s273 = sand.u32 %s103, 1
          %s274 = smul.addr %s273, 18
          %s275 = scalar_lea.vmem [#allocation8], %s274
          %s277 = ssub.s32 288, 288
          %278 = vsyncadd %s272, %s277
          %s279 = smul.addr %s20, 18
          %s280 = smul.addr %s279, 16
          %s281 = scalar_lea.hbm %s3, %s280
          %s283 = sshll.u32 %s275, 4
          %s284 = int_to_ptr.vmem [resolvable:$true] %s283
          %286 = dma.hbm_to_vmem [thread:$0]  %s281, 288, %s284, %s272
        $region36: #{tpu_custom_call.1} parent=23 // pred_fallthru
          _
        // Predicated region
        $region37: #{tpu_custom_call.1} parent=23 // pred_check
          %p287 = pneg %p139
        $region38: #{tpu_custom_call.1} parent=23 // pred_check_branch
          %289 = sbr.rel (%p287) target = $region40
        $region39: #{tpu_custom_call.1} parent=23 // pred_region
          %p290 = scmp.lt.s32.totalorder %s20, 1
          %s291 = scalar_select %p290, %s20, 1
          %s292 = smul.addr %s291, 96
          %s293 = smul.addr %s292, 4
          %s294 = scalar_lea.vmem %s4, %s293
        $region40: #{tpu_custom_call.1} parent=23 // pred_fallthru
          _
      $region24: #{tpu_custom_call.1} parent=5 // pred_fallthru
        _
      %p295 = scmp.le.s32.totalorder 1, %s20
      %p296 = scmp.lt.s32.totalorder %s20, 3
      %p297 = pnand %p295, %p296
      %p298 = pneg %p297
      // Predicated region
      $region41: #{tpu_custom_call.1} parent=5 // pred_check
        _
      $region42: #{tpu_custom_call.1} parent=5 // pred_check_branch
        %300 = sbr.rel (%p297) target = $region44
      $region43: #{tpu_custom_call.1} parent=5 // pred_region
        %s301 = ssub.s32 %s20, 1
        // Predicated region
        $region45: #{tpu_custom_call.1} parent=43 // pred_check
          %p302 = pneg %p41
        $region46: #{tpu_custom_call.1} parent=43 // pred_check_branch
          %304 = sbr.rel (%p302) target = $region48
        $region47: #{tpu_custom_call.1} parent=43 // pred_region
          %305 = dma.done [#allocation3], 192
        $region48: #{tpu_custom_call.1} parent=43 // pred_fallthru
          _
        %s306 = sand.u32 %s25, 1
        %s307 = scalar_lea.sflag [#allocation6], %s306
        %s308 = sand.u32 %s54, 1
        %s309 = smul.addr %s308, 3456
        %s310 = scalar_lea.vmem [#allocation5], %s309
        // Predicated region
        $region49: #{tpu_custom_call.1} parent=43 // pred_check
          %p311 = pneg %p67
        $region50: #{tpu_custom_call.1} parent=43 // pred_check_branch
          %313 = sbr.rel (%p311) target = $region52
        $region51: #{tpu_custom_call.1} parent=43 // pred_region
          %314 = dma.done %s307, 55296
        $region52: #{tpu_custom_call.1} parent=43 // pred_fallthru
          _
        %s315 = sand.u32 %s25, 1
        %s316 = scalar_lea.sflag [#allocation6], %s315
        %s317 = sand.u32 %s80, 1
        %s318 = smul.addr %s317, 18
        %s319 = scalar_lea.vmem [#allocation7], %s318
        // Predicated region
        $region53: #{tpu_custom_call.1} parent=43 // pred_check
          %p320 = pneg %p93
        $region54: #{tpu_custom_call.1} parent=43 // pred_check_branch
          %322 = sbr.rel (%p320) target = $region56
        $region55: #{tpu_custom_call.1} parent=43 // pred_region
          %323 = dma.done %s316, 288
        $region56: #{tpu_custom_call.1} parent=43 // pred_fallthru
          _
        %s324 = sand.u32 %s25, 1
        %s325 = scalar_lea.sflag [#allocation9], %s324
        %s326 = sand.u32 %s106, 1
        %s327 = smul.addr %s326, 18
        %s328 = scalar_lea.vmem [#allocation8], %s327
        // Predicated region
        $region57: #{tpu_custom_call.1} parent=43 // pred_check
          %p329 = pneg %p119
        $region58: #{tpu_custom_call.1} parent=43 // pred_check_branch
          %331 = sbr.rel (%p329) target = $region60
        $region59: #{tpu_custom_call.1} parent=43 // pred_region
          %332 = dma.done %s325, 288
        $region60: #{tpu_custom_call.1} parent=43 // pred_fallthru
          _
        // Predicated region
        $region61: #{tpu_custom_call.1} parent=43 // pred_check
          %p333 = pneg %p166
        $region62: #{tpu_custom_call.1} parent=43 // pred_check_branch
          %335 = sbr.rel (%p333) target = $region64
        $region63: #{tpu_custom_call.1} parent=43 // pred_region
          %336 = dma.done [#allocation9], 16
        $region64: #{tpu_custom_call.1} parent=43 // pred_fallthru
          _
        %p337 = pneg %p41
        %p338 = pneg %p38
        %s339 = sand.u32 %s25, 1
        %s340 = scalar_lea.sflag [#allocation6], %s339
        %s341 = sand.u32 %s54, 1
        %s342 = smul.addr %s341, 3456
        %s343 = scalar_lea.vmem [#allocation5], %s342
        %p344 = pneg %p67
        %p345 = pneg %p64
        %s346 = sand.u32 %s25, 1
        %s347 = scalar_lea.sflag [#allocation6], %s346
        %s348 = sand.u32 %s80, 1
        %s349 = smul.addr %s348, 18
        %s350 = scalar_lea.vmem [#allocation7], %s349
        %p351 = pneg %p93
        %p352 = pneg %p90
        %s353 = sand.u32 %s25, 1
        %s354 = scalar_lea.sflag [#allocation9], %s353
        %s355 = sand.u32 %s106, 1
        %s356 = smul.addr %s355, 18
        %s357 = scalar_lea.vmem [#allocation8], %s356
        %p358 = pneg %p119
        %p359 = pneg %p116
        %p360 = scmp.lt.s32.totalorder %s25, 1
        %s361 = scalar_select %p360, %s25, 1
        %s362 = smul.addr %s361, 96
        %s363 = smul.addr %s362, 4
        %s364 = scalar_lea.vmem %s4, %s363
        %p365 = pneg %p145
        %p366 = pneg %p142
        %p367 = pneg %p166
        %p368 = pneg %p163
        %p369 = pneg %p187
        %p370 = pneg %p184
        %p371 = scmp.lt.s32.totalorder %s25, 1
        %s372 = scalar_select %p371, %s25, 1
        %s373 = smul.addr %s372, 96
        %s374 = smul.addr %s373, 4
        %s375 = scalar_lea.vmem %s4, %s374
        %v377 = vld [vmem:[#allocation2] sm:$0xff]
        %v378 = vld [vmem:[#allocation2 + $0x8] sm:$0xf]
        %v381 = vcombine.high %v377, %v377
        %v383 = vunpack.c.l.s4 1983009808
        %v384 = vunpack.c.0.s8 %v383
        %v385 = vlaneseq
        %v386 = vshrl.u32 %v385, 7
        %v387 = vsub.s32 %v384, %v386
        %v388 = vrot.slane %v377, %v387
        %v390 = vunpack.c.l.s4 1983009808
        %v391 = vunpack.c.0.s8 %v390
        %v392 = vlaneseq
        %v393 = vshrl.u32 %v392, 7
        %v394 = vsub.s32 %v391, %v393
        %v395 = vrot.slane %v381, %v394
        %v396 = vcombine.high %v388, %v388
        %v397 = vcombine.high %v395, %v395
        %v399 = vunpack.c.l.s4 1983009808
        %v400 = vunpack.c.0.s8 %v399
        %v401 = vlaneseq
        %v402 = vshrl.u32 %v401, 7
        %v403 = vsub.s32 %v400, %v402
        %v404 = vrot.slane %v378, %v403
        %v405 = vcombine.high %v404, %v404
        %v412 = vpack.c.bf16 %v388, %v388
        %v413 = vpack.c.bf16 %v396, %v396
        %v414 = vpack.c.bf16 %v395, %v395
        %v415 = vpack.c.bf16 %v397, %v397
        %v416 = vpack.c.bf16 %v404, %v404
        %v417 = vpack.c.bf16 %v405, %v405
        %v418 = vld [vmem:[%s310] sm:$0xff]
        %v419 = vld [vmem:[%s310 + $0x8] sm:$0xff]
        %v420 = vld [vmem:[%s310 + $0x10] sm:$0xff]
        %v421 = vld [vmem:[%s310 + $0x18] sm:$0xff]
        %v422 = vld [vmem:[%s310 + $0x20] sm:$0xff]
        %v423 = vld [vmem:[%s310 + $0x28] sm:$0xff]
        %v424 = vld [vmem:[%s310 + $0x30] sm:$0xff]
        %v425 = vld [vmem:[%s310 + $0x38] sm:$0xff]
        %v426 = vld [vmem:[%s310 + $0x40] sm:$0xff]
        %v427 = vld [vmem:[%s310 + $0x48] sm:$0xff]
        %v428 = vld [vmem:[%s310 + $0x50] sm:$0xff]
        %v429 = vld [vmem:[%s310 + $0x58] sm:$0xff]
        %v430 = vld [vmem:[%s310 + $0x60] sm:$0xff]
        %v431 = vld [vmem:[%s310 + $0x68] sm:$0xff]
        %v432 = vld [vmem:[%s310 + $0x70] sm:$0xff]
        %v433 = vld [vmem:[%s310 + $0x78] sm:$0xff]
        %v434 = vld [vmem:[%s310 + $0x80] sm:$0xff]
        %v435 = vld [vmem:[%s310 + $0x88] sm:$0xff]
        %v436 = vld [vmem:[%s310 + $0x90] sm:$0xff]
        %v437 = vld [vmem:[%s310 + $0x98] sm:$0xff]
        %v438 = vld [vmem:[%s310 + $0xa0] sm:$0xff]
        %v439 = vld [vmem:[%s310 + $0xa8] sm:$0xff]
        %v440 = vld [vmem:[%s310 + $0xb0] sm:$0xff]
        %v441 = vld [vmem:[%s310 + $0xb8] sm:$0xff]
        %v442 = vld [vmem:[%s310 + $0xc0] sm:$0xff]
        %v443 = vld [vmem:[%s310 + $0xc8] sm:$0xff]
        %v444 = vld [vmem:[%s310 + $0xd0] sm:$0xff]
        %v445 = vld [vmem:[%s310 + $0xd8] sm:$0xff]
        %v446 = vld [vmem:[%s310 + $0xe0] sm:$0xff]
        %v447 = vld [vmem:[%s310 + $0xe8] sm:$0xff]
        %v448 = vld [vmem:[%s310 + $0xf0] sm:$0xff]
        %v449 = vld [vmem:[%s310 + $0xf8] sm:$0xff]
        %v450 = vld [vmem:[%s310 + $0x100] sm:$0xff]
        %v451 = vld [vmem:[%s310 + $0x108] sm:$0xff]
        %v452 = vld [vmem:[%s310 + $0x110] sm:$0xff]
        %v453 = vld [vmem:[%s310 + $0x118] sm:$0xff]
        %v454 = vld [vmem:[%s310 + $0x120] sm:$0xff]
        %v455 = vld [vmem:[%s310 + $0x128] sm:$0xff]
        %v456 = vld [vmem:[%s310 + $0x130] sm:$0xff]
        %v457 = vld [vmem:[%s310 + $0x138] sm:$0xff]
        %v458 = vld [vmem:[%s310 + $0x140] sm:$0xff]
        %v459 = vld [vmem:[%s310 + $0x148] sm:$0xff]
        %v460 = vld [vmem:[%s310 + $0x150] sm:$0xff]
        %v461 = vld [vmem:[%s310 + $0x158] sm:$0xff]
        %v462 = vld [vmem:[%s310 + $0x160] sm:$0xff]
        %v463 = vld [vmem:[%s310 + $0x168] sm:$0xff]
        %v464 = vld [vmem:[%s310 + $0x170] sm:$0xff]
        %v465 = vld [vmem:[%s310 + $0x178] sm:$0xff]
        %v466 = vld [vmem:[%s310 + $0x180] sm:$0xff]
        %v467 = vld [vmem:[%s310 + $0x188] sm:$0xff]
        %v468 = vld [vmem:[%s310 + $0x190] sm:$0xff]
        %v469 = vld [vmem:[%s310 + $0x198] sm:$0xff]
        %v470 = vld [vmem:[%s310 + $0x1a0] sm:$0xff]
        %v471 = vld [vmem:[%s310 + $0x1a8] sm:$0xff]
        %v472 = vld [vmem:[%s310 + $0x1b0] sm:$0xff]
        %v473 = vld [vmem:[%s310 + $0x1b8] sm:$0xff]
        %v474 = vld [vmem:[%s310 + $0x1c0] sm:$0xff]
        %v475 = vld [vmem:[%s310 + $0x1c8] sm:$0xff]
        %v476 = vld [vmem:[%s310 + $0x1d0] sm:$0xff]
        %v477 = vld [vmem:[%s310 + $0x1d8] sm:$0xff]
        %v478 = vld [vmem:[%s310 + $0x1e0] sm:$0xff]
        %v479 = vld [vmem:[%s310 + $0x1e8] sm:$0xff]
        %v480 = vld [vmem:[%s310 + $0x1f0] sm:$0xff]
        %v481 = vld [vmem:[%s310 + $0x1f8] sm:$0xff]
        %v482 = vld [vmem:[%s310 + $0x200] sm:$0xff]
        %v483 = vld [vmem:[%s310 + $0x208] sm:$0xff]
        %v484 = vld [vmem:[%s310 + $0x210] sm:$0xff]
        %v485 = vld [vmem:[%s310 + $0x218] sm:$0xff]
        %v486 = vld [vmem:[%s310 + $0x220] sm:$0xff]
        %v487 = vld [vmem:[%s310 + $0x228] sm:$0xff]
        %v488 = vld [vmem:[%s310 + $0x230] sm:$0xff]
        %v489 = vld [vmem:[%s310 + $0x238] sm:$0xff]
        %v490 = vld [vmem:[%s310 + $0x240] sm:$0xff]
        %v491 = vld [vmem:[%s310 + $0x248] sm:$0xff]
        %v492 = vld [vmem:[%s310 + $0x250] sm:$0xff]
        %v493 = vld [vmem:[%s310 + $0x258] sm:$0xff]
        %v494 = vld [vmem:[%s310 + $0x260] sm:$0xff]
        %v495 = vld [vmem:[%s310 + $0x268] sm:$0xff]
        %v496 = vld [vmem:[%s310 + $0x270] sm:$0xff]
        %v497 = vld [vmem:[%s310 + $0x278] sm:$0xff]
        %v498 = vld [vmem:[%s310 + $0x280] sm:$0xff]
        %v499 = vld [vmem:[%s310 + $0x288] sm:$0xff]
        %v500 = vld [vmem:[%s310 + $0x290] sm:$0xff]
        %v501 = vld [vmem:[%s310 + $0x298] sm:$0xff]
        %v502 = vld [vmem:[%s310 + $0x2a0] sm:$0xff]
        %v503 = vld [vmem:[%s310 + $0x2a8] sm:$0xff]
        %v504 = vld [vmem:[%s310 + $0x2b0] sm:$0xff]
        %v505 = vld [vmem:[%s310 + $0x2b8] sm:$0xff]
        %v506 = vld [vmem:[%s310 + $0x2c0] sm:$0xff]
        %v507 = vld [vmem:[%s310 + $0x2c8] sm:$0xff]
        %v508 = vld [vmem:[%s310 + $0x2d0] sm:$0xff]
        %v509 = vld [vmem:[%s310 + $0x2d8] sm:$0xff]
        %v510 = vld [vmem:[%s310 + $0x2e0] sm:$0xff]
        %v511 = vld [vmem:[%s310 + $0x2e8] sm:$0xff]
        %v512 = vld [vmem:[%s310 + $0x2f0] sm:$0xff]
        %v513 = vld [vmem:[%s310 + $0x2f8] sm:$0xff]
        %v514 = vld [vmem:[%s310 + $0x300] sm:$0xff]
        %v515 = vld [vmem:[%s310 + $0x308] sm:$0xff]
        %v516 = vld [vmem:[%s310 + $0x310] sm:$0xff]
        %v517 = vld [vmem:[%s310 + $0x318] sm:$0xff]
        %v518 = vld [vmem:[%s310 + $0x320] sm:$0xff]
        %v519 = vld [vmem:[%s310 + $0x328] sm:$0xff]
        %v520 = vld [vmem:[%s310 + $0x330] sm:$0xff]
        %v521 = vld [vmem:[%s310 + $0x338] sm:$0xff]
        %v522 = vld [vmem:[%s310 + $0x340] sm:$0xff]
        %v523 = vld [vmem:[%s310 + $0x348] sm:$0xff]
        %v524 = vld [vmem:[%s310 + $0x350] sm:$0xff]
        %v525 = vld [vmem:[%s310 + $0x358] sm:$0xff]
        %v526 = vld [vmem:[%s310 + $0x360] sm:$0xff]
        %v527 = vld [vmem:[%s310 + $0x368] sm:$0xff]
        %v528 = vld [vmem:[%s310 + $0x370] sm:$0xff]
        %v529 = vld [vmem:[%s310 + $0x378] sm:$0xff]
        %v530 = vld [vmem:[%s310 + $0x380] sm:$0xff]
        %v531 = vld [vmem:[%s310 + $0x388] sm:$0xff]
        %v532 = vld [vmem:[%s310 + $0x390] sm:$0xff]
        %v533 = vld [vmem:[%s310 + $0x398] sm:$0xff]
        %v534 = vld [vmem:[%s310 + $0x3a0] sm:$0xff]
        %v535 = vld [vmem:[%s310 + $0x3a8] sm:$0xff]
        %v536 = vld [vmem:[%s310 + $0x3b0] sm:$0xff]
        %v537 = vld [vmem:[%s310 + $0x3b8] sm:$0xff]
        %v538 = vld [vmem:[%s310 + $0x3c0] sm:$0xff]
        %v539 = vld [vmem:[%s310 + $0x3c8] sm:$0xff]
        %v540 = vld [vmem:[%s310 + $0x3d0] sm:$0xff]
        %v541 = vld [vmem:[%s310 + $0x3d8] sm:$0xff]
        %v542 = vld [vmem:[%s310 + $0x3e0] sm:$0xff]
        %v543 = vld [vmem:[%s310 + $0x3e8] sm:$0xff]
        %v544 = vld [vmem:[%s310 + $0x3f0] sm:$0xff]
        %v545 = vld [vmem:[%s310 + $0x3f8] sm:$0xff]
        %v546 = vld [vmem:[%s310 + $0x400] sm:$0xff]
        %v547 = vld [vmem:[%s310 + $0x408] sm:$0xff]
        %v548 = vld [vmem:[%s310 + $0x410] sm:$0xff]
        %v549 = vld [vmem:[%s310 + $0x418] sm:$0xff]
        %v550 = vld [vmem:[%s310 + $0x420] sm:$0xff]
        %v551 = vld [vmem:[%s310 + $0x428] sm:$0xff]
        %v552 = vld [vmem:[%s310 + $0x430] sm:$0xff]
        %v553 = vld [vmem:[%s310 + $0x438] sm:$0xff]
        %v554 = vld [vmem:[%s310 + $0x440] sm:$0xff]
        %v555 = vld [vmem:[%s310 + $0x448] sm:$0xff]
        %v556 = vld [vmem:[%s310 + $0x450] sm:$0xff]
        %v557 = vld [vmem:[%s310 + $0x458] sm:$0xff]
        %v558 = vld [vmem:[%s310 + $0x460] sm:$0xff]
        %v559 = vld [vmem:[%s310 + $0x468] sm:$0xff]
        %v560 = vld [vmem:[%s310 + $0x470] sm:$0xff]
        %v561 = vld [vmem:[%s310 + $0x478] sm:$0xff]
        %v562 = vld [vmem:[%s310 + $0x480] sm:$0xff]
        %v563 = vld [vmem:[%s310 + $0x488] sm:$0xff]
        %v564 = vld [vmem:[%s310 + $0x490] sm:$0xff]
        %v565 = vld [vmem:[%s310 + $0x498] sm:$0xff]
        %v566 = vld [vmem:[%s310 + $0x4a0] sm:$0xff]
        %v567 = vld [vmem:[%s310 + $0x4a8] sm:$0xff]
        %v568 = vld [vmem:[%s310 + $0x4b0] sm:$0xff]
        %v569 = vld [vmem:[%s310 + $0x4b8] sm:$0xff]
        %v570 = vld [vmem:[%s310 + $0x4c0] sm:$0xff]
        %v571 = vld [vmem:[%s310 + $0x4c8] sm:$0xff]
        %v572 = vld [vmem:[%s310 + $0x4d0] sm:$0xff]
        %v573 = vld [vmem:[%s310 + $0x4d8] sm:$0xff]
        %v574 = vld [vmem:[%s310 + $0x4e0] sm:$0xff]
        %v575 = vld [vmem:[%s310 + $0x4e8] sm:$0xff]
        %v576 = vld [vmem:[%s310 + $0x4f0] sm:$0xff]
        %v577 = vld [vmem:[%s310 + $0x4f8] sm:$0xff]
        %v578 = vld [vmem:[%s310 + $0x500] sm:$0xff]
        %v579 = vld [vmem:[%s310 + $0x508] sm:$0xff]
        %v580 = vld [vmem:[%s310 + $0x510] sm:$0xff]
        %v581 = vld [vmem:[%s310 + $0x518] sm:$0xff]
        %v582 = vld [vmem:[%s310 + $0x520] sm:$0xff]
        %v583 = vld [vmem:[%s310 + $0x528] sm:$0xff]
        %v584 = vld [vmem:[%s310 + $0x530] sm:$0xff]
        %v585 = vld [vmem:[%s310 + $0x538] sm:$0xff]
        %v586 = vld [vmem:[%s310 + $0x540] sm:$0xff]
        %v587 = vld [vmem:[%s310 + $0x548] sm:$0xff]
        %v588 = vld [vmem:[%s310 + $0x550] sm:$0xff]
        %v589 = vld [vmem:[%s310 + $0x558] sm:$0xff]
        %v590 = vld [vmem:[%s310 + $0x560] sm:$0xff]
        %v591 = vld [vmem:[%s310 + $0x568] sm:$0xff]
        %v592 = vld [vmem:[%s310 + $0x570] sm:$0xff]
        %v593 = vld [vmem:[%s310 + $0x578] sm:$0xff]
        %v594 = vld [vmem:[%s310 + $0x580] sm:$0xff]
        %v595 = vld [vmem:[%s310 + $0x588] sm:$0xff]
        %v596 = vld [vmem:[%s310 + $0x590] sm:$0xff]
        %v597 = vld [vmem:[%s310 + $0x598] sm:$0xff]
        %v598 = vld [vmem:[%s310 + $0x5a0] sm:$0xff]
        %v599 = vld [vmem:[%s310 + $0x5a8] sm:$0xff]
        %v600 = vld [vmem:[%s310 + $0x5b0] sm:$0xff]
        %v601 = vld [vmem:[%s310 + $0x5b8] sm:$0xff]
        %v602 = vld [vmem:[%s310 + $0x5c0] sm:$0xff]
        %v603 = vld [vmem:[%s310 + $0x5c8] sm:$0xff]
        %v604 = vld [vmem:[%s310 + $0x5d0] sm:$0xff]
        %v605 = vld [vmem:[%s310 + $0x5d8] sm:$0xff]
        %v606 = vld [vmem:[%s310 + $0x5e0] sm:$0xff]
        %v607 = vld [vmem:[%s310 + $0x5e8] sm:$0xff]
        %v608 = vld [vmem:[%s310 + $0x5f0] sm:$0xff]
        %v609 = vld [vmem:[%s310 + $0x5f8] sm:$0xff]
        %v610 = vld [vmem:[%s310 + $0x600] sm:$0xff]
        %v611 = vld [vmem:[%s310 + $0x608] sm:$0xff]
        %v612 = vld [vmem:[%s310 + $0x610] sm:$0xff]
        %v613 = vld [vmem:[%s310 + $0x618] sm:$0xff]
        %v614 = vld [vmem:[%s310 + $0x620] sm:$0xff]
        %v615 = vld [vmem:[%s310 + $0x628] sm:$0xff]
        %v616 = vld [vmem:[%s310 + $0x630] sm:$0xff]
        %v617 = vld [vmem:[%s310 + $0x638] sm:$0xff]
        %v618 = vld [vmem:[%s310 + $0x640] sm:$0xff]
        %v619 = vld [vmem:[%s310 + $0x648] sm:$0xff]
        %v620 = vld [vmem:[%s310 + $0x650] sm:$0xff]
        %v621 = vld [vmem:[%s310 + $0x658] sm:$0xff]
        %v622 = vld [vmem:[%s310 + $0x660] sm:$0xff]
        %v623 = vld [vmem:[%s310 + $0x668] sm:$0xff]
        %v624 = vld [vmem:[%s310 + $0x670] sm:$0xff]
        %v625 = vld [vmem:[%s310 + $0x678] sm:$0xff]
        %v626 = vld [vmem:[%s310 + $0x680] sm:$0xff]
        %v627 = vld [vmem:[%s310 + $0x688] sm:$0xff]
        %v628 = vld [vmem:[%s310 + $0x690] sm:$0xff]
        %v629 = vld [vmem:[%s310 + $0x698] sm:$0xff]
        %v630 = vld [vmem:[%s310 + $0x6a0] sm:$0xff]
        %v631 = vld [vmem:[%s310 + $0x6a8] sm:$0xff]
        %v632 = vld [vmem:[%s310 + $0x6b0] sm:$0xff]
        %v633 = vld [vmem:[%s310 + $0x6b8] sm:$0xff]
        %v634 = vld [vmem:[%s310 + $0x6c0] sm:$0xff]
        %v635 = vld [vmem:[%s310 + $0x6c8] sm:$0xff]
        %v636 = vld [vmem:[%s310 + $0x6d0] sm:$0xff]
        %v637 = vld [vmem:[%s310 + $0x6d8] sm:$0xff]
        %v638 = vld [vmem:[%s310 + $0x6e0] sm:$0xff]
        %v639 = vld [vmem:[%s310 + $0x6e8] sm:$0xff]
        %v640 = vld [vmem:[%s310 + $0x6f0] sm:$0xff]
        %v641 = vld [vmem:[%s310 + $0x6f8] sm:$0xff]
        %v642 = vld [vmem:[%s310 + $0x700] sm:$0xff]
        %v643 = vld [vmem:[%s310 + $0x708] sm:$0xff]
        %v644 = vld [vmem:[%s310 + $0x710] sm:$0xff]
        %v645 = vld [vmem:[%s310 + $0x718] sm:$0xff]
        %v646 = vld [vmem:[%s310 + $0x720] sm:$0xff]
        %v647 = vld [vmem:[%s310 + $0x728] sm:$0xff]
        %v648 = vld [vmem:[%s310 + $0x730] sm:$0xff]
        %v649 = vld [vmem:[%s310 + $0x738] sm:$0xff]
        %v650 = vld [vmem:[%s310 + $0x740] sm:$0xff]
        %v651 = vld [vmem:[%s310 + $0x748] sm:$0xff]
        %v652 = vld [vmem:[%s310 + $0x750] sm:$0xff]
        %v653 = vld [vmem:[%s310 + $0x758] sm:$0xff]
        %v654 = vld [vmem:[%s310 + $0x760] sm:$0xff]
        %v655 = vld [vmem:[%s310 + $0x768] sm:$0xff]
        %v656 = vld [vmem:[%s310 + $0x770] sm:$0xff]
        %v657 = vld [vmem:[%s310 + $0x778] sm:$0xff]
        %v658 = vld [vmem:[%s310 + $0x780] sm:$0xff]
        %v659 = vld [vmem:[%s310 + $0x788] sm:$0xff]
        %v660 = vld [vmem:[%s310 + $0x790] sm:$0xff]
        %v661 = vld [vmem:[%s310 + $0x798] sm:$0xff]
        %v662 = vld [vmem:[%s310 + $0x7a0] sm:$0xff]
        %v663 = vld [vmem:[%s310 + $0x7a8] sm:$0xff]
        %v664 = vld [vmem:[%s310 + $0x7b0] sm:$0xff]
        %v665 = vld [vmem:[%s310 + $0x7b8] sm:$0xff]
        %v666 = vld [vmem:[%s310 + $0x7c0] sm:$0xff]
        %v667 = vld [vmem:[%s310 + $0x7c8] sm:$0xff]
        %v668 = vld [vmem:[%s310 + $0x7d0] sm:$0xff]
        %v669 = vld [vmem:[%s310 + $0x7d8] sm:$0xff]
        %v670 = vld [vmem:[%s310 + $0x7e0] sm:$0xff]
        %v671 = vld [vmem:[%s310 + $0x7e8] sm:$0xff]
        %v672 = vld [vmem:[%s310 + $0x7f0] sm:$0xff]
        %v673 = vld [vmem:[%s310 + $0x7f8] sm:$0xff]
        %v674 = vld [vmem:[%s310 + $0x800] sm:$0xff]
        %v675 = vld [vmem:[%s310 + $0x808] sm:$0xff]
        %v676 = vld [vmem:[%s310 + $0x810] sm:$0xff]
        %v677 = vld [vmem:[%s310 + $0x818] sm:$0xff]
        %v678 = vld [vmem:[%s310 + $0x820] sm:$0xff]
        %v679 = vld [vmem:[%s310 + $0x828] sm:$0xff]
        %v680 = vld [vmem:[%s310 + $0x830] sm:$0xff]
        %v681 = vld [vmem:[%s310 + $0x838] sm:$0xff]
        %v682 = vld [vmem:[%s310 + $0x840] sm:$0xff]
        %v683 = vld [vmem:[%s310 + $0x848] sm:$0xff]
        %v684 = vld [vmem:[%s310 + $0x850] sm:$0xff]
        %v685 = vld [vmem:[%s310 + $0x858] sm:$0xff]
        %v686 = vld [vmem:[%s310 + $0x860] sm:$0xff]
        %v687 = vld [vmem:[%s310 + $0x868] sm:$0xff]
        %v688 = vld [vmem:[%s310 + $0x870] sm:$0xff]
        %v689 = vld [vmem:[%s310 + $0x878] sm:$0xff]
        %v690 = vld [vmem:[%s310 + $0x880] sm:$0xff]
        %v691 = vld [vmem:[%s310 + $0x888] sm:$0xff]
        %v692 = vld [vmem:[%s310 + $0x890] sm:$0xff]
        %v693 = vld [vmem:[%s310 + $0x898] sm:$0xff]
        %v694 = vld [vmem:[%s310 + $0x8a0] sm:$0xff]
        %v695 = vld [vmem:[%s310 + $0x8a8] sm:$0xff]
        %v696 = vld [vmem:[%s310 + $0x8b0] sm:$0xff]
        %v697 = vld [vmem:[%s310 + $0x8b8] sm:$0xff]
        %v698 = vld [vmem:[%s310 + $0x8c0] sm:$0xff]
        %v699 = vld [vmem:[%s310 + $0x8c8] sm:$0xff]
        %v700 = vld [vmem:[%s310 + $0x8d0] sm:$0xff]
        %v701 = vld [vmem:[%s310 + $0x8d8] sm:$0xff]
        %v702 = vld [vmem:[%s310 + $0x8e0] sm:$0xff]
        %v703 = vld [vmem:[%s310 + $0x8e8] sm:$0xff]
        %v704 = vld [vmem:[%s310 + $0x8f0] sm:$0xff]
        %v705 = vld [vmem:[%s310 + $0x8f8] sm:$0xff]
        %v706 = vld [vmem:[%s310 + $0x900] sm:$0xff]
        %v707 = vld [vmem:[%s310 + $0x908] sm:$0xff]
        %v708 = vld [vmem:[%s310 + $0x910] sm:$0xff]
        %v709 = vld [vmem:[%s310 + $0x918] sm:$0xff]
        %v710 = vld [vmem:[%s310 + $0x920] sm:$0xff]
        %v711 = vld [vmem:[%s310 + $0x928] sm:$0xff]
        %v712 = vld [vmem:[%s310 + $0x930] sm:$0xff]
        %v713 = vld [vmem:[%s310 + $0x938] sm:$0xff]
        %v714 = vld [vmem:[%s310 + $0x940] sm:$0xff]
        %v715 = vld [vmem:[%s310 + $0x948] sm:$0xff]
        %v716 = vld [vmem:[%s310 + $0x950] sm:$0xff]
        %v717 = vld [vmem:[%s310 + $0x958] sm:$0xff]
        %v718 = vld [vmem:[%s310 + $0x960] sm:$0xff]
        %v719 = vld [vmem:[%s310 + $0x968] sm:$0xff]
        %v720 = vld [vmem:[%s310 + $0x970] sm:$0xff]
        %v721 = vld [vmem:[%s310 + $0x978] sm:$0xff]
        %v722 = vld [vmem:[%s310 + $0x980] sm:$0xff]
        %v723 = vld [vmem:[%s310 + $0x988] sm:$0xff]
        %v724 = vld [vmem:[%s310 + $0x990] sm:$0xff]
        %v725 = vld [vmem:[%s310 + $0x998] sm:$0xff]
        %v726 = vld [vmem:[%s310 + $0x9a0] sm:$0xff]
        %v727 = vld [vmem:[%s310 + $0x9a8] sm:$0xff]
        %v728 = vld [vmem:[%s310 + $0x9b0] sm:$0xff]
        %v729 = vld [vmem:[%s310 + $0x9b8] sm:$0xff]
        %v730 = vld [vmem:[%s310 + $0x9c0] sm:$0xff]
        %v731 = vld [vmem:[%s310 + $0x9c8] sm:$0xff]
        %v732 = vld [vmem:[%s310 + $0x9d0] sm:$0xff]
        %v733 = vld [vmem:[%s310 + $0x9d8] sm:$0xff]
        %v734 = vld [vmem:[%s310 + $0x9e0] sm:$0xff]
        %v735 = vld [vmem:[%s310 + $0x9e8] sm:$0xff]
        %v736 = vld [vmem:[%s310 + $0x9f0] sm:$0xff]
        %v737 = vld [vmem:[%s310 + $0x9f8] sm:$0xff]
        %v738 = vld [vmem:[%s310 + $0xa00] sm:$0xff]
        %v739 = vld [vmem:[%s310 + $0xa08] sm:$0xff]
        %v740 = vld [vmem:[%s310 + $0xa10] sm:$0xff]
        %v741 = vld [vmem:[%s310 + $0xa18] sm:$0xff]
        %v742 = vld [vmem:[%s310 + $0xa20] sm:$0xff]
        %v743 = vld [vmem:[%s310 + $0xa28] sm:$0xff]
        %v744 = vld [vmem:[%s310 + $0xa30] sm:$0xff]
        %v745 = vld [vmem:[%s310 + $0xa38] sm:$0xff]
        %v746 = vld [vmem:[%s310 + $0xa40] sm:$0xff]
        %v747 = vld [vmem:[%s310 + $0xa48] sm:$0xff]
        %v748 = vld [vmem:[%s310 + $0xa50] sm:$0xff]
        %v749 = vld [vmem:[%s310 + $0xa58] sm:$0xff]
        %v750 = vld [vmem:[%s310 + $0xa60] sm:$0xff]
        %v751 = vld [vmem:[%s310 + $0xa68] sm:$0xff]
        %v752 = vld [vmem:[%s310 + $0xa70] sm:$0xff]
        %v753 = vld [vmem:[%s310 + $0xa78] sm:$0xff]
        %v754 = vld [vmem:[%s310 + $0xa80] sm:$0xff]
        %v755 = vld [vmem:[%s310 + $0xa88] sm:$0xff]
        %v756 = vld [vmem:[%s310 + $0xa90] sm:$0xff]
        %v757 = vld [vmem:[%s310 + $0xa98] sm:$0xff]
        %v758 = vld [vmem:[%s310 + $0xaa0] sm:$0xff]
        %v759 = vld [vmem:[%s310 + $0xaa8] sm:$0xff]
        %v760 = vld [vmem:[%s310 + $0xab0] sm:$0xff]
        %v761 = vld [vmem:[%s310 + $0xab8] sm:$0xff]
        %v762 = vld [vmem:[%s310 + $0xac0] sm:$0xff]
        %v763 = vld [vmem:[%s310 + $0xac8] sm:$0xff]
        %v764 = vld [vmem:[%s310 + $0xad0] sm:$0xff]
        %v765 = vld [vmem:[%s310 + $0xad8] sm:$0xff]
        %v766 = vld [vmem:[%s310 + $0xae0] sm:$0xff]
        %v767 = vld [vmem:[%s310 + $0xae8] sm:$0xff]
        %v768 = vld [vmem:[%s310 + $0xaf0] sm:$0xff]
        %v769 = vld [vmem:[%s310 + $0xaf8] sm:$0xff]
        %v770 = vld [vmem:[%s310 + $0xb00] sm:$0xff]
        %v771 = vld [vmem:[%s310 + $0xb08] sm:$0xff]
        %v772 = vld [vmem:[%s310 + $0xb10] sm:$0xff]
        %v773 = vld [vmem:[%s310 + $0xb18] sm:$0xff]
        %v774 = vld [vmem:[%s310 + $0xb20] sm:$0xff]
        %v775 = vld [vmem:[%s310 + $0xb28] sm:$0xff]
        %v776 = vld [vmem:[%s310 + $0xb30] sm:$0xff]
        %v777 = vld [vmem:[%s310 + $0xb38] sm:$0xff]
        %v778 = vld [vmem:[%s310 + $0xb40] sm:$0xff]
        %v779 = vld [vmem:[%s310 + $0xb48] sm:$0xff]
        %v780 = vld [vmem:[%s310 + $0xb50] sm:$0xff]
        %v781 = vld [vmem:[%s310 + $0xb58] sm:$0xff]
        %v782 = vld [vmem:[%s310 + $0xb60] sm:$0xff]
        %v783 = vld [vmem:[%s310 + $0xb68] sm:$0xff]
        %v784 = vld [vmem:[%s310 + $0xb70] sm:$0xff]
        %v785 = vld [vmem:[%s310 + $0xb78] sm:$0xff]
        %v786 = vld [vmem:[%s310 + $0xb80] sm:$0xff]
        %v787 = vld [vmem:[%s310 + $0xb88] sm:$0xff]
        %v788 = vld [vmem:[%s310 + $0xb90] sm:$0xff]
        %v789 = vld [vmem:[%s310 + $0xb98] sm:$0xff]
        %v790 = vld [vmem:[%s310 + $0xba0] sm:$0xff]
        %v791 = vld [vmem:[%s310 + $0xba8] sm:$0xff]
        %v792 = vld [vmem:[%s310 + $0xbb0] sm:$0xff]
        %v793 = vld [vmem:[%s310 + $0xbb8] sm:$0xff]
        %v794 = vld [vmem:[%s310 + $0xbc0] sm:$0xff]
        %v795 = vld [vmem:[%s310 + $0xbc8] sm:$0xff]
        %v796 = vld [vmem:[%s310 + $0xbd0] sm:$0xff]
        %v797 = vld [vmem:[%s310 + $0xbd8] sm:$0xff]
        %v798 = vld [vmem:[%s310 + $0xbe0] sm:$0xff]
        %v799 = vld [vmem:[%s310 + $0xbe8] sm:$0xff]
        %v800 = vld [vmem:[%s310 + $0xbf0] sm:$0xff]
        %v801 = vld [vmem:[%s310 + $0xbf8] sm:$0xff]
        %v802 = vld [vmem:[%s310 + $0xc00] sm:$0xff]
        %v803 = vld [vmem:[%s310 + $0xc08] sm:$0xff]
        %v804 = vld [vmem:[%s310 + $0xc10] sm:$0xff]
        %v805 = vld [vmem:[%s310 + $0xc18] sm:$0xff]
        %v806 = vld [vmem:[%s310 + $0xc20] sm:$0xff]
        %v807 = vld [vmem:[%s310 + $0xc28] sm:$0xff]
        %v808 = vld [vmem:[%s310 + $0xc30] sm:$0xff]
        %v809 = vld [vmem:[%s310 + $0xc38] sm:$0xff]
        %v810 = vld [vmem:[%s310 + $0xc40] sm:$0xff]
        %v811 = vld [vmem:[%s310 + $0xc48] sm:$0xff]
        %v812 = vld [vmem:[%s310 + $0xc50] sm:$0xff]
        %v813 = vld [vmem:[%s310 + $0xc58] sm:$0xff]
        %v814 = vld [vmem:[%s310 + $0xc60] sm:$0xff]
        %v815 = vld [vmem:[%s310 + $0xc68] sm:$0xff]
        %v816 = vld [vmem:[%s310 + $0xc70] sm:$0xff]
        %v817 = vld [vmem:[%s310 + $0xc78] sm:$0xff]
        %v818 = vld [vmem:[%s310 + $0xc80] sm:$0xff]
        %v819 = vld [vmem:[%s310 + $0xc88] sm:$0xff]
        %v820 = vld [vmem:[%s310 + $0xc90] sm:$0xff]
        %v821 = vld [vmem:[%s310 + $0xc98] sm:$0xff]
        %v822 = vld [vmem:[%s310 + $0xca0] sm:$0xff]
        %v823 = vld [vmem:[%s310 + $0xca8] sm:$0xff]
        %v824 = vld [vmem:[%s310 + $0xcb0] sm:$0xff]
        %v825 = vld [vmem:[%s310 + $0xcb8] sm:$0xff]
        %v826 = vld [vmem:[%s310 + $0xcc0] sm:$0xff]
        %v827 = vld [vmem:[%s310 + $0xcc8] sm:$0xff]
        %v828 = vld [vmem:[%s310 + $0xcd0] sm:$0xff]
        %v829 = vld [vmem:[%s310 + $0xcd8] sm:$0xff]
        %v830 = vld [vmem:[%s310 + $0xce0] sm:$0xff]
        %v831 = vld [vmem:[%s310 + $0xce8] sm:$0xff]
        %v832 = vld [vmem:[%s310 + $0xcf0] sm:$0xff]
        %v833 = vld [vmem:[%s310 + $0xcf8] sm:$0xff]
        %v834 = vld [vmem:[%s310 + $0xd00] sm:$0xff]
        %v835 = vld [vmem:[%s310 + $0xd08] sm:$0xff]
        %v836 = vld [vmem:[%s310 + $0xd10] sm:$0xff]
        %v837 = vld [vmem:[%s310 + $0xd18] sm:$0xff]
        %v838 = vld [vmem:[%s310 + $0xd20] sm:$0xff]
        %v839 = vld [vmem:[%s310 + $0xd28] sm:$0xff]
        %v840 = vld [vmem:[%s310 + $0xd30] sm:$0xff]
        %v841 = vld [vmem:[%s310 + $0xd38] sm:$0xff]
        %v842 = vld [vmem:[%s310 + $0xd40] sm:$0xff]
        %v843 = vld [vmem:[%s310 + $0xd48] sm:$0xff]
        %v844 = vld [vmem:[%s310 + $0xd50] sm:$0xff]
        %v845 = vld [vmem:[%s310 + $0xd58] sm:$0xff]
        %v846 = vld [vmem:[%s310 + $0xd60] sm:$0xff]
        %v847 = vld [vmem:[%s310 + $0xd68] sm:$0xff]
        %v848 = vld [vmem:[%s310 + $0xd70] sm:$0xff]
        %v849 = vld [vmem:[%s310 + $0xd78] sm:$0xff]
        %v850 = vunpack.c.l.s8.bf16 %v418
        %v851 = vunpack.c.l.s8.bf16 %v419
        %v852 = vunpack.c.l.s8.bf16 %v420
        %v853 = vunpack.c.l.s8.bf16 %v421
        %v854 = vunpack.c.l.s8.bf16 %v422
        %v855 = vunpack.c.l.s8.bf16 %v423
        %v856 = vunpack.c.l.s8.bf16 %v424
        %v857 = vunpack.c.l.s8.bf16 %v425
        %v858 = vunpack.c.l.s8.bf16 %v426
        %v859 = vunpack.c.l.s8.bf16 %v427
        %v860 = vunpack.c.l.s8.bf16 %v428
        %v861 = vunpack.c.l.s8.bf16 %v429
        %v862 = vunpack.c.l.s8.bf16 %v430
        %v863 = vunpack.c.l.s8.bf16 %v431
        %v864 = vunpack.c.l.s8.bf16 %v432
        %v865 = vunpack.c.l.s8.bf16 %v433
        %v866 = vunpack.c.l.s8.bf16 %v434
        %v867 = vunpack.c.l.s8.bf16 %v435
        %v868 = vunpack.c.h.s8.bf16 %v418
        %v869 = vunpack.c.h.s8.bf16 %v419
        %v870 = vunpack.c.h.s8.bf16 %v420
        %v871 = vunpack.c.h.s8.bf16 %v421
        %v872 = vunpack.c.h.s8.bf16 %v422
        %v873 = vunpack.c.h.s8.bf16 %v423
        %v874 = vunpack.c.h.s8.bf16 %v424
        %v875 = vunpack.c.h.s8.bf16 %v425
        %v876 = vunpack.c.h.s8.bf16 %v426
        %v877 = vunpack.c.h.s8.bf16 %v427
        %v878 = vunpack.c.h.s8.bf16 %v428
        %v879 = vunpack.c.h.s8.bf16 %v429
        %v880 = vunpack.c.h.s8.bf16 %v430
        %v881 = vunpack.c.h.s8.bf16 %v431
        %v882 = vunpack.c.h.s8.bf16 %v432
        %v883 = vunpack.c.h.s8.bf16 %v433
        %v884 = vunpack.c.h.s8.bf16 %v434
        %v885 = vunpack.c.h.s8.bf16 %v435
        %v886 = vunpack.c.l.s8.bf16 %v436
        %v887 = vunpack.c.l.s8.bf16 %v437
        %v888 = vunpack.c.l.s8.bf16 %v438
        %v889 = vunpack.c.l.s8.bf16 %v439
        %v890 = vunpack.c.l.s8.bf16 %v440
        %v891 = vunpack.c.l.s8.bf16 %v441
        %v892 = vunpack.c.l.s8.bf16 %v442
        %v893 = vunpack.c.l.s8.bf16 %v443
        %v894 = vunpack.c.l.s8.bf16 %v444
        %v895 = vunpack.c.l.s8.bf16 %v445
        %v896 = vunpack.c.l.s8.bf16 %v446
        %v897 = vunpack.c.l.s8.bf16 %v447
        %v898 = vunpack.c.l.s8.bf16 %v448
        %v899 = vunpack.c.l.s8.bf16 %v449
        %v900 = vunpack.c.l.s8.bf16 %v450
        %v901 = vunpack.c.l.s8.bf16 %v451
        %v902 = vunpack.c.l.s8.bf16 %v452
        %v903 = vunpack.c.l.s8.bf16 %v453
        %v904 = vunpack.c.h.s8.bf16 %v436
        %v905 = vunpack.c.h.s8.bf16 %v437
        %v906 = vunpack.c.h.s8.bf16 %v438
        %v907 = vunpack.c.h.s8.bf16 %v439
        %v908 = vunpack.c.h.s8.bf16 %v440
        %v909 = vunpack.c.h.s8.bf16 %v441
        %v910 = vunpack.c.h.s8.bf16 %v442
        %v911 = vunpack.c.h.s8.bf16 %v443
        %v912 = vunpack.c.h.s8.bf16 %v444
        %v913 = vunpack.c.h.s8.bf16 %v445
        %v914 = vunpack.c.h.s8.bf16 %v446
        %v915 = vunpack.c.h.s8.bf16 %v447
        %v916 = vunpack.c.h.s8.bf16 %v448
        %v917 = vunpack.c.h.s8.bf16 %v449
        %v918 = vunpack.c.h.s8.bf16 %v450
        %v919 = vunpack.c.h.s8.bf16 %v451
        %v920 = vunpack.c.h.s8.bf16 %v452
        %v921 = vunpack.c.h.s8.bf16 %v453
        %v922 = vunpack.c.l.s8.bf16 %v454
        %v923 = vunpack.c.l.s8.bf16 %v455
        %v924 = vunpack.c.l.s8.bf16 %v456
        %v925 = vunpack.c.l.s8.bf16 %v457
        %v926 = vunpack.c.l.s8.bf16 %v458
        %v927 = vunpack.c.l.s8.bf16 %v459
        %v928 = vunpack.c.l.s8.bf16 %v460
        %v929 = vunpack.c.l.s8.bf16 %v461
        %v930 = vunpack.c.l.s8.bf16 %v462
        %v931 = vunpack.c.l.s8.bf16 %v463
        %v932 = vunpack.c.l.s8.bf16 %v464
        %v933 = vunpack.c.l.s8.bf16 %v465
        %v934 = vunpack.c.l.s8.bf16 %v466
        %v935 = vunpack.c.l.s8.bf16 %v467
        %v936 = vunpack.c.l.s8.bf16 %v468
        %v937 = vunpack.c.l.s8.bf16 %v469
        %v938 = vunpack.c.l.s8.bf16 %v470
        %v939 = vunpack.c.l.s8.bf16 %v471
        %v940 = vunpack.c.h.s8.bf16 %v454
        %v941 = vunpack.c.h.s8.bf16 %v455
        %v942 = vunpack.c.h.s8.bf16 %v456
        %v943 = vunpack.c.h.s8.bf16 %v457
        %v944 = vunpack.c.h.s8.bf16 %v458
        %v945 = vunpack.c.h.s8.bf16 %v459
        %v946 = vunpack.c.h.s8.bf16 %v460
        %v947 = vunpack.c.h.s8.bf16 %v461
        %v948 = vunpack.c.h.s8.bf16 %v462
        %v949 = vunpack.c.h.s8.bf16 %v463
        %v950 = vunpack.c.h.s8.bf16 %v464
        %v951 = vunpack.c.h.s8.bf16 %v465
        %v952 = vunpack.c.h.s8.bf16 %v466
        %v953 = vunpack.c.h.s8.bf16 %v467
        %v954 = vunpack.c.h.s8.bf16 %v468
        %v955 = vunpack.c.h.s8.bf16 %v469
        %v956 = vunpack.c.h.s8.bf16 %v470
        %v957 = vunpack.c.h.s8.bf16 %v471
        %v958 = vunpack.c.l.s8.bf16 %v472
        %v959 = vunpack.c.l.s8.bf16 %v473
        %v960 = vunpack.c.l.s8.bf16 %v474
        %v961 = vunpack.c.l.s8.bf16 %v475
        %v962 = vunpack.c.l.s8.bf16 %v476
        %v963 = vunpack.c.l.s8.bf16 %v477
        %v964 = vunpack.c.l.s8.bf16 %v478
        %v965 = vunpack.c.l.s8.bf16 %v479
        %v966 = vunpack.c.l.s8.bf16 %v480
        %v967 = vunpack.c.l.s8.bf16 %v481
        %v968 = vunpack.c.l.s8.bf16 %v482
        %v969 = vunpack.c.l.s8.bf16 %v483
        %v970 = vunpack.c.l.s8.bf16 %v484
        %v971 = vunpack.c.l.s8.bf16 %v485
        %v972 = vunpack.c.l.s8.bf16 %v486
        %v973 = vunpack.c.l.s8.bf16 %v487
        %v974 = vunpack.c.l.s8.bf16 %v488
        %v975 = vunpack.c.l.s8.bf16 %v489
        %v976 = vunpack.c.h.s8.bf16 %v472
        %v977 = vunpack.c.h.s8.bf16 %v473
        %v978 = vunpack.c.h.s8.bf16 %v474
        %v979 = vunpack.c.h.s8.bf16 %v475
        %v980 = vunpack.c.h.s8.bf16 %v476
        %v981 = vunpack.c.h.s8.bf16 %v477
        %v982 = vunpack.c.h.s8.bf16 %v478
        %v983 = vunpack.c.h.s8.bf16 %v479
        %v984 = vunpack.c.h.s8.bf16 %v480
        %v985 = vunpack.c.h.s8.bf16 %v481
        %v986 = vunpack.c.h.s8.bf16 %v482
        %v987 = vunpack.c.h.s8.bf16 %v483
        %v988 = vunpack.c.h.s8.bf16 %v484
        %v989 = vunpack.c.h.s8.bf16 %v485
        %v990 = vunpack.c.h.s8.bf16 %v486
        %v991 = vunpack.c.h.s8.bf16 %v487
        %v992 = vunpack.c.h.s8.bf16 %v488
        %v993 = vunpack.c.h.s8.bf16 %v489
        %v994 = vunpack.c.l.s8.bf16 %v490
        %v995 = vunpack.c.l.s8.bf16 %v491
        %v996 = vunpack.c.l.s8.bf16 %v492
        %v997 = vunpack.c.l.s8.bf16 %v493
        %v998 = vunpack.c.l.s8.bf16 %v494
        %v999 = vunpack.c.l.s8.bf16 %v495
        %v1000 = vunpack.c.l.s8.bf16 %v496
        %v1001 = vunpack.c.l.s8.bf16 %v497
        %v1002 = vunpack.c.l.s8.bf16 %v498
        %v1003 = vunpack.c.l.s8.bf16 %v499
        %v1004 = vunpack.c.l.s8.bf16 %v500
        %v1005 = vunpack.c.l.s8.bf16 %v501
        %v1006 = vunpack.c.l.s8.bf16 %v502
        %v1007 = vunpack.c.l.s8.bf16 %v503
        %v1008 = vunpack.c.l.s8.bf16 %v504
        %v1009 = vunpack.c.l.s8.bf16 %v505
        %v1010 = vunpack.c.l.s8.bf16 %v506
        %v1011 = vunpack.c.l.s8.bf16 %v507
        %v1012 = vunpack.c.h.s8.bf16 %v490
        %v1013 = vunpack.c.h.s8.bf16 %v491
        %v1014 = vunpack.c.h.s8.bf16 %v492
        %v1015 = vunpack.c.h.s8.bf16 %v493
        %v1016 = vunpack.c.h.s8.bf16 %v494
        %v1017 = vunpack.c.h.s8.bf16 %v495
        %v1018 = vunpack.c.h.s8.bf16 %v496
        %v1019 = vunpack.c.h.s8.bf16 %v497
        %v1020 = vunpack.c.h.s8.bf16 %v498
        %v1021 = vunpack.c.h.s8.bf16 %v499
        %v1022 = vunpack.c.h.s8.bf16 %v500
        %v1023 = vunpack.c.h.s8.bf16 %v501
        %v1024 = vunpack.c.h.s8.bf16 %v502
        %v1025 = vunpack.c.h.s8.bf16 %v503
        %v1026 = vunpack.c.h.s8.bf16 %v504
        %v1027 = vunpack.c.h.s8.bf16 %v505
        %v1028 = vunpack.c.h.s8.bf16 %v506
        %v1029 = vunpack.c.h.s8.bf16 %v507
        %v1030 = vunpack.c.l.s8.bf16 %v508
        %v1031 = vunpack.c.l.s8.bf16 %v509
        %v1032 = vunpack.c.l.s8.bf16 %v510
        %v1033 = vunpack.c.l.s8.bf16 %v511
        %v1034 = vunpack.c.l.s8.bf16 %v512
        %v1035 = vunpack.c.l.s8.bf16 %v513
        %v1036 = vunpack.c.l.s8.bf16 %v514
        %v1037 = vunpack.c.l.s8.bf16 %v515
        %v1038 = vunpack.c.l.s8.bf16 %v516
        %v1039 = vunpack.c.l.s8.bf16 %v517
        %v1040 = vunpack.c.l.s8.bf16 %v518
        %v1041 = vunpack.c.l.s8.bf16 %v519
        %v1042 = vunpack.c.l.s8.bf16 %v520
        %v1043 = vunpack.c.l.s8.bf16 %v521
        %v1044 = vunpack.c.l.s8.bf16 %v522
        %v1045 = vunpack.c.l.s8.bf16 %v523
        %v1046 = vunpack.c.l.s8.bf16 %v524
        %v1047 = vunpack.c.l.s8.bf16 %v525
        %v1048 = vunpack.c.h.s8.bf16 %v508
        %v1049 = vunpack.c.h.s8.bf16 %v509
        %v1050 = vunpack.c.h.s8.bf16 %v510
        %v1051 = vunpack.c.h.s8.bf16 %v511
        %v1052 = vunpack.c.h.s8.bf16 %v512
        %v1053 = vunpack.c.h.s8.bf16 %v513
        %v1054 = vunpack.c.h.s8.bf16 %v514
        %v1055 = vunpack.c.h.s8.bf16 %v515
        %v1056 = vunpack.c.h.s8.bf16 %v516
        %v1057 = vunpack.c.h.s8.bf16 %v517
        %v1058 = vunpack.c.h.s8.bf16 %v518
        %v1059 = vunpack.c.h.s8.bf16 %v519
        %v1060 = vunpack.c.h.s8.bf16 %v520
        %v1061 = vunpack.c.h.s8.bf16 %v521
        %v1062 = vunpack.c.h.s8.bf16 %v522
        %v1063 = vunpack.c.h.s8.bf16 %v523
        %v1064 = vunpack.c.h.s8.bf16 %v524
        %v1065 = vunpack.c.h.s8.bf16 %v525
        %v1066 = vunpack.c.l.s8.bf16 %v526
        %v1067 = vunpack.c.l.s8.bf16 %v527
        %v1068 = vunpack.c.l.s8.bf16 %v528
        %v1069 = vunpack.c.l.s8.bf16 %v529
        %v1070 = vunpack.c.l.s8.bf16 %v530
        %v1071 = vunpack.c.l.s8.bf16 %v531
        %v1072 = vunpack.c.l.s8.bf16 %v532
        %v1073 = vunpack.c.l.s8.bf16 %v533
        %v1074 = vunpack.c.l.s8.bf16 %v534
        %v1075 = vunpack.c.l.s8.bf16 %v535
        %v1076 = vunpack.c.l.s8.bf16 %v536
        %v1077 = vunpack.c.l.s8.bf16 %v537
        %v1078 = vunpack.c.l.s8.bf16 %v538
        %v1079 = vunpack.c.l.s8.bf16 %v539
        %v1080 = vunpack.c.l.s8.bf16 %v540
        %v1081 = vunpack.c.l.s8.bf16 %v541
        %v1082 = vunpack.c.l.s8.bf16 %v542
        %v1083 = vunpack.c.l.s8.bf16 %v543
        %v1084 = vunpack.c.h.s8.bf16 %v526
        %v1085 = vunpack.c.h.s8.bf16 %v527
        %v1086 = vunpack.c.h.s8.bf16 %v528
        %v1087 = vunpack.c.h.s8.bf16 %v529
        %v1088 = vunpack.c.h.s8.bf16 %v530
        %v1089 = vunpack.c.h.s8.bf16 %v531
        %v1090 = vunpack.c.h.s8.bf16 %v532
        %v1091 = vunpack.c.h.s8.bf16 %v533
        %v1092 = vunpack.c.h.s8.bf16 %v534
        %v1093 = vunpack.c.h.s8.bf16 %v535
        %v1094 = vunpack.c.h.s8.bf16 %v536
        %v1095 = vunpack.c.h.s8.bf16 %v537
        %v1096 = vunpack.c.h.s8.bf16 %v538
        %v1097 = vunpack.c.h.s8.bf16 %v539
        %v1098 = vunpack.c.h.s8.bf16 %v540
        %v1099 = vunpack.c.h.s8.bf16 %v541
        %v1100 = vunpack.c.h.s8.bf16 %v542
        %v1101 = vunpack.c.h.s8.bf16 %v543
        %v1102 = vunpack.c.l.s8.bf16 %v544
        %v1103 = vunpack.c.l.s8.bf16 %v545
        %v1104 = vunpack.c.l.s8.bf16 %v546
        %v1105 = vunpack.c.l.s8.bf16 %v547
        %v1106 = vunpack.c.l.s8.bf16 %v548
        %v1107 = vunpack.c.l.s8.bf16 %v549
        %v1108 = vunpack.c.l.s8.bf16 %v550
        %v1109 = vunpack.c.l.s8.bf16 %v551
        %v1110 = vunpack.c.l.s8.bf16 %v552
        %v1111 = vunpack.c.l.s8.bf16 %v553
        %v1112 = vunpack.c.l.s8.bf16 %v554
        %v1113 = vunpack.c.l.s8.bf16 %v555
        %v1114 = vunpack.c.l.s8.bf16 %v556
        %v1115 = vunpack.c.l.s8.bf16 %v557
        %v1116 = vunpack.c.l.s8.bf16 %v558
        %v1117 = vunpack.c.l.s8.bf16 %v559
        %v1118 = vunpack.c.l.s8.bf16 %v560
        %v1119 = vunpack.c.l.s8.bf16 %v561
        %v1120 = vunpack.c.h.s8.bf16 %v544
        %v1121 = vunpack.c.h.s8.bf16 %v545
        %v1122 = vunpack.c.h.s8.bf16 %v546
        %v1123 = vunpack.c.h.s8.bf16 %v547
        %v1124 = vunpack.c.h.s8.bf16 %v548
        %v1125 = vunpack.c.h.s8.bf16 %v549
        %v1126 = vunpack.c.h.s8.bf16 %v550
        %v1127 = vunpack.c.h.s8.bf16 %v551
        %v1128 = vunpack.c.h.s8.bf16 %v552
        %v1129 = vunpack.c.h.s8.bf16 %v553
        %v1130 = vunpack.c.h.s8.bf16 %v554
        %v1131 = vunpack.c.h.s8.bf16 %v555
        %v1132 = vunpack.c.h.s8.bf16 %v556
        %v1133 = vunpack.c.h.s8.bf16 %v557
        %v1134 = vunpack.c.h.s8.bf16 %v558
        %v1135 = vunpack.c.h.s8.bf16 %v559
        %v1136 = vunpack.c.h.s8.bf16 %v560
        %v1137 = vunpack.c.h.s8.bf16 %v561
        %v1138 = vunpack.c.l.s8.bf16 %v562
        %v1139 = vunpack.c.l.s8.bf16 %v563
        %v1140 = vunpack.c.l.s8.bf16 %v564
        %v1141 = vunpack.c.l.s8.bf16 %v565
        %v1142 = vunpack.c.l.s8.bf16 %v566
        %v1143 = vunpack.c.l.s8.bf16 %v567
        %v1144 = vunpack.c.l.s8.bf16 %v568
        %v1145 = vunpack.c.l.s8.bf16 %v569
        %v1146 = vunpack.c.l.s8.bf16 %v570
        %v1147 = vunpack.c.l.s8.bf16 %v571
        %v1148 = vunpack.c.l.s8.bf16 %v572
        %v1149 = vunpack.c.l.s8.bf16 %v573
        %v1150 = vunpack.c.l.s8.bf16 %v574
        %v1151 = vunpack.c.l.s8.bf16 %v575
        %v1152 = vunpack.c.l.s8.bf16 %v576
        %v1153 = vunpack.c.l.s8.bf16 %v577
        %v1154 = vunpack.c.l.s8.bf16 %v578
        %v1155 = vunpack.c.l.s8.bf16 %v579
        %v1156 = vunpack.c.h.s8.bf16 %v562
        %v1157 = vunpack.c.h.s8.bf16 %v563
        %v1158 = vunpack.c.h.s8.bf16 %v564
        %v1159 = vunpack.c.h.s8.bf16 %v565
        %v1160 = vunpack.c.h.s8.bf16 %v566
        %v1161 = vunpack.c.h.s8.bf16 %v567
        %v1162 = vunpack.c.h.s8.bf16 %v568
        %v1163 = vunpack.c.h.s8.bf16 %v569
        %v1164 = vunpack.c.h.s8.bf16 %v570
        %v1165 = vunpack.c.h.s8.bf16 %v571
        %v1166 = vunpack.c.h.s8.bf16 %v572
        %v1167 = vunpack.c.h.s8.bf16 %v573
        %v1168 = vunpack.c.h.s8.bf16 %v574
        %v1169 = vunpack.c.h.s8.bf16 %v575
        %v1170 = vunpack.c.h.s8.bf16 %v576
        %v1171 = vunpack.c.h.s8.bf16 %v577
        %v1172 = vunpack.c.h.s8.bf16 %v578
        %v1173 = vunpack.c.h.s8.bf16 %v579
        %v1174 = vunpack.c.l.s8.bf16 %v580
        %v1175 = vunpack.c.l.s8.bf16 %v581
        %v1176 = vunpack.c.l.s8.bf16 %v582
        %v1177 = vunpack.c.l.s8.bf16 %v583
        %v1178 = vunpack.c.l.s8.bf16 %v584
        %v1179 = vunpack.c.l.s8.bf16 %v585
        %v1180 = vunpack.c.l.s8.bf16 %v586
        %v1181 = vunpack.c.l.s8.bf16 %v587
        %v1182 = vunpack.c.l.s8.bf16 %v588
        %v1183 = vunpack.c.l.s8.bf16 %v589
        %v1184 = vunpack.c.l.s8.bf16 %v590
        %v1185 = vunpack.c.l.s8.bf16 %v591
        %v1186 = vunpack.c.l.s8.bf16 %v592
        %v1187 = vunpack.c.l.s8.bf16 %v593
        %v1188 = vunpack.c.l.s8.bf16 %v594
        %v1189 = vunpack.c.l.s8.bf16 %v595
        %v1190 = vunpack.c.l.s8.bf16 %v596
        %v1191 = vunpack.c.l.s8.bf16 %v597
        %v1192 = vunpack.c.h.s8.bf16 %v580
        %v1193 = vunpack.c.h.s8.bf16 %v581
        %v1194 = vunpack.c.h.s8.bf16 %v582
        %v1195 = vunpack.c.h.s8.bf16 %v583
        %v1196 = vunpack.c.h.s8.bf16 %v584
        %v1197 = vunpack.c.h.s8.bf16 %v585
        %v1198 = vunpack.c.h.s8.bf16 %v586
        %v1199 = vunpack.c.h.s8.bf16 %v587
        %v1200 = vunpack.c.h.s8.bf16 %v588
        %v1201 = vunpack.c.h.s8.bf16 %v589
        %v1202 = vunpack.c.h.s8.bf16 %v590
        %v1203 = vunpack.c.h.s8.bf16 %v591
        %v1204 = vunpack.c.h.s8.bf16 %v592
        %v1205 = vunpack.c.h.s8.bf16 %v593
        %v1206 = vunpack.c.h.s8.bf16 %v594
        %v1207 = vunpack.c.h.s8.bf16 %v595
        %v1208 = vunpack.c.h.s8.bf16 %v596
        %v1209 = vunpack.c.h.s8.bf16 %v597
        %v1210 = vunpack.c.l.s8.bf16 %v598
        %v1211 = vunpack.c.l.s8.bf16 %v599
        %v1212 = vunpack.c.l.s8.bf16 %v600
        %v1213 = vunpack.c.l.s8.bf16 %v601
        %v1214 = vunpack.c.l.s8.bf16 %v602
        %v1215 = vunpack.c.l.s8.bf16 %v603
        %v1216 = vunpack.c.l.s8.bf16 %v604
        %v1217 = vunpack.c.l.s8.bf16 %v605
        %v1218 = vunpack.c.l.s8.bf16 %v606
        %v1219 = vunpack.c.l.s8.bf16 %v607
        %v1220 = vunpack.c.l.s8.bf16 %v608
        %v1221 = vunpack.c.l.s8.bf16 %v609
        %v1222 = vunpack.c.l.s8.bf16 %v610
        %v1223 = vunpack.c.l.s8.bf16 %v611
        %v1224 = vunpack.c.l.s8.bf16 %v612
        %v1225 = vunpack.c.l.s8.bf16 %v613
        %v1226 = vunpack.c.l.s8.bf16 %v614
        %v1227 = vunpack.c.l.s8.bf16 %v615
        %v1228 = vunpack.c.h.s8.bf16 %v598
        %v1229 = vunpack.c.h.s8.bf16 %v599
        %v1230 = vunpack.c.h.s8.bf16 %v600
        %v1231 = vunpack.c.h.s8.bf16 %v601
        %v1232 = vunpack.c.h.s8.bf16 %v602
        %v1233 = vunpack.c.h.s8.bf16 %v603
        %v1234 = vunpack.c.h.s8.bf16 %v604
        %v1235 = vunpack.c.h.s8.bf16 %v605
        %v1236 = vunpack.c.h.s8.bf16 %v606
        %v1237 = vunpack.c.h.s8.bf16 %v607
        %v1238 = vunpack.c.h.s8.bf16 %v608
        %v1239 = vunpack.c.h.s8.bf16 %v609
        %v1240 = vunpack.c.h.s8.bf16 %v610
        %v1241 = vunpack.c.h.s8.bf16 %v611
        %v1242 = vunpack.c.h.s8.bf16 %v612
        %v1243 = vunpack.c.h.s8.bf16 %v613
        %v1244 = vunpack.c.h.s8.bf16 %v614
        %v1245 = vunpack.c.h.s8.bf16 %v615
        %v1246 = vunpack.c.l.s8.bf16 %v616
        %v1247 = vunpack.c.l.s8.bf16 %v617
        %v1248 = vunpack.c.l.s8.bf16 %v618
        %v1249 = vunpack.c.l.s8.bf16 %v619
        %v1250 = vunpack.c.l.s8.bf16 %v620
        %v1251 = vunpack.c.l.s8.bf16 %v621
        %v1252 = vunpack.c.l.s8.bf16 %v622
        %v1253 = vunpack.c.l.s8.bf16 %v623
        %v1254 = vunpack.c.l.s8.bf16 %v624
        %v1255 = vunpack.c.l.s8.bf16 %v625
        %v1256 = vunpack.c.l.s8.bf16 %v626
        %v1257 = vunpack.c.l.s8.bf16 %v627
        %v1258 = vunpack.c.l.s8.bf16 %v628
        %v1259 = vunpack.c.l.s8.bf16 %v629
        %v1260 = vunpack.c.l.s8.bf16 %v630
        %v1261 = vunpack.c.l.s8.bf16 %v631
        %v1262 = vunpack.c.l.s8.bf16 %v632
        %v1263 = vunpack.c.l.s8.bf16 %v633
        %v1264 = vunpack.c.h.s8.bf16 %v616
        %v1265 = vunpack.c.h.s8.bf16 %v617
        %v1266 = vunpack.c.h.s8.bf16 %v618
        %v1267 = vunpack.c.h.s8.bf16 %v619
        %v1268 = vunpack.c.h.s8.bf16 %v620
        %v1269 = vunpack.c.h.s8.bf16 %v621
        %v1270 = vunpack.c.h.s8.bf16 %v622
        %v1271 = vunpack.c.h.s8.bf16 %v623
        %v1272 = vunpack.c.h.s8.bf16 %v624
        %v1273 = vunpack.c.h.s8.bf16 %v625
        %v1274 = vunpack.c.h.s8.bf16 %v626
        %v1275 = vunpack.c.h.s8.bf16 %v627
        %v1276 = vunpack.c.h.s8.bf16 %v628
        %v1277 = vunpack.c.h.s8.bf16 %v629
        %v1278 = vunpack.c.h.s8.bf16 %v630
        %v1279 = vunpack.c.h.s8.bf16 %v631
        %v1280 = vunpack.c.h.s8.bf16 %v632
        %v1281 = vunpack.c.h.s8.bf16 %v633
        %v1282 = vunpack.c.l.s8.bf16 %v634
        %v1283 = vunpack.c.l.s8.bf16 %v635
        %v1284 = vunpack.c.l.s8.bf16 %v636
        %v1285 = vunpack.c.l.s8.bf16 %v637
        %v1286 = vunpack.c.l.s8.bf16 %v638
        %v1287 = vunpack.c.l.s8.bf16 %v639
        %v1288 = vunpack.c.l.s8.bf16 %v640
        %v1289 = vunpack.c.l.s8.bf16 %v641
        %v1290 = vunpack.c.l.s8.bf16 %v642
        %v1291 = vunpack.c.l.s8.bf16 %v643
        %v1292 = vunpack.c.l.s8.bf16 %v644
        %v1293 = vunpack.c.l.s8.bf16 %v645
        %v1294 = vunpack.c.l.s8.bf16 %v646
        %v1295 = vunpack.c.l.s8.bf16 %v647
        %v1296 = vunpack.c.l.s8.bf16 %v648
        %v1297 = vunpack.c.l.s8.bf16 %v649
        %v1298 = vunpack.c.l.s8.bf16 %v650
        %v1299 = vunpack.c.l.s8.bf16 %v651
        %v1300 = vunpack.c.h.s8.bf16 %v634
        %v1301 = vunpack.c.h.s8.bf16 %v635
        %v1302 = vunpack.c.h.s8.bf16 %v636
        %v1303 = vunpack.c.h.s8.bf16 %v637
        %v1304 = vunpack.c.h.s8.bf16 %v638
        %v1305 = vunpack.c.h.s8.bf16 %v639
        %v1306 = vunpack.c.h.s8.bf16 %v640
        %v1307 = vunpack.c.h.s8.bf16 %v641
        %v1308 = vunpack.c.h.s8.bf16 %v642
        %v1309 = vunpack.c.h.s8.bf16 %v643
        %v1310 = vunpack.c.h.s8.bf16 %v644
        %v1311 = vunpack.c.h.s8.bf16 %v645
        %v1312 = vunpack.c.h.s8.bf16 %v646
        %v1313 = vunpack.c.h.s8.bf16 %v647
        %v1314 = vunpack.c.h.s8.bf16 %v648
        %v1315 = vunpack.c.h.s8.bf16 %v649
        %v1316 = vunpack.c.h.s8.bf16 %v650
        %v1317 = vunpack.c.h.s8.bf16 %v651
        %v1318 = vunpack.c.l.s8.bf16 %v652
        %v1319 = vunpack.c.l.s8.bf16 %v653
        %v1320 = vunpack.c.l.s8.bf16 %v654
        %v1321 = vunpack.c.l.s8.bf16 %v655
        %v1322 = vunpack.c.l.s8.bf16 %v656
        %v1323 = vunpack.c.l.s8.bf16 %v657
        %v1324 = vunpack.c.l.s8.bf16 %v658
        %v1325 = vunpack.c.l.s8.bf16 %v659
        %v1326 = vunpack.c.l.s8.bf16 %v660
        %v1327 = vunpack.c.l.s8.bf16 %v661
        %v1328 = vunpack.c.l.s8.bf16 %v662
        %v1329 = vunpack.c.l.s8.bf16 %v663
        %v1330 = vunpack.c.l.s8.bf16 %v664
        %v1331 = vunpack.c.l.s8.bf16 %v665
        %v1332 = vunpack.c.l.s8.bf16 %v666
        %v1333 = vunpack.c.l.s8.bf16 %v667
        %v1334 = vunpack.c.l.s8.bf16 %v668
        %v1335 = vunpack.c.l.s8.bf16 %v669
        %v1336 = vunpack.c.h.s8.bf16 %v652
        %v1337 = vunpack.c.h.s8.bf16 %v653
        %v1338 = vunpack.c.h.s8.bf16 %v654
        %v1339 = vunpack.c.h.s8.bf16 %v655
        %v1340 = vunpack.c.h.s8.bf16 %v656
        %v1341 = vunpack.c.h.s8.bf16 %v657
        %v1342 = vunpack.c.h.s8.bf16 %v658
        %v1343 = vunpack.c.h.s8.bf16 %v659
        %v1344 = vunpack.c.h.s8.bf16 %v660
        %v1345 = vunpack.c.h.s8.bf16 %v661
        %v1346 = vunpack.c.h.s8.bf16 %v662
        %v1347 = vunpack.c.h.s8.bf16 %v663
        %v1348 = vunpack.c.h.s8.bf16 %v664
        %v1349 = vunpack.c.h.s8.bf16 %v665
        %v1350 = vunpack.c.h.s8.bf16 %v666
        %v1351 = vunpack.c.h.s8.bf16 %v667
        %v1352 = vunpack.c.h.s8.bf16 %v668
        %v1353 = vunpack.c.h.s8.bf16 %v669
        %v1354 = vunpack.c.l.s8.bf16 %v670
        %v1355 = vunpack.c.l.s8.bf16 %v671
        %v1356 = vunpack.c.l.s8.bf16 %v672
        %v1357 = vunpack.c.l.s8.bf16 %v673
        %v1358 = vunpack.c.l.s8.bf16 %v674
        %v1359 = vunpack.c.l.s8.bf16 %v675
        %v1360 = vunpack.c.l.s8.bf16 %v676
        %v1361 = vunpack.c.l.s8.bf16 %v677
        %v1362 = vunpack.c.l.s8.bf16 %v678
        %v1363 = vunpack.c.l.s8.bf16 %v679
        %v1364 = vunpack.c.l.s8.bf16 %v680
        %v1365 = vunpack.c.l.s8.bf16 %v681
        %v1366 = vunpack.c.l.s8.bf16 %v682
        %v1367 = vunpack.c.l.s8.bf16 %v683
        %v1368 = vunpack.c.l.s8.bf16 %v684
        %v1369 = vunpack.c.l.s8.bf16 %v685
        %v1370 = vunpack.c.l.s8.bf16 %v686
        %v1371 = vunpack.c.l.s8.bf16 %v687
        %v1372 = vunpack.c.h.s8.bf16 %v670
        %v1373 = vunpack.c.h.s8.bf16 %v671
        %v1374 = vunpack.c.h.s8.bf16 %v672
        %v1375 = vunpack.c.h.s8.bf16 %v673
        %v1376 = vunpack.c.h.s8.bf16 %v674
        %v1377 = vunpack.c.h.s8.bf16 %v675
        %v1378 = vunpack.c.h.s8.bf16 %v676
        %v1379 = vunpack.c.h.s8.bf16 %v677
        %v1380 = vunpack.c.h.s8.bf16 %v678
        %v1381 = vunpack.c.h.s8.bf16 %v679
        %v1382 = vunpack.c.h.s8.bf16 %v680
        %v1383 = vunpack.c.h.s8.bf16 %v681
        %v1384 = vunpack.c.h.s8.bf16 %v682
        %v1385 = vunpack.c.h.s8.bf16 %v683
        %v1386 = vunpack.c.h.s8.bf16 %v684
        %v1387 = vunpack.c.h.s8.bf16 %v685
        %v1388 = vunpack.c.h.s8.bf16 %v686
        %v1389 = vunpack.c.h.s8.bf16 %v687
        %v1390 = vunpack.c.l.s8.bf16 %v688
        %v1391 = vunpack.c.l.s8.bf16 %v689
        %v1392 = vunpack.c.l.s8.bf16 %v690
        %v1393 = vunpack.c.l.s8.bf16 %v691
        %v1394 = vunpack.c.l.s8.bf16 %v692
        %v1395 = vunpack.c.l.s8.bf16 %v693
        %v1396 = vunpack.c.l.s8.bf16 %v694
        %v1397 = vunpack.c.l.s8.bf16 %v695
        %v1398 = vunpack.c.l.s8.bf16 %v696
        %v1399 = vunpack.c.l.s8.bf16 %v697
        %v1400 = vunpack.c.l.s8.bf16 %v698
        %v1401 = vunpack.c.l.s8.bf16 %v699
        %v1402 = vunpack.c.l.s8.bf16 %v700
        %v1403 = vunpack.c.l.s8.bf16 %v701
        %v1404 = vunpack.c.l.s8.bf16 %v702
        %v1405 = vunpack.c.l.s8.bf16 %v703
        %v1406 = vunpack.c.l.s8.bf16 %v704
        %v1407 = vunpack.c.l.s8.bf16 %v705
        %v1408 = vunpack.c.h.s8.bf16 %v688
        %v1409 = vunpack.c.h.s8.bf16 %v689
        %v1410 = vunpack.c.h.s8.bf16 %v690
        %v1411 = vunpack.c.h.s8.bf16 %v691
        %v1412 = vunpack.c.h.s8.bf16 %v692
        %v1413 = vunpack.c.h.s8.bf16 %v693
        %v1414 = vunpack.c.h.s8.bf16 %v694
        %v1415 = vunpack.c.h.s8.bf16 %v695
        %v1416 = vunpack.c.h.s8.bf16 %v696
        %v1417 = vunpack.c.h.s8.bf16 %v697
        %v1418 = vunpack.c.h.s8.bf16 %v698
        %v1419 = vunpack.c.h.s8.bf16 %v699
        %v1420 = vunpack.c.h.s8.bf16 %v700
        %v1421 = vunpack.c.h.s8.bf16 %v701
        %v1422 = vunpack.c.h.s8.bf16 %v702
        %v1423 = vunpack.c.h.s8.bf16 %v703
        %v1424 = vunpack.c.h.s8.bf16 %v704
        %v1425 = vunpack.c.h.s8.bf16 %v705
        %v1426 = vunpack.c.l.s8.bf16 %v706
        %v1427 = vunpack.c.l.s8.bf16 %v707
        %v1428 = vunpack.c.l.s8.bf16 %v708
        %v1429 = vunpack.c.l.s8.bf16 %v709
        %v1430 = vunpack.c.l.s8.bf16 %v710
        %v1431 = vunpack.c.l.s8.bf16 %v711
        %v1432 = vunpack.c.l.s8.bf16 %v712
        %v1433 = vunpack.c.l.s8.bf16 %v713
        %v1434 = vunpack.c.l.s8.bf16 %v714
        %v1435 = vunpack.c.l.s8.bf16 %v715
        %v1436 = vunpack.c.l.s8.bf16 %v716
        %v1437 = vunpack.c.l.s8.bf16 %v717
        %v1438 = vunpack.c.l.s8.bf16 %v718
        %v1439 = vunpack.c.l.s8.bf16 %v719
        %v1440 = vunpack.c.l.s8.bf16 %v720
        %v1441 = vunpack.c.l.s8.bf16 %v721
        %v1442 = vunpack.c.l.s8.bf16 %v722
        %v1443 = vunpack.c.l.s8.bf16 %v723
        %v1444 = vunpack.c.h.s8.bf16 %v706
        %v1445 = vunpack.c.h.s8.bf16 %v707
        %v1446 = vunpack.c.h.s8.bf16 %v708
        %v1447 = vunpack.c.h.s8.bf16 %v709
        %v1448 = vunpack.c.h.s8.bf16 %v710
        %v1449 = vunpack.c.h.s8.bf16 %v711
        %v1450 = vunpack.c.h.s8.bf16 %v712
        %v1451 = vunpack.c.h.s8.bf16 %v713
        %v1452 = vunpack.c.h.s8.bf16 %v714
        %v1453 = vunpack.c.h.s8.bf16 %v715
        %v1454 = vunpack.c.h.s8.bf16 %v716
        %v1455 = vunpack.c.h.s8.bf16 %v717
        %v1456 = vunpack.c.h.s8.bf16 %v718
        %v1457 = vunpack.c.h.s8.bf16 %v719
        %v1458 = vunpack.c.h.s8.bf16 %v720
        %v1459 = vunpack.c.h.s8.bf16 %v721
        %v1460 = vunpack.c.h.s8.bf16 %v722
        %v1461 = vunpack.c.h.s8.bf16 %v723
        %v1462 = vunpack.c.l.s8.bf16 %v724
        %v1463 = vunpack.c.l.s8.bf16 %v725
        %v1464 = vunpack.c.l.s8.bf16 %v726
        %v1465 = vunpack.c.l.s8.bf16 %v727
        %v1466 = vunpack.c.l.s8.bf16 %v728
        %v1467 = vunpack.c.l.s8.bf16 %v729
        %v1468 = vunpack.c.l.s8.bf16 %v730
        %v1469 = vunpack.c.l.s8.bf16 %v731
        %v1470 = vunpack.c.l.s8.bf16 %v732
        %v1471 = vunpack.c.l.s8.bf16 %v733
        %v1472 = vunpack.c.l.s8.bf16 %v734
        %v1473 = vunpack.c.l.s8.bf16 %v735
        %v1474 = vunpack.c.l.s8.bf16 %v736
        %v1475 = vunpack.c.l.s8.bf16 %v737
        %v1476 = vunpack.c.l.s8.bf16 %v738
        %v1477 = vunpack.c.l.s8.bf16 %v739
        %v1478 = vunpack.c.l.s8.bf16 %v740
        %v1479 = vunpack.c.l.s8.bf16 %v741
        %v1480 = vunpack.c.h.s8.bf16 %v724
        %v1481 = vunpack.c.h.s8.bf16 %v725
        %v1482 = vunpack.c.h.s8.bf16 %v726
        %v1483 = vunpack.c.h.s8.bf16 %v727
        %v1484 = vunpack.c.h.s8.bf16 %v728
        %v1485 = vunpack.c.h.s8.bf16 %v729
        %v1486 = vunpack.c.h.s8.bf16 %v730
        %v1487 = vunpack.c.h.s8.bf16 %v731
        %v1488 = vunpack.c.h.s8.bf16 %v732
        %v1489 = vunpack.c.h.s8.bf16 %v733
        %v1490 = vunpack.c.h.s8.bf16 %v734
        %v1491 = vunpack.c.h.s8.bf16 %v735
        %v1492 = vunpack.c.h.s8.bf16 %v736
        %v1493 = vunpack.c.h.s8.bf16 %v737
        %v1494 = vunpack.c.h.s8.bf16 %v738
        %v1495 = vunpack.c.h.s8.bf16 %v739
        %v1496 = vunpack.c.h.s8.bf16 %v740
        %v1497 = vunpack.c.h.s8.bf16 %v741
        %v1498 = vunpack.c.l.s8.bf16 %v742
        %v1499 = vunpack.c.l.s8.bf16 %v743
        %v1500 = vunpack.c.l.s8.bf16 %v744
        %v1501 = vunpack.c.l.s8.bf16 %v745
        %v1502 = vunpack.c.l.s8.bf16 %v746
        %v1503 = vunpack.c.l.s8.bf16 %v747
        %v1504 = vunpack.c.l.s8.bf16 %v748
        %v1505 = vunpack.c.l.s8.bf16 %v749
        %v1506 = vunpack.c.l.s8.bf16 %v750
        %v1507 = vunpack.c.l.s8.bf16 %v751
        %v1508 = vunpack.c.l.s8.bf16 %v752
        %v1509 = vunpack.c.l.s8.bf16 %v753
        %v1510 = vunpack.c.l.s8.bf16 %v754
        %v1511 = vunpack.c.l.s8.bf16 %v755
        %v1512 = vunpack.c.l.s8.bf16 %v756
        %v1513 = vunpack.c.l.s8.bf16 %v757
        %v1514 = vunpack.c.l.s8.bf16 %v758
        %v1515 = vunpack.c.l.s8.bf16 %v759
        %v1516 = vunpack.c.h.s8.bf16 %v742
        %v1517 = vunpack.c.h.s8.bf16 %v743
        %v1518 = vunpack.c.h.s8.bf16 %v744
        %v1519 = vunpack.c.h.s8.bf16 %v745
        %v1520 = vunpack.c.h.s8.bf16 %v746
        %v1521 = vunpack.c.h.s8.bf16 %v747
        %v1522 = vunpack.c.h.s8.bf16 %v748
        %v1523 = vunpack.c.h.s8.bf16 %v749
        %v1524 = vunpack.c.h.s8.bf16 %v750
        %v1525 = vunpack.c.h.s8.bf16 %v751
        %v1526 = vunpack.c.h.s8.bf16 %v752
        %v1527 = vunpack.c.h.s8.bf16 %v753
        %v1528 = vunpack.c.h.s8.bf16 %v754
        %v1529 = vunpack.c.h.s8.bf16 %v755
        %v1530 = vunpack.c.h.s8.bf16 %v756
        %v1531 = vunpack.c.h.s8.bf16 %v757
        %v1532 = vunpack.c.h.s8.bf16 %v758
        %v1533 = vunpack.c.h.s8.bf16 %v759
        %v1534 = vunpack.c.l.s8.bf16 %v760
        %v1535 = vunpack.c.l.s8.bf16 %v761
        %v1536 = vunpack.c.l.s8.bf16 %v762
        %v1537 = vunpack.c.l.s8.bf16 %v763
        %v1538 = vunpack.c.l.s8.bf16 %v764
        %v1539 = vunpack.c.l.s8.bf16 %v765
        %v1540 = vunpack.c.l.s8.bf16 %v766
        %v1541 = vunpack.c.l.s8.bf16 %v767
        %v1542 = vunpack.c.l.s8.bf16 %v768
        %v1543 = vunpack.c.l.s8.bf16 %v769
        %v1544 = vunpack.c.l.s8.bf16 %v770
        %v1545 = vunpack.c.l.s8.bf16 %v771
        %v1546 = vunpack.c.l.s8.bf16 %v772
        %v1547 = vunpack.c.l.s8.bf16 %v773
        %v1548 = vunpack.c.l.s8.bf16 %v774
        %v1549 = vunpack.c.l.s8.bf16 %v775
        %v1550 = vunpack.c.l.s8.bf16 %v776
        %v1551 = vunpack.c.l.s8.bf16 %v777
        %v1552 = vunpack.c.h.s8.bf16 %v760
        %v1553 = vunpack.c.h.s8.bf16 %v761
        %v1554 = vunpack.c.h.s8.bf16 %v762
        %v1555 = vunpack.c.h.s8.bf16 %v763
        %v1556 = vunpack.c.h.s8.bf16 %v764
        %v1557 = vunpack.c.h.s8.bf16 %v765
        %v1558 = vunpack.c.h.s8.bf16 %v766
        %v1559 = vunpack.c.h.s8.bf16 %v767
        %v1560 = vunpack.c.h.s8.bf16 %v768
        %v1561 = vunpack.c.h.s8.bf16 %v769
        %v1562 = vunpack.c.h.s8.bf16 %v770
        %v1563 = vunpack.c.h.s8.bf16 %v771
        %v1564 = vunpack.c.h.s8.bf16 %v772
        %v1565 = vunpack.c.h.s8.bf16 %v773
        %v1566 = vunpack.c.h.s8.bf16 %v774
        %v1567 = vunpack.c.h.s8.bf16 %v775
        %v1568 = vunpack.c.h.s8.bf16 %v776
        %v1569 = vunpack.c.h.s8.bf16 %v777
        %v1570 = vunpack.c.l.s8.bf16 %v778
        %v1571 = vunpack.c.l.s8.bf16 %v779
        %v1572 = vunpack.c.l.s8.bf16 %v780
        %v1573 = vunpack.c.l.s8.bf16 %v781
        %v1574 = vunpack.c.l.s8.bf16 %v782
        %v1575 = vunpack.c.l.s8.bf16 %v783
        %v1576 = vunpack.c.l.s8.bf16 %v784
        %v1577 = vunpack.c.l.s8.bf16 %v785
        %v1578 = vunpack.c.l.s8.bf16 %v786
        %v1579 = vunpack.c.l.s8.bf16 %v787
        %v1580 = vunpack.c.l.s8.bf16 %v788
        %v1581 = vunpack.c.l.s8.bf16 %v789
        %v1582 = vunpack.c.l.s8.bf16 %v790
        %v1583 = vunpack.c.l.s8.bf16 %v791
        %v1584 = vunpack.c.l.s8.bf16 %v792
        %v1585 = vunpack.c.l.s8.bf16 %v793
        %v1586 = vunpack.c.l.s8.bf16 %v794
        %v1587 = vunpack.c.l.s8.bf16 %v795
        %v1588 = vunpack.c.h.s8.bf16 %v778
        %v1589 = vunpack.c.h.s8.bf16 %v779
        %v1590 = vunpack.c.h.s8.bf16 %v780
        %v1591 = vunpack.c.h.s8.bf16 %v781
        %v1592 = vunpack.c.h.s8.bf16 %v782
        %v1593 = vunpack.c.h.s8.bf16 %v783
        %v1594 = vunpack.c.h.s8.bf16 %v784
        %v1595 = vunpack.c.h.s8.bf16 %v785
        %v1596 = vunpack.c.h.s8.bf16 %v786
        %v1597 = vunpack.c.h.s8.bf16 %v787
        %v1598 = vunpack.c.h.s8.bf16 %v788
        %v1599 = vunpack.c.h.s8.bf16 %v789
        %v1600 = vunpack.c.h.s8.bf16 %v790
        %v1601 = vunpack.c.h.s8.bf16 %v791
        %v1602 = vunpack.c.h.s8.bf16 %v792
        %v1603 = vunpack.c.h.s8.bf16 %v793
        %v1604 = vunpack.c.h.s8.bf16 %v794
        %v1605 = vunpack.c.h.s8.bf16 %v795
        %v1606 = vunpack.c.l.s8.bf16 %v796
        %v1607 = vunpack.c.l.s8.bf16 %v797
        %v1608 = vunpack.c.l.s8.bf16 %v798
        %v1609 = vunpack.c.l.s8.bf16 %v799
        %v1610 = vunpack.c.l.s8.bf16 %v800
        %v1611 = vunpack.c.l.s8.bf16 %v801
        %v1612 = vunpack.c.l.s8.bf16 %v802
        %v1613 = vunpack.c.l.s8.bf16 %v803
        %v1614 = vunpack.c.l.s8.bf16 %v804
        %v1615 = vunpack.c.l.s8.bf16 %v805
        %v1616 = vunpack.c.l.s8.bf16 %v806
        %v1617 = vunpack.c.l.s8.bf16 %v807
        %v1618 = vunpack.c.l.s8.bf16 %v808
        %v1619 = vunpack.c.l.s8.bf16 %v809
        %v1620 = vunpack.c.l.s8.bf16 %v810
        %v1621 = vunpack.c.l.s8.bf16 %v811
        %v1622 = vunpack.c.l.s8.bf16 %v812
        %v1623 = vunpack.c.l.s8.bf16 %v813
        %v1624 = vunpack.c.h.s8.bf16 %v796
        %v1625 = vunpack.c.h.s8.bf16 %v797
        %v1626 = vunpack.c.h.s8.bf16 %v798
        %v1627 = vunpack.c.h.s8.bf16 %v799
        %v1628 = vunpack.c.h.s8.bf16 %v800
        %v1629 = vunpack.c.h.s8.bf16 %v801
        %v1630 = vunpack.c.h.s8.bf16 %v802
        %v1631 = vunpack.c.h.s8.bf16 %v803
        %v1632 = vunpack.c.h.s8.bf16 %v804
        %v1633 = vunpack.c.h.s8.bf16 %v805
        %v1634 = vunpack.c.h.s8.bf16 %v806
        %v1635 = vunpack.c.h.s8.bf16 %v807
        %v1636 = vunpack.c.h.s8.bf16 %v808
        %v1637 = vunpack.c.h.s8.bf16 %v809
        %v1638 = vunpack.c.h.s8.bf16 %v810
        %v1639 = vunpack.c.h.s8.bf16 %v811
        %v1640 = vunpack.c.h.s8.bf16 %v812
        %v1641 = vunpack.c.h.s8.bf16 %v813
        %v1642 = vunpack.c.l.s8.bf16 %v814
        %v1643 = vunpack.c.l.s8.bf16 %v815
        %v1644 = vunpack.c.l.s8.bf16 %v816
        %v1645 = vunpack.c.l.s8.bf16 %v817
        %v1646 = vunpack.c.l.s8.bf16 %v818
        %v1647 = vunpack.c.l.s8.bf16 %v819
        %v1648 = vunpack.c.l.s8.bf16 %v820
        %v1649 = vunpack.c.l.s8.bf16 %v821
        %v1650 = vunpack.c.l.s8.bf16 %v822
        %v1651 = vunpack.c.l.s8.bf16 %v823
        %v1652 = vunpack.c.l.s8.bf16 %v824
        %v1653 = vunpack.c.l.s8.bf16 %v825
        %v1654 = vunpack.c.l.s8.bf16 %v826
        %v1655 = vunpack.c.l.s8.bf16 %v827
        %v1656 = vunpack.c.l.s8.bf16 %v828
        %v1657 = vunpack.c.l.s8.bf16 %v829
        %v1658 = vunpack.c.l.s8.bf16 %v830
        %v1659 = vunpack.c.l.s8.bf16 %v831
        %v1660 = vunpack.c.h.s8.bf16 %v814
        %v1661 = vunpack.c.h.s8.bf16 %v815
        %v1662 = vunpack.c.h.s8.bf16 %v816
        %v1663 = vunpack.c.h.s8.bf16 %v817
        %v1664 = vunpack.c.h.s8.bf16 %v818
        %v1665 = vunpack.c.h.s8.bf16 %v819
        %v1666 = vunpack.c.h.s8.bf16 %v820
        %v1667 = vunpack.c.h.s8.bf16 %v821
        %v1668 = vunpack.c.h.s8.bf16 %v822
        %v1669 = vunpack.c.h.s8.bf16 %v823
        %v1670 = vunpack.c.h.s8.bf16 %v824
        %v1671 = vunpack.c.h.s8.bf16 %v825
        %v1672 = vunpack.c.h.s8.bf16 %v826
        %v1673 = vunpack.c.h.s8.bf16 %v827
        %v1674 = vunpack.c.h.s8.bf16 %v828
        %v1675 = vunpack.c.h.s8.bf16 %v829
        %v1676 = vunpack.c.h.s8.bf16 %v830
        %v1677 = vunpack.c.h.s8.bf16 %v831
        %v1678 = vunpack.c.l.s8.bf16 %v832
        %v1679 = vunpack.c.l.s8.bf16 %v833
        %v1680 = vunpack.c.l.s8.bf16 %v834
        %v1681 = vunpack.c.l.s8.bf16 %v835
        %v1682 = vunpack.c.l.s8.bf16 %v836
        %v1683 = vunpack.c.l.s8.bf16 %v837
        %v1684 = vunpack.c.l.s8.bf16 %v838
        %v1685 = vunpack.c.l.s8.bf16 %v839
        %v1686 = vunpack.c.l.s8.bf16 %v840
        %v1687 = vunpack.c.l.s8.bf16 %v841
        %v1688 = vunpack.c.l.s8.bf16 %v842
        %v1689 = vunpack.c.l.s8.bf16 %v843
        %v1690 = vunpack.c.l.s8.bf16 %v844
        %v1691 = vunpack.c.l.s8.bf16 %v845
        %v1692 = vunpack.c.l.s8.bf16 %v846
        %v1693 = vunpack.c.l.s8.bf16 %v847
        %v1694 = vunpack.c.l.s8.bf16 %v848
        %v1695 = vunpack.c.l.s8.bf16 %v849
        %v1696 = vunpack.c.h.s8.bf16 %v832
        %v1697 = vunpack.c.h.s8.bf16 %v833
        %v1698 = vunpack.c.h.s8.bf16 %v834
        %v1699 = vunpack.c.h.s8.bf16 %v835
        %v1700 = vunpack.c.h.s8.bf16 %v836
        %v1701 = vunpack.c.h.s8.bf16 %v837
        %v1702 = vunpack.c.h.s8.bf16 %v838
        %v1703 = vunpack.c.h.s8.bf16 %v839
        %v1704 = vunpack.c.h.s8.bf16 %v840
        %v1705 = vunpack.c.h.s8.bf16 %v841
        %v1706 = vunpack.c.h.s8.bf16 %v842
        %v1707 = vunpack.c.h.s8.bf16 %v843
        %v1708 = vunpack.c.h.s8.bf16 %v844
        %v1709 = vunpack.c.h.s8.bf16 %v845
        %v1710 = vunpack.c.h.s8.bf16 %v846
        %v1711 = vunpack.c.h.s8.bf16 %v847
        %v1712 = vunpack.c.h.s8.bf16 %v848
        %v1713 = vunpack.c.h.s8.bf16 %v849
        %1714 = vmatprep.subr.bf16.mxu0 %v977
        %1715 = vmatpush1.bf16.msra.mxu0 %v976
        %1716 = vmatprep.subr.bf16.mxu0 %v959
        %1717 = vmatpush1.bf16.msra.mxu0 %v958
        %1718 = vmatprep.subr.bf16.mxu0 %v941
        %1719 = vmatpush1.bf16.msra.mxu0 %v940
        %1720 = vmatprep.subr.bf16.mxu0 %v923
        %1721 = vmatpush1.bf16.msra.mxu0 %v922
        %1722 = vmatprep.subr.bf16.mxu0 %v905
        %1723 = vmatpush1.bf16.msra.mxu0 %v904
        %1724 = vmatprep.subr.bf16.mxu0 %v887
        %1725 = vmatpush1.bf16.msra.mxu0 %v886
        %1726 = vmatprep.subr.bf16.mxu0 %v869
        %1727 = vmatpush1.bf16.msra.mxu0 %v868
        %1728 = vmatprep.subr.bf16.mxu0 %v851
        %1729 = vmatpush1.bf16.msra.mxu0 %v850
        %1730 = vmatprep.subr.bf16.mxu0 %v1121
        %1731 = vmatpush2.bf16.msra.mxu0 %v1120
        %1732 = vmatprep.subr.bf16.mxu0 %v1103
        %1733 = vmatpush2.bf16.msra.mxu0 %v1102
        %1734 = vmatprep.subr.bf16.mxu0 %v1085
        %1735 = vmatpush2.bf16.msra.mxu0 %v1084
        %1736 = vmatprep.subr.bf16.mxu0 %v1067
        %1737 = vmatpush2.bf16.msra.mxu0 %v1066
        %1738 = vmatprep.subr.bf16.mxu0 %v1049
        %1739 = vmatpush2.bf16.msra.mxu0 %v1048
        %1740 = vmatprep.subr.bf16.mxu0 %v1031
        %1741 = vmatpush2.bf16.msra.mxu0 %v1030
        %1742 = vmatprep.subr.bf16.mxu0 %v1013
        %1743 = vmatpush2.bf16.msra.mxu0 %v1012
        %1744 = vmatprep.subr.bf16.mxu0 %v995
        %1745 = vmatpush2.bf16.msra.mxu0 %v994
        %1746 = vmatprep.mubr.bf16.mxu0 %v413
        %1747 = vmatmul.mubr.bf16.gmra.mxu0 %v412
        %v1748 = vpop.f32.mrf.mxu0
        %v1749 = vadd.f32 0.0, %v1748
        %v1750 = vpop.f32.mrf.mxu0
        %v1751 = vadd.f32 0.0, %v1750
        %v1752 = vpop.f32.mrf.mxu0
        %v1753 = vpop.f32.mrf.mxu0
        %1754 = vdwg.mxu0
        %1755 = vmatprep.subr.bf16.mxu0 %v1265
        %1756 = vmatpush1.bf16.msra.mxu0 %v1264
        %1757 = vmatprep.subr.bf16.mxu0 %v1247
        %1758 = vmatpush1.bf16.msra.mxu0 %v1246
        %1759 = vmatprep.subr.bf16.mxu0 %v1229
        %1760 = vmatpush1.bf16.msra.mxu0 %v1228
        %1761 = vmatprep.subr.bf16.mxu0 %v1211
        %1762 = vmatpush1.bf16.msra.mxu0 %v1210
        %1763 = vmatprep.subr.bf16.mxu0 %v1193
        %1764 = vmatpush1.bf16.msra.mxu0 %v1192
        %1765 = vmatprep.subr.bf16.mxu0 %v1175
        %1766 = vmatpush1.bf16.msra.mxu0 %v1174
        %1767 = vmatprep.subr.bf16.mxu0 %v1157
        %1768 = vmatpush1.bf16.msra.mxu0 %v1156
        %1769 = vmatprep.subr.bf16.mxu0 %v1139
        %1770 = vmatpush1.bf16.msra.mxu0 %v1138
        %1771 = vmatprep.subr.bf16.mxu0 %v1409
        %1772 = vmatpush2.bf16.msra.mxu0 %v1408
        %1773 = vmatprep.subr.bf16.mxu0 %v1391
        %1774 = vmatpush2.bf16.msra.mxu0 %v1390
        %1775 = vmatprep.subr.bf16.mxu0 %v1373
        %1776 = vmatpush2.bf16.msra.mxu0 %v1372
        %1777 = vmatprep.subr.bf16.mxu0 %v1355
        %1778 = vmatpush2.bf16.msra.mxu0 %v1354
        %1779 = vmatprep.subr.bf16.mxu0 %v1337
        %1780 = vmatpush2.bf16.msra.mxu0 %v1336
        %1781 = vmatprep.subr.bf16.mxu0 %v1319
        %1782 = vmatpush2.bf16.msra.mxu0 %v1318
        %1783 = vmatprep.subr.bf16.mxu0 %v1301
        %1784 = vmatpush2.bf16.msra.mxu0 %v1300
        %1785 = vmatprep.subr.bf16.mxu0 %v1283
        %1786 = vmatpush2.bf16.msra.mxu0 %v1282
        %1787 = vmatprep.mubr.bf16.mxu0 %v415
        %1788 = vmatmul.mubr.bf16.gmra.mxu0 %v414
        %v1789 = vpop.f32.mrf.mxu0
        %v1790 = vadd.f32 %v1749, %v1789
        %v1791 = vpop.f32.mrf.mxu0
        %v1792 = vadd.f32 %v1751, %v1791
        %v1793 = vpop.f32.mrf.mxu0
        %v1794 = vpop.f32.mrf.mxu0
        %1795 = vdwg.mxu0
        %1796 = vmatprep.subr.bf16.mxu0 %v1553
        %1797 = vmatpush1.bf16.msra.mxu0 %v1552
        %1798 = vmatprep.subr.bf16.mxu0 %v1535
        %1799 = vmatpush1.bf16.msra.mxu0 %v1534
        %1800 = vmatprep.subr.bf16.mxu0 %v1517
        %1801 = vmatpush1.bf16.msra.mxu0 %v1516
        %1802 = vmatprep.subr.bf16.mxu0 %v1499
        %1803 = vmatpush1.bf16.msra.mxu0 %v1498
        %1804 = vmatprep.subr.bf16.mxu0 %v1481
        %1805 = vmatpush1.bf16.msra.mxu0 %v1480
        %1806 = vmatprep.subr.bf16.mxu0 %v1463
        %1807 = vmatpush1.bf16.msra.mxu0 %v1462
        %1808 = vmatprep.subr.bf16.mxu0 %v1445
        %1809 = vmatpush1.bf16.msra.mxu0 %v1444
        %1810 = vmatprep.subr.bf16.mxu0 %v1427
        %1811 = vmatpush1.bf16.msra.mxu0 %v1426
        %1812 = vmatprep.subr.bf16.mxu0 %v1697
        %1813 = vmatpush2.bf16.msra.mxu0 %v1696
        %1814 = vmatprep.subr.bf16.mxu0 %v1679
        %1815 = vmatpush2.bf16.msra.mxu0 %v1678
        %1816 = vmatprep.subr.bf16.mxu0 %v1661
        %1817 = vmatpush2.bf16.msra.mxu0 %v1660
        %1818 = vmatprep.subr.bf16.mxu0 %v1643
        %1819 = vmatpush2.bf16.msra.mxu0 %v1642
        %1820 = vmatprep.subr.bf16.mxu0 %v1625
        %1821 = vmatpush2.bf16.msra.mxu0 %v1624
        %1822 = vmatprep.subr.bf16.mxu0 %v1607
        %1823 = vmatpush2.bf16.msra.mxu0 %v1606
        %1824 = vmatprep.subr.bf16.mxu0 %v1589
        %1825 = vmatpush2.bf16.msra.mxu0 %v1588
        %1826 = vmatprep.subr.bf16.mxu0 %v1571
        %1827 = vmatpush2.bf16.msra.mxu0 %v1570
        %1828 = vmatprep.mubr.bf16.mxu0 %v417
        %1829 = vmatmul.mubr.bf16.gmra.mxu0 %v416
        %v1830 = vpop.f32.mrf.mxu0
        %v1831 = vadd.f32 %v1790, %v1830
        %v1832 = vpop.f32.mrf.mxu0
        %v1833 = vadd.f32 %v1792, %v1832
        %v1834 = vpop.f32.mrf.mxu0
        %v1835 = vpop.f32.mrf.mxu0
        %1836 = vdwg.mxu0
        %1837 = vmatprep.subr.bf16.mxu0 %v979
        %1838 = vmatpush1.bf16.msra.mxu0 %v978
        %1839 = vmatprep.subr.bf16.mxu0 %v961
        %1840 = vmatpush1.bf16.msra.mxu0 %v960
        %1841 = vmatprep.subr.bf16.mxu0 %v943
        %1842 = vmatpush1.bf16.msra.mxu0 %v942
        %1843 = vmatprep.subr.bf16.mxu0 %v925
        %1844 = vmatpush1.bf16.msra.mxu0 %v924
        %1845 = vmatprep.subr.bf16.mxu0 %v907
        %1846 = vmatpush1.bf16.msra.mxu0 %v906
        %1847 = vmatprep.subr.bf16.mxu0 %v889
        %1848 = vmatpush1.bf16.msra.mxu0 %v888
        %1849 = vmatprep.subr.bf16.mxu0 %v871
        %1850 = vmatpush1.bf16.msra.mxu0 %v870
        %1851 = vmatprep.subr.bf16.mxu0 %v853
        %1852 = vmatpush1.bf16.msra.mxu0 %v852
        %1853 = vmatprep.subr.bf16.mxu0 %v1123
        %1854 = vmatpush2.bf16.msra.mxu0 %v1122
        %1855 = vmatprep.subr.bf16.mxu0 %v1105
        %1856 = vmatpush2.bf16.msra.mxu0 %v1104
        %1857 = vmatprep.subr.bf16.mxu0 %v1087
        %1858 = vmatpush2.bf16.msra.mxu0 %v1086
        %1859 = vmatprep.subr.bf16.mxu0 %v1069
        %1860 = vmatpush2.bf16.msra.mxu0 %v1068
        %1861 = vmatprep.subr.bf16.mxu0 %v1051
        %1862 = vmatpush2.bf16.msra.mxu0 %v1050
        %1863 = vmatprep.subr.bf16.mxu0 %v1033
        %1864 = vmatpush2.bf16.msra.mxu0 %v1032
        %1865 = vmatprep.subr.bf16.mxu0 %v1015
        %1866 = vmatpush2.bf16.msra.mxu0 %v1014
        %1867 = vmatprep.subr.bf16.mxu0 %v997
        %1868 = vmatpush2.bf16.msra.mxu0 %v996
        %1869 = vmatprep.mubr.bf16.mxu0 %v413
        %1870 = vmatmul.mubr.bf16.gmra.mxu0 %v412
        %v1871 = vpop.f32.mrf.mxu0
        %v1872 = vadd.f32 0.0, %v1871
        %v1873 = vpop.f32.mrf.mxu0
        %v1874 = vadd.f32 0.0, %v1873
        %v1875 = vpop.f32.mrf.mxu0
        %v1876 = vpop.f32.mrf.mxu0
        %1877 = vdwg.mxu0
        %1878 = vmatprep.subr.bf16.mxu0 %v1267
        %1879 = vmatpush1.bf16.msra.mxu0 %v1266
        %1880 = vmatprep.subr.bf16.mxu0 %v1249
        %1881 = vmatpush1.bf16.msra.mxu0 %v1248
        %1882 = vmatprep.subr.bf16.mxu0 %v1231
        %1883 = vmatpush1.bf16.msra.mxu0 %v1230
        %1884 = vmatprep.subr.bf16.mxu0 %v1213
        %1885 = vmatpush1.bf16.msra.mxu0 %v1212
        %1886 = vmatprep.subr.bf16.mxu0 %v1195
        %1887 = vmatpush1.bf16.msra.mxu0 %v1194
        %1888 = vmatprep.subr.bf16.mxu0 %v1177
        %1889 = vmatpush1.bf16.msra.mxu0 %v1176
        %1890 = vmatprep.subr.bf16.mxu0 %v1159
        %1891 = vmatpush1.bf16.msra.mxu0 %v1158
        %1892 = vmatprep.subr.bf16.mxu0 %v1141
        %1893 = vmatpush1.bf16.msra.mxu0 %v1140
        %1894 = vmatprep.subr.bf16.mxu0 %v1411
        %1895 = vmatpush2.bf16.msra.mxu0 %v1410
        %1896 = vmatprep.subr.bf16.mxu0 %v1393
        %1897 = vmatpush2.bf16.msra.mxu0 %v1392
        %1898 = vmatprep.subr.bf16.mxu0 %v1375
        %1899 = vmatpush2.bf16.msra.mxu0 %v1374
        %1900 = vmatprep.subr.bf16.mxu0 %v1357
        %1901 = vmatpush2.bf16.msra.mxu0 %v1356
        %1902 = vmatprep.subr.bf16.mxu0 %v1339
        %1903 = vmatpush2.bf16.msra.mxu0 %v1338
        %1904 = vmatprep.subr.bf16.mxu0 %v1321
        %1905 = vmatpush2.bf16.msra.mxu0 %v1320
        %1906 = vmatprep.subr.bf16.mxu0 %v1303
        %1907 = vmatpush2.bf16.msra.mxu0 %v1302
        %1908 = vmatprep.subr.bf16.mxu0 %v1285
        %1909 = vmatpush2.bf16.msra.mxu0 %v1284
        %1910 = vmatprep.mubr.bf16.mxu0 %v415
        %1911 = vmatmul.mubr.bf16.gmra.mxu0 %v414
        %v1912 = vpop.f32.mrf.mxu0
        %v1913 = vadd.f32 %v1872, %v1912
        %v1914 = vpop.f32.mrf.mxu0
        %v1915 = vadd.f32 %v1874, %v1914
        %v1916 = vpop.f32.mrf.mxu0
        %v1917 = vpop.f32.mrf.mxu0
        %1918 = vdwg.mxu0
        %1919 = vmatprep.subr.bf16.mxu0 %v1555
        %1920 = vmatpush1.bf16.msra.mxu0 %v1554
        %1921 = vmatprep.subr.bf16.mxu0 %v1537
        %1922 = vmatpush1.bf16.msra.mxu0 %v1536
        %1923 = vmatprep.subr.bf16.mxu0 %v1519
        %1924 = vmatpush1.bf16.msra.mxu0 %v1518
        %1925 = vmatprep.subr.bf16.mxu0 %v1501
        %1926 = vmatpush1.bf16.msra.mxu0 %v1500
        %1927 = vmatprep.subr.bf16.mxu0 %v1483
        %1928 = vmatpush1.bf16.msra.mxu0 %v1482
        %1929 = vmatprep.subr.bf16.mxu0 %v1465
        %1930 = vmatpush1.bf16.msra.mxu0 %v1464
        %1931 = vmatprep.subr.bf16.mxu0 %v1447
        %1932 = vmatpush1.bf16.msra.mxu0 %v1446
        %1933 = vmatprep.subr.bf16.mxu0 %v1429
        %1934 = vmatpush1.bf16.msra.mxu0 %v1428
        %1935 = vmatprep.subr.bf16.mxu0 %v1699
        %1936 = vmatpush2.bf16.msra.mxu0 %v1698
        %1937 = vmatprep.subr.bf16.mxu0 %v1681
        %1938 = vmatpush2.bf16.msra.mxu0 %v1680
        %1939 = vmatprep.subr.bf16.mxu0 %v1663
        %1940 = vmatpush2.bf16.msra.mxu0 %v1662
        %1941 = vmatprep.subr.bf16.mxu0 %v1645
        %1942 = vmatpush2.bf16.msra.mxu0 %v1644
        %1943 = vmatprep.subr.bf16.mxu0 %v1627
        %1944 = vmatpush2.bf16.msra.mxu0 %v1626
        %1945 = vmatprep.subr.bf16.mxu0 %v1609
        %1946 = vmatpush2.bf16.msra.mxu0 %v1608
        %1947 = vmatprep.subr.bf16.mxu0 %v1591
        %1948 = vmatpush2.bf16.msra.mxu0 %v1590
        %1949 = vmatprep.subr.bf16.mxu0 %v1573
        %1950 = vmatpush2.bf16.msra.mxu0 %v1572
        %1951 = vmatprep.mubr.bf16.mxu0 %v417
        %1952 = vmatmul.mubr.bf16.gmra.mxu0 %v416
        %v1953 = vpop.f32.mrf.mxu0
        %v1954 = vadd.f32 %v1913, %v1953
        %v1955 = vpop.f32.mrf.mxu0
        %v1956 = vadd.f32 %v1915, %v1955
        %v1957 = vpop.f32.mrf.mxu0
        %v1958 = vpop.f32.mrf.mxu0
        %1959 = vdwg.mxu0
        %1960 = vmatprep.subr.bf16.mxu0 %v981
        %1961 = vmatpush1.bf16.msra.mxu0 %v980
        %1962 = vmatprep.subr.bf16.mxu0 %v963
        %1963 = vmatpush1.bf16.msra.mxu0 %v962
        %1964 = vmatprep.subr.bf16.mxu0 %v945
        %1965 = vmatpush1.bf16.msra.mxu0 %v944
        %1966 = vmatprep.subr.bf16.mxu0 %v927
        %1967 = vmatpush1.bf16.msra.mxu0 %v926
        %1968 = vmatprep.subr.bf16.mxu0 %v909
        %1969 = vmatpush1.bf16.msra.mxu0 %v908
        %1970 = vmatprep.subr.bf16.mxu0 %v891
        %1971 = vmatpush1.bf16.msra.mxu0 %v890
        %1972 = vmatprep.subr.bf16.mxu0 %v873
        %1973 = vmatpush1.bf16.msra.mxu0 %v872
        %1974 = vmatprep.subr.bf16.mxu0 %v855
        %1975 = vmatpush1.bf16.msra.mxu0 %v854
        %1976 = vmatprep.subr.bf16.mxu0 %v1125
        %1977 = vmatpush2.bf16.msra.mxu0 %v1124
        %1978 = vmatprep.subr.bf16.mxu0 %v1107
        %1979 = vmatpush2.bf16.msra.mxu0 %v1106
        %1980 = vmatprep.subr.bf16.mxu0 %v1089
        %1981 = vmatpush2.bf16.msra.mxu0 %v1088
        %1982 = vmatprep.subr.bf16.mxu0 %v1071
        %1983 = vmatpush2.bf16.msra.mxu0 %v1070
        %1984 = vmatprep.subr.bf16.mxu0 %v1053
        %1985 = vmatpush2.bf16.msra.mxu0 %v1052
        %1986 = vmatprep.subr.bf16.mxu0 %v1035
        %1987 = vmatpush2.bf16.msra.mxu0 %v1034
        %1988 = vmatprep.subr.bf16.mxu0 %v1017
        %1989 = vmatpush2.bf16.msra.mxu0 %v1016
        %1990 = vmatprep.subr.bf16.mxu0 %v999
        %1991 = vmatpush2.bf16.msra.mxu0 %v998
        %1992 = vmatprep.mubr.bf16.mxu0 %v413
        %1993 = vmatmul.mubr.bf16.gmra.mxu0 %v412
        %v1994 = vpop.f32.mrf.mxu0
        %v1995 = vadd.f32 0.0, %v1994
        %v1996 = vpop.f32.mrf.mxu0
        %v1997 = vadd.f32 0.0, %v1996
        %v1998 = vpop.f32.mrf.mxu0
        %v1999 = vpop.f32.mrf.mxu0
        %2000 = vdwg.mxu0
        %2001 = vmatprep.subr.bf16.mxu0 %v1269
        %2002 = vmatpush1.bf16.msra.mxu0 %v1268
        %2003 = vmatprep.subr.bf16.mxu0 %v1251
        %2004 = vmatpush1.bf16.msra.mxu0 %v1250
        %2005 = vmatprep.subr.bf16.mxu0 %v1233
        %2006 = vmatpush1.bf16.msra.mxu0 %v1232
        %2007 = vmatprep.subr.bf16.mxu0 %v1215
        %2008 = vmatpush1.bf16.msra.mxu0 %v1214
        %2009 = vmatprep.subr.bf16.mxu0 %v1197
        %2010 = vmatpush1.bf16.msra.mxu0 %v1196
        %2011 = vmatprep.subr.bf16.mxu0 %v1179
        %2012 = vmatpush1.bf16.msra.mxu0 %v1178
        %2013 = vmatprep.subr.bf16.mxu0 %v1161
        %2014 = vmatpush1.bf16.msra.mxu0 %v1160
        %2015 = vmatprep.subr.bf16.mxu0 %v1143
        %2016 = vmatpush1.bf16.msra.mxu0 %v1142
        %2017 = vmatprep.subr.bf16.mxu0 %v1413
        %2018 = vmatpush2.bf16.msra.mxu0 %v1412
        %2019 = vmatprep.subr.bf16.mxu0 %v1395
        %2020 = vmatpush2.bf16.msra.mxu0 %v1394
        %2021 = vmatprep.subr.bf16.mxu0 %v1377
        %2022 = vmatpush2.bf16.msra.mxu0 %v1376
        %2023 = vmatprep.subr.bf16.mxu0 %v1359
        %2024 = vmatpush2.bf16.msra.mxu0 %v1358
        %2025 = vmatprep.subr.bf16.mxu0 %v1341
        %2026 = vmatpush2.bf16.msra.mxu0 %v1340
        %2027 = vmatprep.subr.bf16.mxu0 %v1323
        %2028 = vmatpush2.bf16.msra.mxu0 %v1322
        %2029 = vmatprep.subr.bf16.mxu0 %v1305
        %2030 = vmatpush2.bf16.msra.mxu0 %v1304
        %2031 = vmatprep.subr.bf16.mxu0 %v1287
        %2032 = vmatpush2.bf16.msra.mxu0 %v1286
        %2033 = vmatprep.mubr.bf16.mxu0 %v415
        %2034 = vmatmul.mubr.bf16.gmra.mxu0 %v414
        %v2035 = vpop.f32.mrf.mxu0
        %v2036 = vadd.f32 %v1995, %v2035
        %v2037 = vpop.f32.mrf.mxu0
        %v2038 = vadd.f32 %v1997, %v2037
        %v2039 = vpop.f32.mrf.mxu0
        %v2040 = vpop.f32.mrf.mxu0
        %2041 = vdwg.mxu0
        %2042 = vmatprep.subr.bf16.mxu0 %v1557
        %2043 = vmatpush1.bf16.msra.mxu0 %v1556
        %2044 = vmatprep.subr.bf16.mxu0 %v1539
        %2045 = vmatpush1.bf16.msra.mxu0 %v1538
        %2046 = vmatprep.subr.bf16.mxu0 %v1521
        %2047 = vmatpush1.bf16.msra.mxu0 %v1520
        %2048 = vmatprep.subr.bf16.mxu0 %v1503
        %2049 = vmatpush1.bf16.msra.mxu0 %v1502
        %2050 = vmatprep.subr.bf16.mxu0 %v1485
        %2051 = vmatpush1.bf16.msra.mxu0 %v1484
        %2052 = vmatprep.subr.bf16.mxu0 %v1467
        %2053 = vmatpush1.bf16.msra.mxu0 %v1466
        %2054 = vmatprep.subr.bf16.mxu0 %v1449
        %2055 = vmatpush1.bf16.msra.mxu0 %v1448
        %2056 = vmatprep.subr.bf16.mxu0 %v1431
        %2057 = vmatpush1.bf16.msra.mxu0 %v1430
        %2058 = vmatprep.subr.bf16.mxu0 %v1701
        %2059 = vmatpush2.bf16.msra.mxu0 %v1700
        %2060 = vmatprep.subr.bf16.mxu0 %v1683
        %2061 = vmatpush2.bf16.msra.mxu0 %v1682
        %2062 = vmatprep.subr.bf16.mxu0 %v1665
        %2063 = vmatpush2.bf16.msra.mxu0 %v1664
        %2064 = vmatprep.subr.bf16.mxu0 %v1647
        %2065 = vmatpush2.bf16.msra.mxu0 %v1646
        %2066 = vmatprep.subr.bf16.mxu0 %v1629
        %2067 = vmatpush2.bf16.msra.mxu0 %v1628
        %2068 = vmatprep.subr.bf16.mxu0 %v1611
        %2069 = vmatpush2.bf16.msra.mxu0 %v1610
        %2070 = vmatprep.subr.bf16.mxu0 %v1593
        %2071 = vmatpush2.bf16.msra.mxu0 %v1592
        %2072 = vmatprep.subr.bf16.mxu0 %v1575
        %2073 = vmatpush2.bf16.msra.mxu0 %v1574
        %2074 = vmatprep.mubr.bf16.mxu0 %v417
        %2075 = vmatmul.mubr.bf16.gmra.mxu0 %v416
        %v2076 = vpop.f32.mrf.mxu0
        %v2077 = vadd.f32 %v2036, %v2076
        %v2078 = vpop.f32.mrf.mxu0
        %v2079 = vadd.f32 %v2038, %v2078
        %v2080 = vpop.f32.mrf.mxu0
        %v2081 = vpop.f32.mrf.mxu0
        %2082 = vdwg.mxu0
        %2083 = vmatprep.subr.bf16.mxu0 %v983
        %2084 = vmatpush1.bf16.msra.mxu0 %v982
        %2085 = vmatprep.subr.bf16.mxu0 %v965
        %2086 = vmatpush1.bf16.msra.mxu0 %v964
        %2087 = vmatprep.subr.bf16.mxu0 %v947
        %2088 = vmatpush1.bf16.msra.mxu0 %v946
        %2089 = vmatprep.subr.bf16.mxu0 %v929
        %2090 = vmatpush1.bf16.msra.mxu0 %v928
        %2091 = vmatprep.subr.bf16.mxu0 %v911
        %2092 = vmatpush1.bf16.msra.mxu0 %v910
        %2093 = vmatprep.subr.bf16.mxu0 %v893
        %2094 = vmatpush1.bf16.msra.mxu0 %v892
        %2095 = vmatprep.subr.bf16.mxu0 %v875
        %2096 = vmatpush1.bf16.msra.mxu0 %v874
        %2097 = vmatprep.subr.bf16.mxu0 %v857
        %2098 = vmatpush1.bf16.msra.mxu0 %v856
        %2099 = vmatprep.subr.bf16.mxu0 %v1127
        %2100 = vmatpush2.bf16.msra.mxu0 %v1126
        %2101 = vmatprep.subr.bf16.mxu0 %v1109
        %2102 = vmatpush2.bf16.msra.mxu0 %v1108
        %2103 = vmatprep.subr.bf16.mxu0 %v1091
        %2104 = vmatpush2.bf16.msra.mxu0 %v1090
        %2105 = vmatprep.subr.bf16.mxu0 %v1073
        %2106 = vmatpush2.bf16.msra.mxu0 %v1072
        %2107 = vmatprep.subr.bf16.mxu0 %v1055
        %2108 = vmatpush2.bf16.msra.mxu0 %v1054
        %2109 = vmatprep.subr.bf16.mxu0 %v1037
        %2110 = vmatpush2.bf16.msra.mxu0 %v1036
        %2111 = vmatprep.subr.bf16.mxu0 %v1019
        %2112 = vmatpush2.bf16.msra.mxu0 %v1018
        %2113 = vmatprep.subr.bf16.mxu0 %v1001
        %2114 = vmatpush2.bf16.msra.mxu0 %v1000
        %2115 = vmatprep.mubr.bf16.mxu0 %v413
        %2116 = vmatmul.mubr.bf16.gmra.mxu0 %v412
        %v2117 = vpop.f32.mrf.mxu0
        %v2118 = vadd.f32 0.0, %v2117
        %v2119 = vpop.f32.mrf.mxu0
        %v2120 = vadd.f32 0.0, %v2119
        %v2121 = vpop.f32.mrf.mxu0
        %v2122 = vpop.f32.mrf.mxu0
        %2123 = vdwg.mxu0
        %2124 = vmatprep.subr.bf16.mxu0 %v1271
        %2125 = vmatpush1.bf16.msra.mxu0 %v1270
        %2126 = vmatprep.subr.bf16.mxu0 %v1253
        %2127 = vmatpush1.bf16.msra.mxu0 %v1252
        %2128 = vmatprep.subr.bf16.mxu0 %v1235
        %2129 = vmatpush1.bf16.msra.mxu0 %v1234
        %2130 = vmatprep.subr.bf16.mxu0 %v1217
        %2131 = vmatpush1.bf16.msra.mxu0 %v1216
        %2132 = vmatprep.subr.bf16.mxu0 %v1199
        %2133 = vmatpush1.bf16.msra.mxu0 %v1198
        %2134 = vmatprep.subr.bf16.mxu0 %v1181
        %2135 = vmatpush1.bf16.msra.mxu0 %v1180
        %2136 = vmatprep.subr.bf16.mxu0 %v1163
        %2137 = vmatpush1.bf16.msra.mxu0 %v1162
        %2138 = vmatprep.subr.bf16.mxu0 %v1145
        %2139 = vmatpush1.bf16.msra.mxu0 %v1144
        %2140 = vmatprep.subr.bf16.mxu0 %v1415
        %2141 = vmatpush2.bf16.msra.mxu0 %v1414
        %2142 = vmatprep.subr.bf16.mxu0 %v1397
        %2143 = vmatpush2.bf16.msra.mxu0 %v1396
        %2144 = vmatprep.subr.bf16.mxu0 %v1379
        %2145 = vmatpush2.bf16.msra.mxu0 %v1378
        %2146 = vmatprep.subr.bf16.mxu0 %v1361
        %2147 = vmatpush2.bf16.msra.mxu0 %v1360
        %2148 = vmatprep.subr.bf16.mxu0 %v1343
        %2149 = vmatpush2.bf16.msra.mxu0 %v1342
        %2150 = vmatprep.subr.bf16.mxu0 %v1325
        %2151 = vmatpush2.bf16.msra.mxu0 %v1324
        %2152 = vmatprep.subr.bf16.mxu0 %v1307
        %2153 = vmatpush2.bf16.msra.mxu0 %v1306
        %2154 = vmatprep.subr.bf16.mxu0 %v1289
        %2155 = vmatpush2.bf16.msra.mxu0 %v1288
        %2156 = vmatprep.mubr.bf16.mxu0 %v415
        %2157 = vmatmul.mubr.bf16.gmra.mxu0 %v414
        %v2158 = vpop.f32.mrf.mxu0
        %v2159 = vadd.f32 %v2118, %v2158
        %v2160 = vpop.f32.mrf.mxu0
        %v2161 = vadd.f32 %v2120, %v2160
        %v2162 = vpop.f32.mrf.mxu0
        %v2163 = vpop.f32.mrf.mxu0
        %2164 = vdwg.mxu0
        %2165 = vmatprep.subr.bf16.mxu0 %v1559
        %2166 = vmatpush1.bf16.msra.mxu0 %v1558
        %2167 = vmatprep.subr.bf16.mxu0 %v1541
        %2168 = vmatpush1.bf16.msra.mxu0 %v1540
        %2169 = vmatprep.subr.bf16.mxu0 %v1523
        %2170 = vmatpush1.bf16.msra.mxu0 %v1522
        %2171 = vmatprep.subr.bf16.mxu0 %v1505
        %2172 = vmatpush1.bf16.msra.mxu0 %v1504
        %2173 = vmatprep.subr.bf16.mxu0 %v1487
        %2174 = vmatpush1.bf16.msra.mxu0 %v1486
        %2175 = vmatprep.subr.bf16.mxu0 %v1469
        %2176 = vmatpush1.bf16.msra.mxu0 %v1468
        %2177 = vmatprep.subr.bf16.mxu0 %v1451
        %2178 = vmatpush1.bf16.msra.mxu0 %v1450
        %2179 = vmatprep.subr.bf16.mxu0 %v1433
        %2180 = vmatpush1.bf16.msra.mxu0 %v1432
        %2181 = vmatprep.subr.bf16.mxu0 %v1703
        %2182 = vmatpush2.bf16.msra.mxu0 %v1702
        %2183 = vmatprep.subr.bf16.mxu0 %v1685
        %2184 = vmatpush2.bf16.msra.mxu0 %v1684
        %2185 = vmatprep.subr.bf16.mxu0 %v1667
        %2186 = vmatpush2.bf16.msra.mxu0 %v1666
        %2187 = vmatprep.subr.bf16.mxu0 %v1649
        %2188 = vmatpush2.bf16.msra.mxu0 %v1648
        %2189 = vmatprep.subr.bf16.mxu0 %v1631
        %2190 = vmatpush2.bf16.msra.mxu0 %v1630
        %2191 = vmatprep.subr.bf16.mxu0 %v1613
        %2192 = vmatpush2.bf16.msra.mxu0 %v1612
        %2193 = vmatprep.subr.bf16.mxu0 %v1595
        %2194 = vmatpush2.bf16.msra.mxu0 %v1594
        %2195 = vmatprep.subr.bf16.mxu0 %v1577
        %2196 = vmatpush2.bf16.msra.mxu0 %v1576
        %2197 = vmatprep.mubr.bf16.mxu0 %v417
        %2198 = vmatmul.mubr.bf16.gmra.mxu0 %v416
        %v2199 = vpop.f32.mrf.mxu0
        %v2200 = vadd.f32 %v2159, %v2199
        %v2201 = vpop.f32.mrf.mxu0
        %v2202 = vadd.f32 %v2161, %v2201
        %v2203 = vpop.f32.mrf.mxu0
        %v2204 = vpop.f32.mrf.mxu0
        %2205 = vdwg.mxu0
        %2206 = vmatprep.subr.bf16.mxu0 %v985
        %2207 = vmatpush1.bf16.msra.mxu0 %v984
        %2208 = vmatprep.subr.bf16.mxu0 %v967
        %2209 = vmatpush1.bf16.msra.mxu0 %v966
        %2210 = vmatprep.subr.bf16.mxu0 %v949
        %2211 = vmatpush1.bf16.msra.mxu0 %v948
        %2212 = vmatprep.subr.bf16.mxu0 %v931
        %2213 = vmatpush1.bf16.msra.mxu0 %v930
        %2214 = vmatprep.subr.bf16.mxu0 %v913
        %2215 = vmatpush1.bf16.msra.mxu0 %v912
        %2216 = vmatprep.subr.bf16.mxu0 %v895
        %2217 = vmatpush1.bf16.msra.mxu0 %v894
        %2218 = vmatprep.subr.bf16.mxu0 %v877
        %2219 = vmatpush1.bf16.msra.mxu0 %v876
        %2220 = vmatprep.subr.bf16.mxu0 %v859
        %2221 = vmatpush1.bf16.msra.mxu0 %v858
        %2222 = vmatprep.subr.bf16.mxu0 %v1129
        %2223 = vmatpush2.bf16.msra.mxu0 %v1128
        %2224 = vmatprep.subr.bf16.mxu0 %v1111
        %2225 = vmatpush2.bf16.msra.mxu0 %v1110
        %2226 = vmatprep.subr.bf16.mxu0 %v1093
        %2227 = vmatpush2.bf16.msra.mxu0 %v1092
        %2228 = vmatprep.subr.bf16.mxu0 %v1075
        %2229 = vmatpush2.bf16.msra.mxu0 %v1074
        %2230 = vmatprep.subr.bf16.mxu0 %v1057
        %2231 = vmatpush2.bf16.msra.mxu0 %v1056
        %2232 = vmatprep.subr.bf16.mxu0 %v1039
        %2233 = vmatpush2.bf16.msra.mxu0 %v1038
        %2234 = vmatprep.subr.bf16.mxu0 %v1021
        %2235 = vmatpush2.bf16.msra.mxu0 %v1020
        %2236 = vmatprep.subr.bf16.mxu0 %v1003
        %2237 = vmatpush2.bf16.msra.mxu0 %v1002
        %2238 = vmatprep.mubr.bf16.mxu0 %v413
        %2239 = vmatmul.mubr.bf16.gmra.mxu0 %v412
        %v2240 = vpop.f32.mrf.mxu0
        %v2241 = vadd.f32 0.0, %v2240
        %v2242 = vpop.f32.mrf.mxu0
        %v2243 = vadd.f32 0.0, %v2242
        %v2244 = vpop.f32.mrf.mxu0
        %v2245 = vpop.f32.mrf.mxu0
        %2246 = vdwg.mxu0
        %2247 = vmatprep.subr.bf16.mxu0 %v1273
        %2248 = vmatpush1.bf16.msra.mxu0 %v1272
        %2249 = vmatprep.subr.bf16.mxu0 %v1255
        %2250 = vmatpush1.bf16.msra.mxu0 %v1254
        %2251 = vmatprep.subr.bf16.mxu0 %v1237
        %2252 = vmatpush1.bf16.msra.mxu0 %v1236
        %2253 = vmatprep.subr.bf16.mxu0 %v1219
        %2254 = vmatpush1.bf16.msra.mxu0 %v1218
        %2255 = vmatprep.subr.bf16.mxu0 %v1201
        %2256 = vmatpush1.bf16.msra.mxu0 %v1200
        %2257 = vmatprep.subr.bf16.mxu0 %v1183
        %2258 = vmatpush1.bf16.msra.mxu0 %v1182
        %2259 = vmatprep.subr.bf16.mxu0 %v1165
        %2260 = vmatpush1.bf16.msra.mxu0 %v1164
        %2261 = vmatprep.subr.bf16.mxu0 %v1147
        %2262 = vmatpush1.bf16.msra.mxu0 %v1146
        %2263 = vmatprep.subr.bf16.mxu0 %v1417
        %2264 = vmatpush2.bf16.msra.mxu0 %v1416
        %2265 = vmatprep.subr.bf16.mxu0 %v1399
        %2266 = vmatpush2.bf16.msra.mxu0 %v1398
        %2267 = vmatprep.subr.bf16.mxu0 %v1381
        %2268 = vmatpush2.bf16.msra.mxu0 %v1380
        %2269 = vmatprep.subr.bf16.mxu0 %v1363
        %2270 = vmatpush2.bf16.msra.mxu0 %v1362
        %2271 = vmatprep.subr.bf16.mxu0 %v1345
        %2272 = vmatpush2.bf16.msra.mxu0 %v1344
        %2273 = vmatprep.subr.bf16.mxu0 %v1327
        %2274 = vmatpush2.bf16.msra.mxu0 %v1326
        %2275 = vmatprep.subr.bf16.mxu0 %v1309
        %2276 = vmatpush2.bf16.msra.mxu0 %v1308
        %2277 = vmatprep.subr.bf16.mxu0 %v1291
        %2278 = vmatpush2.bf16.msra.mxu0 %v1290
        %2279 = vmatprep.mubr.bf16.mxu0 %v415
        %2280 = vmatmul.mubr.bf16.gmra.mxu0 %v414
        %v2281 = vpop.f32.mrf.mxu0
        %v2282 = vadd.f32 %v2241, %v2281
        %v2283 = vpop.f32.mrf.mxu0
        %v2284 = vadd.f32 %v2243, %v2283
        %v2285 = vpop.f32.mrf.mxu0
        %v2286 = vpop.f32.mrf.mxu0
        %2287 = vdwg.mxu0
        %2288 = vmatprep.subr.bf16.mxu0 %v1561
        %2289 = vmatpush1.bf16.msra.mxu0 %v1560
        %2290 = vmatprep.subr.bf16.mxu0 %v1543
        %2291 = vmatpush1.bf16.msra.mxu0 %v1542
        %2292 = vmatprep.subr.bf16.mxu0 %v1525
        %2293 = vmatpush1.bf16.msra.mxu0 %v1524
        %2294 = vmatprep.subr.bf16.mxu0 %v1507
        %2295 = vmatpush1.bf16.msra.mxu0 %v1506
        %2296 = vmatprep.subr.bf16.mxu0 %v1489
        %2297 = vmatpush1.bf16.msra.mxu0 %v1488
        %2298 = vmatprep.subr.bf16.mxu0 %v1471
        %2299 = vmatpush1.bf16.msra.mxu0 %v1470
        %2300 = vmatprep.subr.bf16.mxu0 %v1453
        %2301 = vmatpush1.bf16.msra.mxu0 %v1452
        %2302 = vmatprep.subr.bf16.mxu0 %v1435
        %2303 = vmatpush1.bf16.msra.mxu0 %v1434
        %2304 = vmatprep.subr.bf16.mxu0 %v1705
        %2305 = vmatpush2.bf16.msra.mxu0 %v1704
        %2306 = vmatprep.subr.bf16.mxu0 %v1687
        %2307 = vmatpush2.bf16.msra.mxu0 %v1686
        %2308 = vmatprep.subr.bf16.mxu0 %v1669
        %2309 = vmatpush2.bf16.msra.mxu0 %v1668
        %2310 = vmatprep.subr.bf16.mxu0 %v1651
        %2311 = vmatpush2.bf16.msra.mxu0 %v1650
        %2312 = vmatprep.subr.bf16.mxu0 %v1633
        %2313 = vmatpush2.bf16.msra.mxu0 %v1632
        %2314 = vmatprep.subr.bf16.mxu0 %v1615
        %2315 = vmatpush2.bf16.msra.mxu0 %v1614
        %2316 = vmatprep.subr.bf16.mxu0 %v1597
        %2317 = vmatpush2.bf16.msra.mxu0 %v1596
        %2318 = vmatprep.subr.bf16.mxu0 %v1579
        %2319 = vmatpush2.bf16.msra.mxu0 %v1578
        %2320 = vmatprep.mubr.bf16.mxu0 %v417
        %2321 = vmatmul.mubr.bf16.gmra.mxu0 %v416
        %v2322 = vpop.f32.mrf.mxu0
        %v2323 = vadd.f32 %v2282, %v2322
        %v2324 = vpop.f32.mrf.mxu0
        %v2325 = vadd.f32 %v2284, %v2324
        %v2326 = vpop.f32.mrf.mxu0
        %v2327 = vpop.f32.mrf.mxu0
        %2328 = vdwg.mxu0
        %2329 = vmatprep.subr.bf16.mxu0 %v987
        %2330 = vmatpush1.bf16.msra.mxu0 %v986
        %2331 = vmatprep.subr.bf16.mxu0 %v969
        %2332 = vmatpush1.bf16.msra.mxu0 %v968
        %2333 = vmatprep.subr.bf16.mxu0 %v951
        %2334 = vmatpush1.bf16.msra.mxu0 %v950
        %2335 = vmatprep.subr.bf16.mxu0 %v933
        %2336 = vmatpush1.bf16.msra.mxu0 %v932
        %2337 = vmatprep.subr.bf16.mxu0 %v915
        %2338 = vmatpush1.bf16.msra.mxu0 %v914
        %2339 = vmatprep.subr.bf16.mxu0 %v897
        %2340 = vmatpush1.bf16.msra.mxu0 %v896
        %2341 = vmatprep.subr.bf16.mxu0 %v879
        %2342 = vmatpush1.bf16.msra.mxu0 %v878
        %2343 = vmatprep.subr.bf16.mxu0 %v861
        %2344 = vmatpush1.bf16.msra.mxu0 %v860
        %2345 = vmatprep.subr.bf16.mxu0 %v1131
        %2346 = vmatpush2.bf16.msra.mxu0 %v1130
        %2347 = vmatprep.subr.bf16.mxu0 %v1113
        %2348 = vmatpush2.bf16.msra.mxu0 %v1112
        %2349 = vmatprep.subr.bf16.mxu0 %v1095
        %2350 = vmatpush2.bf16.msra.mxu0 %v1094
        %2351 = vmatprep.subr.bf16.mxu0 %v1077
        %2352 = vmatpush2.bf16.msra.mxu0 %v1076
        %2353 = vmatprep.subr.bf16.mxu0 %v1059
        %2354 = vmatpush2.bf16.msra.mxu0 %v1058
        %2355 = vmatprep.subr.bf16.mxu0 %v1041
        %2356 = vmatpush2.bf16.msra.mxu0 %v1040
        %2357 = vmatprep.subr.bf16.mxu0 %v1023
        %2358 = vmatpush2.bf16.msra.mxu0 %v1022
        %2359 = vmatprep.subr.bf16.mxu0 %v1005
        %2360 = vmatpush2.bf16.msra.mxu0 %v1004
        %2361 = vmatprep.mubr.bf16.mxu0 %v413
        %2362 = vmatmul.mubr.bf16.gmra.mxu0 %v412
        %v2363 = vpop.f32.mrf.mxu0
        %v2364 = vadd.f32 0.0, %v2363
        %v2365 = vpop.f32.mrf.mxu0
        %v2366 = vadd.f32 0.0, %v2365
        %v2367 = vpop.f32.mrf.mxu0
        %v2368 = vpop.f32.mrf.mxu0
        %2369 = vdwg.mxu0
        %2370 = vmatprep.subr.bf16.mxu0 %v1275
        %2371 = vmatpush1.bf16.msra.mxu0 %v1274
        %2372 = vmatprep.subr.bf16.mxu0 %v1257
        %2373 = vmatpush1.bf16.msra.mxu0 %v1256
        %2374 = vmatprep.subr.bf16.mxu0 %v1239
        %2375 = vmatpush1.bf16.msra.mxu0 %v1238
        %2376 = vmatprep.subr.bf16.mxu0 %v1221
        %2377 = vmatpush1.bf16.msra.mxu0 %v1220
        %2378 = vmatprep.subr.bf16.mxu0 %v1203
        %2379 = vmatpush1.bf16.msra.mxu0 %v1202
        %2380 = vmatprep.subr.bf16.mxu0 %v1185
        %2381 = vmatpush1.bf16.msra.mxu0 %v1184
        %2382 = vmatprep.subr.bf16.mxu0 %v1167
        %2383 = vmatpush1.bf16.msra.mxu0 %v1166
        %2384 = vmatprep.subr.bf16.mxu0 %v1149
        %2385 = vmatpush1.bf16.msra.mxu0 %v1148
        %2386 = vmatprep.subr.bf16.mxu0 %v1419
        %2387 = vmatpush2.bf16.msra.mxu0 %v1418
        %2388 = vmatprep.subr.bf16.mxu0 %v1401
        %2389 = vmatpush2.bf16.msra.mxu0 %v1400
        %2390 = vmatprep.subr.bf16.mxu0 %v1383
        %2391 = vmatpush2.bf16.msra.mxu0 %v1382
        %2392 = vmatprep.subr.bf16.mxu0 %v1365
        %2393 = vmatpush2.bf16.msra.mxu0 %v1364
        %2394 = vmatprep.subr.bf16.mxu0 %v1347
        %2395 = vmatpush2.bf16.msra.mxu0 %v1346
        %2396 = vmatprep.subr.bf16.mxu0 %v1329
        %2397 = vmatpush2.bf16.msra.mxu0 %v1328
        %2398 = vmatprep.subr.bf16.mxu0 %v1311
        %2399 = vmatpush2.bf16.msra.mxu0 %v1310
        %2400 = vmatprep.subr.bf16.mxu0 %v1293
        %2401 = vmatpush2.bf16.msra.mxu0 %v1292
        %2402 = vmatprep.mubr.bf16.mxu0 %v415
        %2403 = vmatmul.mubr.bf16.gmra.mxu0 %v414
        %v2404 = vpop.f32.mrf.mxu0
        %v2405 = vadd.f32 %v2364, %v2404
        %v2406 = vpop.f32.mrf.mxu0
        %v2407 = vadd.f32 %v2366, %v2406
        %v2408 = vpop.f32.mrf.mxu0
        %v2409 = vpop.f32.mrf.mxu0
        %2410 = vdwg.mxu0
        %2411 = vmatprep.subr.bf16.mxu0 %v1563
        %2412 = vmatpush1.bf16.msra.mxu0 %v1562
        %2413 = vmatprep.subr.bf16.mxu0 %v1545
        %2414 = vmatpush1.bf16.msra.mxu0 %v1544
        %2415 = vmatprep.subr.bf16.mxu0 %v1527
        %2416 = vmatpush1.bf16.msra.mxu0 %v1526
        %2417 = vmatprep.subr.bf16.mxu0 %v1509
        %2418 = vmatpush1.bf16.msra.mxu0 %v1508
        %2419 = vmatprep.subr.bf16.mxu0 %v1491
        %2420 = vmatpush1.bf16.msra.mxu0 %v1490
        %2421 = vmatprep.subr.bf16.mxu0 %v1473
        %2422 = vmatpush1.bf16.msra.mxu0 %v1472
        %2423 = vmatprep.subr.bf16.mxu0 %v1455
        %2424 = vmatpush1.bf16.msra.mxu0 %v1454
        %2425 = vmatprep.subr.bf16.mxu0 %v1437
        %2426 = vmatpush1.bf16.msra.mxu0 %v1436
        %2427 = vmatprep.subr.bf16.mxu0 %v1707
        %2428 = vmatpush2.bf16.msra.mxu0 %v1706
        %2429 = vmatprep.subr.bf16.mxu0 %v1689
        %2430 = vmatpush2.bf16.msra.mxu0 %v1688
        %2431 = vmatprep.subr.bf16.mxu0 %v1671
        %2432 = vmatpush2.bf16.msra.mxu0 %v1670
        %2433 = vmatprep.subr.bf16.mxu0 %v1653
        %2434 = vmatpush2.bf16.msra.mxu0 %v1652
        %2435 = vmatprep.subr.bf16.mxu0 %v1635
        %2436 = vmatpush2.bf16.msra.mxu0 %v1634
        %2437 = vmatprep.subr.bf16.mxu0 %v1617
        %2438 = vmatpush2.bf16.msra.mxu0 %v1616
        %2439 = vmatprep.subr.bf16.mxu0 %v1599
        %2440 = vmatpush2.bf16.msra.mxu0 %v1598
        %2441 = vmatprep.subr.bf16.mxu0 %v1581
        %2442 = vmatpush2.bf16.msra.mxu0 %v1580
        %2443 = vmatprep.mubr.bf16.mxu0 %v417
        %2444 = vmatmul.mubr.bf16.gmra.mxu0 %v416
        %v2445 = vpop.f32.mrf.mxu0
        %v2446 = vadd.f32 %v2405, %v2445
        %v2447 = vpop.f32.mrf.mxu0
        %v2448 = vadd.f32 %v2407, %v2447
        %v2449 = vpop.f32.mrf.mxu0
        %v2450 = vpop.f32.mrf.mxu0
        %2451 = vdwg.mxu0
        %2452 = vmatprep.subr.bf16.mxu0 %v989
        %2453 = vmatpush1.bf16.msra.mxu0 %v988
        %2454 = vmatprep.subr.bf16.mxu0 %v971
        %2455 = vmatpush1.bf16.msra.mxu0 %v970
        %2456 = vmatprep.subr.bf16.mxu0 %v953
        %2457 = vmatpush1.bf16.msra.mxu0 %v952
        %2458 = vmatprep.subr.bf16.mxu0 %v935
        %2459 = vmatpush1.bf16.msra.mxu0 %v934
        %2460 = vmatprep.subr.bf16.mxu0 %v917
        %2461 = vmatpush1.bf16.msra.mxu0 %v916
        %2462 = vmatprep.subr.bf16.mxu0 %v899
        %2463 = vmatpush1.bf16.msra.mxu0 %v898
        %2464 = vmatprep.subr.bf16.mxu0 %v881
        %2465 = vmatpush1.bf16.msra.mxu0 %v880
        %2466 = vmatprep.subr.bf16.mxu0 %v863
        %2467 = vmatpush1.bf16.msra.mxu0 %v862
        %2468 = vmatprep.subr.bf16.mxu0 %v1133
        %2469 = vmatpush2.bf16.msra.mxu0 %v1132
        %2470 = vmatprep.subr.bf16.mxu0 %v1115
        %2471 = vmatpush2.bf16.msra.mxu0 %v1114
        %2472 = vmatprep.subr.bf16.mxu0 %v1097
        %2473 = vmatpush2.bf16.msra.mxu0 %v1096
        %2474 = vmatprep.subr.bf16.mxu0 %v1079
        %2475 = vmatpush2.bf16.msra.mxu0 %v1078
        %2476 = vmatprep.subr.bf16.mxu0 %v1061
        %2477 = vmatpush2.bf16.msra.mxu0 %v1060
        %2478 = vmatprep.subr.bf16.mxu0 %v1043
        %2479 = vmatpush2.bf16.msra.mxu0 %v1042
        %2480 = vmatprep.subr.bf16.mxu0 %v1025
        %2481 = vmatpush2.bf16.msra.mxu0 %v1024
        %2482 = vmatprep.subr.bf16.mxu0 %v1007
        %2483 = vmatpush2.bf16.msra.mxu0 %v1006
        %2484 = vmatprep.mubr.bf16.mxu0 %v413
        %2485 = vmatmul.mubr.bf16.gmra.mxu0 %v412
        %v2486 = vpop.f32.mrf.mxu0
        %v2487 = vadd.f32 0.0, %v2486
        %v2488 = vpop.f32.mrf.mxu0
        %v2489 = vadd.f32 0.0, %v2488
        %v2490 = vpop.f32.mrf.mxu0
        %v2491 = vpop.f32.mrf.mxu0
        %2492 = vdwg.mxu0
        %2493 = vmatprep.subr.bf16.mxu0 %v1277
        %2494 = vmatpush1.bf16.msra.mxu0 %v1276
        %2495 = vmatprep.subr.bf16.mxu0 %v1259
        %2496 = vmatpush1.bf16.msra.mxu0 %v1258
        %2497 = vmatprep.subr.bf16.mxu0 %v1241
        %2498 = vmatpush1.bf16.msra.mxu0 %v1240
        %2499 = vmatprep.subr.bf16.mxu0 %v1223
        %2500 = vmatpush1.bf16.msra.mxu0 %v1222
        %2501 = vmatprep.subr.bf16.mxu0 %v1205
        %2502 = vmatpush1.bf16.msra.mxu0 %v1204
        %2503 = vmatprep.subr.bf16.mxu0 %v1187
        %2504 = vmatpush1.bf16.msra.mxu0 %v1186
        %2505 = vmatprep.subr.bf16.mxu0 %v1169
        %2506 = vmatpush1.bf16.msra.mxu0 %v1168
        %2507 = vmatprep.subr.bf16.mxu0 %v1151
        %2508 = vmatpush1.bf16.msra.mxu0 %v1150
        %2509 = vmatprep.subr.bf16.mxu0 %v1421
        %2510 = vmatpush2.bf16.msra.mxu0 %v1420
        %2511 = vmatprep.subr.bf16.mxu0 %v1403
        %2512 = vmatpush2.bf16.msra.mxu0 %v1402
        %2513 = vmatprep.subr.bf16.mxu0 %v1385
        %2514 = vmatpush2.bf16.msra.mxu0 %v1384
        %2515 = vmatprep.subr.bf16.mxu0 %v1367
        %2516 = vmatpush2.bf16.msra.mxu0 %v1366
        %2517 = vmatprep.subr.bf16.mxu0 %v1349
        %2518 = vmatpush2.bf16.msra.mxu0 %v1348
        %2519 = vmatprep.subr.bf16.mxu0 %v1331
        %2520 = vmatpush2.bf16.msra.mxu0 %v1330
        %2521 = vmatprep.subr.bf16.mxu0 %v1313
        %2522 = vmatpush2.bf16.msra.mxu0 %v1312
        %2523 = vmatprep.subr.bf16.mxu0 %v1295
        %2524 = vmatpush2.bf16.msra.mxu0 %v1294
        %2525 = vmatprep.mubr.bf16.mxu0 %v415
        %2526 = vmatmul.mubr.bf16.gmra.mxu0 %v414
        %v2527 = vpop.f32.mrf.mxu0
        %v2528 = vadd.f32 %v2487, %v2527
        %v2529 = vpop.f32.mrf.mxu0
        %v2530 = vadd.f32 %v2489, %v2529
        %v2531 = vpop.f32.mrf.mxu0
        %v2532 = vpop.f32.mrf.mxu0
        %2533 = vdwg.mxu0
        %2534 = vmatprep.subr.bf16.mxu0 %v1565
        %2535 = vmatpush1.bf16.msra.mxu0 %v1564
        %2536 = vmatprep.subr.bf16.mxu0 %v1547
        %2537 = vmatpush1.bf16.msra.mxu0 %v1546
        %2538 = vmatprep.subr.bf16.mxu0 %v1529
        %2539 = vmatpush1.bf16.msra.mxu0 %v1528
        %2540 = vmatprep.subr.bf16.mxu0 %v1511
        %2541 = vmatpush1.bf16.msra.mxu0 %v1510
        %2542 = vmatprep.subr.bf16.mxu0 %v1493
        %2543 = vmatpush1.bf16.msra.mxu0 %v1492
        %2544 = vmatprep.subr.bf16.mxu0 %v1475
        %2545 = vmatpush1.bf16.msra.mxu0 %v1474
        %2546 = vmatprep.subr.bf16.mxu0 %v1457
        %2547 = vmatpush1.bf16.msra.mxu0 %v1456
        %2548 = vmatprep.subr.bf16.mxu0 %v1439
        %2549 = vmatpush1.bf16.msra.mxu0 %v1438
        %2550 = vmatprep.subr.bf16.mxu0 %v1709
        %2551 = vmatpush2.bf16.msra.mxu0 %v1708
        %2552 = vmatprep.subr.bf16.mxu0 %v1691
        %2553 = vmatpush2.bf16.msra.mxu0 %v1690
        %2554 = vmatprep.subr.bf16.mxu0 %v1673
        %2555 = vmatpush2.bf16.msra.mxu0 %v1672
        %2556 = vmatprep.subr.bf16.mxu0 %v1655
        %2557 = vmatpush2.bf16.msra.mxu0 %v1654
        %2558 = vmatprep.subr.bf16.mxu0 %v1637
        %2559 = vmatpush2.bf16.msra.mxu0 %v1636
        %2560 = vmatprep.subr.bf16.mxu0 %v1619
        %2561 = vmatpush2.bf16.msra.mxu0 %v1618
        %2562 = vmatprep.subr.bf16.mxu0 %v1601
        %2563 = vmatpush2.bf16.msra.mxu0 %v1600
        %2564 = vmatprep.subr.bf16.mxu0 %v1583
        %2565 = vmatpush2.bf16.msra.mxu0 %v1582
        %2566 = vmatprep.mubr.bf16.mxu0 %v417
        %2567 = vmatmul.mubr.bf16.gmra.mxu0 %v416
        %v2568 = vpop.f32.mrf.mxu0
        %v2569 = vadd.f32 %v2528, %v2568
        %v2570 = vpop.f32.mrf.mxu0
        %v2571 = vadd.f32 %v2530, %v2570
        %v2572 = vpop.f32.mrf.mxu0
        %v2573 = vpop.f32.mrf.mxu0
        %2574 = vdwg.mxu0
        %2575 = vmatprep.subr.bf16.mxu0 %v991
        %2576 = vmatpush1.bf16.msra.mxu0 %v990
        %2577 = vmatprep.subr.bf16.mxu0 %v973
        %2578 = vmatpush1.bf16.msra.mxu0 %v972
        %2579 = vmatprep.subr.bf16.mxu0 %v955
        %2580 = vmatpush1.bf16.msra.mxu0 %v954
        %2581 = vmatprep.subr.bf16.mxu0 %v937
        %2582 = vmatpush1.bf16.msra.mxu0 %v936
        %2583 = vmatprep.subr.bf16.mxu0 %v919
        %2584 = vmatpush1.bf16.msra.mxu0 %v918
        %2585 = vmatprep.subr.bf16.mxu0 %v901
        %2586 = vmatpush1.bf16.msra.mxu0 %v900
        %2587 = vmatprep.subr.bf16.mxu0 %v883
        %2588 = vmatpush1.bf16.msra.mxu0 %v882
        %2589 = vmatprep.subr.bf16.mxu0 %v865
        %2590 = vmatpush1.bf16.msra.mxu0 %v864
        %2591 = vmatprep.subr.bf16.mxu0 %v1135
        %2592 = vmatpush2.bf16.msra.mxu0 %v1134
        %2593 = vmatprep.subr.bf16.mxu0 %v1117
        %2594 = vmatpush2.bf16.msra.mxu0 %v1116
        %2595 = vmatprep.subr.bf16.mxu0 %v1099
        %2596 = vmatpush2.bf16.msra.mxu0 %v1098
        %2597 = vmatprep.subr.bf16.mxu0 %v1081
        %2598 = vmatpush2.bf16.msra.mxu0 %v1080
        %2599 = vmatprep.subr.bf16.mxu0 %v1063
        %2600 = vmatpush2.bf16.msra.mxu0 %v1062
        %2601 = vmatprep.subr.bf16.mxu0 %v1045
        %2602 = vmatpush2.bf16.msra.mxu0 %v1044
        %2603 = vmatprep.subr.bf16.mxu0 %v1027
        %2604 = vmatpush2.bf16.msra.mxu0 %v1026
        %2605 = vmatprep.subr.bf16.mxu0 %v1009
        %2606 = vmatpush2.bf16.msra.mxu0 %v1008
        %2607 = vmatprep.mubr.bf16.mxu0 %v413
        %2608 = vmatmul.mubr.bf16.gmra.mxu0 %v412
        %v2609 = vpop.f32.mrf.mxu0
        %v2610 = vadd.f32 0.0, %v2609
        %v2611 = vpop.f32.mrf.mxu0
        %v2612 = vadd.f32 0.0, %v2611
        %v2613 = vpop.f32.mrf.mxu0
        %v2614 = vpop.f32.mrf.mxu0
        %2615 = vdwg.mxu0
        %2616 = vmatprep.subr.bf16.mxu0 %v1279
        %2617 = vmatpush1.bf16.msra.mxu0 %v1278
        %2618 = vmatprep.subr.bf16.mxu0 %v1261
        %2619 = vmatpush1.bf16.msra.mxu0 %v1260
        %2620 = vmatprep.subr.bf16.mxu0 %v1243
        %2621 = vmatpush1.bf16.msra.mxu0 %v1242
        %2622 = vmatprep.subr.bf16.mxu0 %v1225
        %2623 = vmatpush1.bf16.msra.mxu0 %v1224
        %2624 = vmatprep.subr.bf16.mxu0 %v1207
        %2625 = vmatpush1.bf16.msra.mxu0 %v1206
        %2626 = vmatprep.subr.bf16.mxu0 %v1189
        %2627 = vmatpush1.bf16.msra.mxu0 %v1188
        %2628 = vmatprep.subr.bf16.mxu0 %v1171
        %2629 = vmatpush1.bf16.msra.mxu0 %v1170
        %2630 = vmatprep.subr.bf16.mxu0 %v1153
        %2631 = vmatpush1.bf16.msra.mxu0 %v1152
        %2632 = vmatprep.subr.bf16.mxu0 %v1423
        %2633 = vmatpush2.bf16.msra.mxu0 %v1422
        %2634 = vmatprep.subr.bf16.mxu0 %v1405
        %2635 = vmatpush2.bf16.msra.mxu0 %v1404
        %2636 = vmatprep.subr.bf16.mxu0 %v1387
        %2637 = vmatpush2.bf16.msra.mxu0 %v1386
        %2638 = vmatprep.subr.bf16.mxu0 %v1369
        %2639 = vmatpush2.bf16.msra.mxu0 %v1368
        %2640 = vmatprep.subr.bf16.mxu0 %v1351
        %2641 = vmatpush2.bf16.msra.mxu0 %v1350
        %2642 = vmatprep.subr.bf16.mxu0 %v1333
        %2643 = vmatpush2.bf16.msra.mxu0 %v1332
        %2644 = vmatprep.subr.bf16.mxu0 %v1315
        %2645 = vmatpush2.bf16.msra.mxu0 %v1314
        %2646 = vmatprep.subr.bf16.mxu0 %v1297
        %2647 = vmatpush2.bf16.msra.mxu0 %v1296
        %2648 = vmatprep.mubr.bf16.mxu0 %v415
        %2649 = vmatmul.mubr.bf16.gmra.mxu0 %v414
        %v2650 = vpop.f32.mrf.mxu0
        %v2651 = vadd.f32 %v2610, %v2650
        %v2652 = vpop.f32.mrf.mxu0
        %v2653 = vadd.f32 %v2612, %v2652
        %v2654 = vpop.f32.mrf.mxu0
        %v2655 = vpop.f32.mrf.mxu0
        %2656 = vdwg.mxu0
        %2657 = vmatprep.subr.bf16.mxu0 %v1567
        %2658 = vmatpush1.bf16.msra.mxu0 %v1566
        %2659 = vmatprep.subr.bf16.mxu0 %v1549
        %2660 = vmatpush1.bf16.msra.mxu0 %v1548
        %2661 = vmatprep.subr.bf16.mxu0 %v1531
        %2662 = vmatpush1.bf16.msra.mxu0 %v1530
        %2663 = vmatprep.subr.bf16.mxu0 %v1513
        %2664 = vmatpush1.bf16.msra.mxu0 %v1512
        %2665 = vmatprep.subr.bf16.mxu0 %v1495
        %2666 = vmatpush1.bf16.msra.mxu0 %v1494
        %2667 = vmatprep.subr.bf16.mxu0 %v1477
        %2668 = vmatpush1.bf16.msra.mxu0 %v1476
        %2669 = vmatprep.subr.bf16.mxu0 %v1459
        %2670 = vmatpush1.bf16.msra.mxu0 %v1458
        %2671 = vmatprep.subr.bf16.mxu0 %v1441
        %2672 = vmatpush1.bf16.msra.mxu0 %v1440
        %2673 = vmatprep.subr.bf16.mxu0 %v1711
        %2674 = vmatpush2.bf16.msra.mxu0 %v1710
        %2675 = vmatprep.subr.bf16.mxu0 %v1693
        %2676 = vmatpush2.bf16.msra.mxu0 %v1692
        %2677 = vmatprep.subr.bf16.mxu0 %v1675
        %2678 = vmatpush2.bf16.msra.mxu0 %v1674
        %2679 = vmatprep.subr.bf16.mxu0 %v1657
        %2680 = vmatpush2.bf16.msra.mxu0 %v1656
        %2681 = vmatprep.subr.bf16.mxu0 %v1639
        %2682 = vmatpush2.bf16.msra.mxu0 %v1638
        %2683 = vmatprep.subr.bf16.mxu0 %v1621
        %2684 = vmatpush2.bf16.msra.mxu0 %v1620
        %2685 = vmatprep.subr.bf16.mxu0 %v1603
        %2686 = vmatpush2.bf16.msra.mxu0 %v1602
        %2687 = vmatprep.subr.bf16.mxu0 %v1585
        %2688 = vmatpush2.bf16.msra.mxu0 %v1584
        %2689 = vmatprep.mubr.bf16.mxu0 %v417
        %2690 = vmatmul.mubr.bf16.gmra.mxu0 %v416
        %v2691 = vpop.f32.mrf.mxu0
        %v2692 = vadd.f32 %v2651, %v2691
        %v2693 = vpop.f32.mrf.mxu0
        %v2694 = vadd.f32 %v2653, %v2693
        %v2695 = vpop.f32.mrf.mxu0
        %v2696 = vpop.f32.mrf.mxu0
        %2697 = vdwg.mxu0
        %2698 = vmatprep.subr.bf16.mxu0 %v993
        %2699 = vmatpush1.bf16.msra.mxu0 %v992
        %2700 = vmatprep.subr.bf16.mxu0 %v975
        %2701 = vmatpush1.bf16.msra.mxu0 %v974
        %2702 = vmatprep.subr.bf16.mxu0 %v957
        %2703 = vmatpush1.bf16.msra.mxu0 %v956
        %2704 = vmatprep.subr.bf16.mxu0 %v939
        %2705 = vmatpush1.bf16.msra.mxu0 %v938
        %2706 = vmatprep.subr.bf16.mxu0 %v921
        %2707 = vmatpush1.bf16.msra.mxu0 %v920
        %2708 = vmatprep.subr.bf16.mxu0 %v903
        %2709 = vmatpush1.bf16.msra.mxu0 %v902
        %2710 = vmatprep.subr.bf16.mxu0 %v885
        %2711 = vmatpush1.bf16.msra.mxu0 %v884
        %2712 = vmatprep.subr.bf16.mxu0 %v867
        %2713 = vmatpush1.bf16.msra.mxu0 %v866
        %2714 = vmatprep.subr.bf16.mxu0 %v1137
        %2715 = vmatpush2.bf16.msra.mxu0 %v1136
        %2716 = vmatprep.subr.bf16.mxu0 %v1119
        %2717 = vmatpush2.bf16.msra.mxu0 %v1118
        %2718 = vmatprep.subr.bf16.mxu0 %v1101
        %2719 = vmatpush2.bf16.msra.mxu0 %v1100
        %2720 = vmatprep.subr.bf16.mxu0 %v1083
        %2721 = vmatpush2.bf16.msra.mxu0 %v1082
        %2722 = vmatprep.subr.bf16.mxu0 %v1065
        %2723 = vmatpush2.bf16.msra.mxu0 %v1064
        %2724 = vmatprep.subr.bf16.mxu0 %v1047
        %2725 = vmatpush2.bf16.msra.mxu0 %v1046
        %2726 = vmatprep.subr.bf16.mxu0 %v1029
        %2727 = vmatpush2.bf16.msra.mxu0 %v1028
        %2728 = vmatprep.subr.bf16.mxu0 %v1011
        %2729 = vmatpush2.bf16.msra.mxu0 %v1010
        %2730 = vmatprep.mubr.bf16.mxu0 %v413
        %2731 = vmatmul.mubr.bf16.gmra.mxu0 %v412
        %v2732 = vpop.f32.mrf.mxu0
        %v2733 = vadd.f32 0.0, %v2732
        %v2734 = vpop.f32.mrf.mxu0
        %v2735 = vadd.f32 0.0, %v2734
        %v2736 = vpop.f32.mrf.mxu0
        %v2737 = vpop.f32.mrf.mxu0
        %2738 = vdwg.mxu0
        %2739 = vmatprep.subr.bf16.mxu0 %v1281
        %2740 = vmatpush1.bf16.msra.mxu0 %v1280
        %2741 = vmatprep.subr.bf16.mxu0 %v1263
        %2742 = vmatpush1.bf16.msra.mxu0 %v1262
        %2743 = vmatprep.subr.bf16.mxu0 %v1245
        %2744 = vmatpush1.bf16.msra.mxu0 %v1244
        %2745 = vmatprep.subr.bf16.mxu0 %v1227
        %2746 = vmatpush1.bf16.msra.mxu0 %v1226
        %2747 = vmatprep.subr.bf16.mxu0 %v1209
        %2748 = vmatpush1.bf16.msra.mxu0 %v1208
        %2749 = vmatprep.subr.bf16.mxu0 %v1191
        %2750 = vmatpush1.bf16.msra.mxu0 %v1190
        %2751 = vmatprep.subr.bf16.mxu0 %v1173
        %2752 = vmatpush1.bf16.msra.mxu0 %v1172
        %2753 = vmatprep.subr.bf16.mxu0 %v1155
        %2754 = vmatpush1.bf16.msra.mxu0 %v1154
        %2755 = vmatprep.subr.bf16.mxu0 %v1425
        %2756 = vmatpush2.bf16.msra.mxu0 %v1424
        %2757 = vmatprep.subr.bf16.mxu0 %v1407
        %2758 = vmatpush2.bf16.msra.mxu0 %v1406
        %2759 = vmatprep.subr.bf16.mxu0 %v1389
        %2760 = vmatpush2.bf16.msra.mxu0 %v1388
        %2761 = vmatprep.subr.bf16.mxu0 %v1371
        %2762 = vmatpush2.bf16.msra.mxu0 %v1370
        %2763 = vmatprep.subr.bf16.mxu0 %v1353
        %2764 = vmatpush2.bf16.msra.mxu0 %v1352
        %2765 = vmatprep.subr.bf16.mxu0 %v1335
        %2766 = vmatpush2.bf16.msra.mxu0 %v1334
        %2767 = vmatprep.subr.bf16.mxu0 %v1317
        %2768 = vmatpush2.bf16.msra.mxu0 %v1316
        %2769 = vmatprep.subr.bf16.mxu0 %v1299
        %2770 = vmatpush2.bf16.msra.mxu0 %v1298
        %2771 = vmatprep.mubr.bf16.mxu0 %v415
        %2772 = vmatmul.mubr.bf16.gmra.mxu0 %v414
        %v2773 = vpop.f32.mrf.mxu0
        %v2774 = vadd.f32 %v2733, %v2773
        %v2775 = vpop.f32.mrf.mxu0
        %v2776 = vadd.f32 %v2735, %v2775
        %v2777 = vpop.f32.mrf.mxu0
        %v2778 = vpop.f32.mrf.mxu0
        %2779 = vdwg.mxu0
        %2780 = vmatprep.subr.bf16.mxu0 %v1569
        %2781 = vmatpush1.bf16.msra.mxu0 %v1568
        %2782 = vmatprep.subr.bf16.mxu0 %v1551
        %2783 = vmatpush1.bf16.msra.mxu0 %v1550
        %2784 = vmatprep.subr.bf16.mxu0 %v1533
        %2785 = vmatpush1.bf16.msra.mxu0 %v1532
        %2786 = vmatprep.subr.bf16.mxu0 %v1515
        %2787 = vmatpush1.bf16.msra.mxu0 %v1514
        %2788 = vmatprep.subr.bf16.mxu0 %v1497
        %2789 = vmatpush1.bf16.msra.mxu0 %v1496
        %2790 = vmatprep.subr.bf16.mxu0 %v1479
        %2791 = vmatpush1.bf16.msra.mxu0 %v1478
        %2792 = vmatprep.subr.bf16.mxu0 %v1461
        %2793 = vmatpush1.bf16.msra.mxu0 %v1460
        %2794 = vmatprep.subr.bf16.mxu0 %v1443
        %2795 = vmatpush1.bf16.msra.mxu0 %v1442
        %2796 = vmatprep.subr.bf16.mxu0 %v1713
        %2797 = vmatpush2.bf16.msra.mxu0 %v1712
        %2798 = vmatprep.subr.bf16.mxu0 %v1695
        %2799 = vmatpush2.bf16.msra.mxu0 %v1694
        %2800 = vmatprep.subr.bf16.mxu0 %v1677
        %2801 = vmatpush2.bf16.msra.mxu0 %v1676
        %2802 = vmatprep.subr.bf16.mxu0 %v1659
        %2803 = vmatpush2.bf16.msra.mxu0 %v1658
        %2804 = vmatprep.subr.bf16.mxu0 %v1641
        %2805 = vmatpush2.bf16.msra.mxu0 %v1640
        %2806 = vmatprep.subr.bf16.mxu0 %v1623
        %2807 = vmatpush2.bf16.msra.mxu0 %v1622
        %2808 = vmatprep.subr.bf16.mxu0 %v1605
        %2809 = vmatpush2.bf16.msra.mxu0 %v1604
        %2810 = vmatprep.subr.bf16.mxu0 %v1587
        %2811 = vmatpush2.bf16.msra.mxu0 %v1586
        %2812 = vmatprep.mubr.bf16.mxu0 %v417
        %2813 = vmatmul.mubr.bf16.gmra.mxu0 %v416
        %v2814 = vpop.f32.mrf.mxu0
        %v2815 = vadd.f32 %v2774, %v2814
        %v2816 = vpop.f32.mrf.mxu0
        %v2817 = vadd.f32 %v2776, %v2816
        %v2818 = vpop.f32.mrf.mxu0
        %v2819 = vpop.f32.mrf.mxu0
        %2820 = vdwg.mxu0
        %v2821 = vld [vmem:[%s319] sm:$0xff]
        %v2822 = vld [vmem:[%s319 + $0x8] sm:$0xff]
        %v2823 = vld [vmem:[%s319 + $0x10] sm:$0x3]
        %v2827 = vlaneseq
        %v2828 = vshrl.u32 %v2827, 7
        %v2829 = vsub.s32 0, %v2828
        %v2830 = vrot.slane %v2821, %v2829
        %v2831 = vlaneseq
        %v2832 = vshrl.u32 %v2831, 7
        %v2833 = vsub.s32 1, %v2832
        %v2834 = vrot.slane %v2821, %v2833
        %v2835 = vlaneseq
        %v2836 = vshrl.u32 %v2835, 7
        %v2837 = vsub.s32 2, %v2836
        %v2838 = vrot.slane %v2821, %v2837
        %v2839 = vlaneseq
        %v2840 = vshrl.u32 %v2839, 7
        %v2841 = vsub.s32 3, %v2840
        %v2842 = vrot.slane %v2821, %v2841
        %v2843 = vlaneseq
        %v2844 = vshrl.u32 %v2843, 7
        %v2845 = vsub.s32 4, %v2844
        %v2846 = vrot.slane %v2821, %v2845
        %v2847 = vlaneseq
        %v2848 = vshrl.u32 %v2847, 7
        %v2849 = vsub.s32 5, %v2848
        %v2850 = vrot.slane %v2821, %v2849
        %v2851 = vlaneseq
        %v2852 = vshrl.u32 %v2851, 7
        %v2853 = vsub.s32 6, %v2852
        %v2854 = vrot.slane %v2821, %v2853
        %v2855 = vlaneseq
        %v2856 = vshrl.u32 %v2855, 7
        %v2857 = vsub.s32 7, %v2856
        %v2858 = vrot.slane %v2821, %v2857
        %v2859 = vlaneseq
        %v2860 = vshrl.u32 %v2859, 7
        %v2861 = vsub.s32 0, %v2860
        %v2862 = vrot.slane %v2822, %v2861
        %v2863 = vlaneseq
        %v2864 = vshrl.u32 %v2863, 7
        %v2865 = vsub.s32 1, %v2864
        %v2866 = vrot.slane %v2822, %v2865
        %v2867 = vlaneseq
        %v2868 = vshrl.u32 %v2867, 7
        %v2869 = vsub.s32 2, %v2868
        %v2870 = vrot.slane %v2822, %v2869
        %v2871 = vlaneseq
        %v2872 = vshrl.u32 %v2871, 7
        %v2873 = vsub.s32 3, %v2872
        %v2874 = vrot.slane %v2822, %v2873
        %v2875 = vlaneseq
        %v2876 = vshrl.u32 %v2875, 7
        %v2877 = vsub.s32 4, %v2876
        %v2878 = vrot.slane %v2822, %v2877
        %v2879 = vlaneseq
        %v2880 = vshrl.u32 %v2879, 7
        %v2881 = vsub.s32 5, %v2880
        %v2882 = vrot.slane %v2822, %v2881
        %v2883 = vlaneseq
        %v2884 = vshrl.u32 %v2883, 7
        %v2885 = vsub.s32 6, %v2884
        %v2886 = vrot.slane %v2822, %v2885
        %v2887 = vlaneseq
        %v2888 = vshrl.u32 %v2887, 7
        %v2889 = vsub.s32 7, %v2888
        %v2890 = vrot.slane %v2822, %v2889
        %v2891 = vlaneseq
        %v2892 = vshrl.u32 %v2891, 7
        %v2893 = vsub.s32 0, %v2892
        %v2894 = vrot.slane %v2823, %v2893
        %v2895 = vlaneseq
        %v2896 = vshrl.u32 %v2895, 7
        %v2897 = vsub.s32 1, %v2896
        %v2898 = vrot.slane %v2823, %v2897
        %v2917 = vmul.f32 %v1831, %v2830
        %v2918 = vmul.f32 %v1833, %v2834
        %v2919 = vmul.f32 %v1954, %v2838
        %v2920 = vmul.f32 %v1956, %v2842
        %v2921 = vmul.f32 %v2077, %v2846
        %v2922 = vmul.f32 %v2079, %v2850
        %v2923 = vmul.f32 %v2200, %v2854
        %v2924 = vmul.f32 %v2202, %v2858
        %v2925 = vmul.f32 %v2323, %v2862
        %v2926 = vmul.f32 %v2325, %v2866
        %v2927 = vmul.f32 %v2446, %v2870
        %v2928 = vmul.f32 %v2448, %v2874
        %v2929 = vmul.f32 %v2569, %v2878
        %v2930 = vmul.f32 %v2571, %v2882
        %v2931 = vmul.f32 %v2692, %v2886
        %v2932 = vmul.f32 %v2694, %v2890
        %v2933 = vmul.f32 %v2815, %v2894
        %v2934 = vmul.f32 %v2817, %v2898
        %v2935 = vld [vmem:[%s328] sm:$0xff]
        %v2936 = vld [vmem:[%s328 + $0x8] sm:$0xff]
        %v2937 = vld [vmem:[%s328 + $0x10] sm:$0x3]
        %v2941 = vlaneseq
        %v2942 = vshrl.u32 %v2941, 7
        %v2943 = vsub.s32 0, %v2942
        %v2944 = vrot.slane %v2935, %v2943
        %v2945 = vlaneseq
        %v2946 = vshrl.u32 %v2945, 7
        %v2947 = vsub.s32 1, %v2946
        %v2948 = vrot.slane %v2935, %v2947
        %v2949 = vlaneseq
        %v2950 = vshrl.u32 %v2949, 7
        %v2951 = vsub.s32 2, %v2950
        %v2952 = vrot.slane %v2935, %v2951
        %v2953 = vlaneseq
        %v2954 = vshrl.u32 %v2953, 7
        %v2955 = vsub.s32 3, %v2954
        %v2956 = vrot.slane %v2935, %v2955
        %v2957 = vlaneseq
        %v2958 = vshrl.u32 %v2957, 7
        %v2959 = vsub.s32 4, %v2958
        %v2960 = vrot.slane %v2935, %v2959
        %v2961 = vlaneseq
        %v2962 = vshrl.u32 %v2961, 7
        %v2963 = vsub.s32 5, %v2962
        %v2964 = vrot.slane %v2935, %v2963
        %v2965 = vlaneseq
        %v2966 = vshrl.u32 %v2965, 7
        %v2967 = vsub.s32 6, %v2966
        %v2968 = vrot.slane %v2935, %v2967
        %v2969 = vlaneseq
        %v2970 = vshrl.u32 %v2969, 7
        %v2971 = vsub.s32 7, %v2970
        %v2972 = vrot.slane %v2935, %v2971
        %v2973 = vlaneseq
        %v2974 = vshrl.u32 %v2973, 7
        %v2975 = vsub.s32 0, %v2974
        %v2976 = vrot.slane %v2936, %v2975
        %v2977 = vlaneseq
        %v2978 = vshrl.u32 %v2977, 7
        %v2979 = vsub.s32 1, %v2978
        %v2980 = vrot.slane %v2936, %v2979
        %v2981 = vlaneseq
        %v2982 = vshrl.u32 %v2981, 7
        %v2983 = vsub.s32 2, %v2982
        %v2984 = vrot.slane %v2936, %v2983
        %v2985 = vlaneseq
        %v2986 = vshrl.u32 %v2985, 7
        %v2987 = vsub.s32 3, %v2986
        %v2988 = vrot.slane %v2936, %v2987
        %v2989 = vlaneseq
        %v2990 = vshrl.u32 %v2989, 7
        %v2991 = vsub.s32 4, %v2990
        %v2992 = vrot.slane %v2936, %v2991
        %v2993 = vlaneseq
        %v2994 = vshrl.u32 %v2993, 7
        %v2995 = vsub.s32 5, %v2994
        %v2996 = vrot.slane %v2936, %v2995
        %v2997 = vlaneseq
        %v2998 = vshrl.u32 %v2997, 7
        %v2999 = vsub.s32 6, %v2998
        %v3000 = vrot.slane %v2936, %v2999
        %v3001 = vlaneseq
        %v3002 = vshrl.u32 %v3001, 7
        %v3003 = vsub.s32 7, %v3002
        %v3004 = vrot.slane %v2936, %v3003
        %v3005 = vlaneseq
        %v3006 = vshrl.u32 %v3005, 7
        %v3007 = vsub.s32 0, %v3006
        %v3008 = vrot.slane %v2937, %v3007
        %v3009 = vlaneseq
        %v3010 = vshrl.u32 %v3009, 7
        %v3011 = vsub.s32 1, %v3010
        %v3012 = vrot.slane %v2937, %v3011
        %v3031 = vadd.f32 %v2917, %v2944
        %v3032 = vadd.f32 %v2918, %v2948
        %v3033 = vadd.f32 %v2919, %v2952
        %v3034 = vadd.f32 %v2920, %v2956
        %v3035 = vadd.f32 %v2921, %v2960
        %v3036 = vadd.f32 %v2922, %v2964
        %v3037 = vadd.f32 %v2923, %v2968
        %v3038 = vadd.f32 %v2924, %v2972
        %v3039 = vadd.f32 %v2925, %v2976
        %v3040 = vadd.f32 %v2926, %v2980
        %v3041 = vadd.f32 %v2927, %v2984
        %v3042 = vadd.f32 %v2928, %v2988
        %v3043 = vadd.f32 %v2929, %v2992
        %v3044 = vadd.f32 %v2930, %v2996
        %v3045 = vadd.f32 %v2931, %v3000
        %v3046 = vadd.f32 %v2932, %v3004
        %v3047 = vadd.f32 %v2933, %v3008
        %v3048 = vadd.f32 %v2934, %v3012
        %v3049 = vxor.u32 %v3031, 2147483648
        %v3050 = vxor.u32 %v3032, 2147483648
        %v3051 = vxor.u32 %v3033, 2147483648
        %v3052 = vxor.u32 %v3034, 2147483648
        %v3053 = vxor.u32 %v3035, 2147483648
        %v3054 = vxor.u32 %v3036, 2147483648
        %v3055 = vmul.f32 %v3049, 1.442695
        %v3056 = vpow.pop %v3055
        %v3057 = vmul.f32 %v3050, 1.442695
        %v3058 = vpow.pop %v3057
        %v3059 = vmul.f32 %v3051, 1.442695
        %v3060 = vpow.pop %v3059
        %v3061 = vmul.f32 %v3052, 1.442695
        %v3062 = vpow.pop %v3061
        %v3063 = vmul.f32 %v3053, 1.442695
        %v3064 = vpow.pop %v3063
        %v3065 = vmul.f32 %v3054, 1.442695
        %v3066 = vpow.pop %v3065
        %v3067 = vadd.f32 %v3056, 1.0
        %v3068 = vadd.f32 %v3058, 1.0
        %v3069 = vadd.f32 %v3060, 1.0
        %v3070 = vadd.f32 %v3062, 1.0
        %v3071 = vadd.f32 %v3064, 1.0
        %v3072 = vadd.f32 %v3066, 1.0
        %v3073 = vrcp.pop %v3067
        %v3074 = vmul.f32 1.0, %v3073
        %v3075 = vrcp.pop %v3068
        %v3076 = vmul.f32 1.0, %v3075
        %v3077 = vrcp.pop %v3069
        %v3078 = vmul.f32 1.0, %v3077
        %v3079 = vrcp.pop %v3070
        %v3080 = vmul.f32 1.0, %v3079
        %v3081 = vrcp.pop %v3071
        %v3082 = vmul.f32 1.0, %v3081
        %v3083 = vrcp.pop %v3072
        %v3084 = vmul.f32 1.0, %v3083
        %v3085 = vtanh.pop %v3037
        %v3086 = vtanh.pop %v3038
        %v3087 = vtanh.pop %v3039
        %v3088 = vtanh.pop %v3040
        %v3089 = vtanh.pop %v3041
        %v3090 = vtanh.pop %v3042
        %v3091 = vxor.u32 %v3043, 2147483648
        %v3092 = vxor.u32 %v3044, 2147483648
        %v3093 = vxor.u32 %v3045, 2147483648
        %v3094 = vxor.u32 %v3046, 2147483648
        %v3095 = vxor.u32 %v3047, 2147483648
        %v3096 = vxor.u32 %v3048, 2147483648
        %v3097 = vmul.f32 %v3091, 1.442695
        %v3098 = vpow.pop %v3097
        %v3099 = vmul.f32 %v3092, 1.442695
        %v3100 = vpow.pop %v3099
        %v3101 = vmul.f32 %v3093, 1.442695
        %v3102 = vpow.pop %v3101
        %v3103 = vmul.f32 %v3094, 1.442695
        %v3104 = vpow.pop %v3103
        %v3105 = vmul.f32 %v3095, 1.442695
        %v3106 = vpow.pop %v3105
        %v3107 = vmul.f32 %v3096, 1.442695
        %v3108 = vpow.pop %v3107
        %v3109 = vadd.f32 %v3098, 1.0
        %v3110 = vadd.f32 %v3100, 1.0
        %v3111 = vadd.f32 %v3102, 1.0
        %v3112 = vadd.f32 %v3104, 1.0
        %v3113 = vadd.f32 %v3106, 1.0
        %v3114 = vadd.f32 %v3108, 1.0
        %v3115 = vrcp.pop %v3109
        %v3116 = vmul.f32 1.0, %v3115
        %v3117 = vrcp.pop %v3110
        %v3118 = vmul.f32 1.0, %v3117
        %v3119 = vrcp.pop %v3111
        %v3120 = vmul.f32 1.0, %v3119
        %v3121 = vrcp.pop %v3112
        %v3122 = vmul.f32 1.0, %v3121
        %v3123 = vrcp.pop %v3113
        %v3124 = vmul.f32 1.0, %v3123
        %v3125 = vrcp.pop %v3114
        %v3126 = vmul.f32 1.0, %v3125
        %v3127 = vmul.f32 %v3074, %v3085
        %v3128 = vmul.f32 %v3076, %v3086
        %v3129 = vmul.f32 %v3078, %v3087
        %v3130 = vmul.f32 %v3080, %v3088
        %v3131 = vmul.f32 %v3082, %v3089
        %v3132 = vmul.f32 %v3084, %v3090
        %v3133 = vtanh.pop %v3127
        %v3134 = vtanh.pop %v3128
        %v3135 = vtanh.pop %v3129
        %v3136 = vtanh.pop %v3130
        %v3137 = vtanh.pop %v3131
        %v3138 = vtanh.pop %v3132
        %v3139 = vmul.f32 %v3116, %v3133
        %v3140 = vmul.f32 %v3118, %v3134
        %v3141 = vmul.f32 %v3120, %v3135
        %v3142 = vmul.f32 %v3122, %v3136
        %v3143 = vmul.f32 %v3124, %v3137
        %v3144 = vmul.f32 %v3126, %v3138
        %v3145 = vpack.c.bf16 %v3139, %v3139
        %v3146 = vpack.c.bf16 %v3140, %v3140
        %v3147 = vpack.c.bf16 %v3141, %v3141
        %v3148 = vpack.c.bf16 %v3142, %v3142
        %v3149 = vpack.c.bf16 %v3143, %v3143
        %v3150 = vpack.c.bf16 %v3144, %v3144
        %p3151 = scmp.eq.s32.totalorder %s25, 0
        // Predicated region
        $region65: #{tpu_custom_call.1} parent=43 // pred_check
          %p3152 = pneg %p3151
        $region66: #{tpu_custom_call.1} parent=43 // pred_check_branch
          %3154 = sbr.rel (%p3152) target = $region68
        $region67: #{tpu_custom_call.1} parent=43 // pred_region
          %v3155 = vld [vmem:[#allocation10] sm:$0x1]
          %v3157 = vlaneseq
          %v3158 = vshrl.u32 %v3157, 7
          %v3159 = vsub.s32 0, %v3158
          %v3160 = vrot.slane %v3155, %v3159
          %vm3162 = vcmask 9216
          %3163 = vst.msk [vmem:[#allocation11] sm:$0x3] %vm3162, %v3160
        $region68: #{tpu_custom_call.1} parent=43 // pred_fallthru
          _
        %v3164 = vld [vmem:[#allocation11] sm:$0x3]
        %v3165 = vld [vmem:[%s375] sm:$0xf]
        %v3166 = vld [vmem:[%s375 + $0x4] sm:$0xf]
        %v3167 = vld [vmem:[%s375 + $0x8] sm:$0xf]
        %v3168 = vld [vmem:[%s375 + $0xc] sm:$0xf]
        %v3169 = vld [vmem:[%s375 + $0x10] sm:$0xf]
        %v3170 = vld [vmem:[%s375 + $0x14] sm:$0xf]
        %v3171 = vld [vmem:[%s375 + $0x18] sm:$0xf]
        %v3172 = vld [vmem:[%s375 + $0x1c] sm:$0xf]
        %v3173 = vld [vmem:[%s375 + $0x20] sm:$0xf]
        %v3174 = vld [vmem:[%s375 + $0x24] sm:$0xf]
        %v3175 = vld [vmem:[%s375 + $0x28] sm:$0xf]
        %v3176 = vld [vmem:[%s375 + $0x2c] sm:$0xf]
        %v3177 = vld [vmem:[%s375 + $0x30] sm:$0xf]
        %v3178 = vld [vmem:[%s375 + $0x34] sm:$0xf]
        %v3179 = vld [vmem:[%s375 + $0x38] sm:$0xf]
        %v3180 = vld [vmem:[%s375 + $0x3c] sm:$0xf]
        %v3181 = vld [vmem:[%s375 + $0x40] sm:$0xf]
        %v3182 = vld [vmem:[%s375 + $0x44] sm:$0xf]
        %v3183 = vld [vmem:[%s375 + $0x48] sm:$0xf]
        %v3184 = vld [vmem:[%s375 + $0x4c] sm:$0xf]
        %v3185 = vld [vmem:[%s375 + $0x50] sm:$0xf]
        %v3186 = vld [vmem:[%s375 + $0x54] sm:$0xf]
        %v3187 = vld [vmem:[%s375 + $0x58] sm:$0xf]
        %v3188 = vld [vmem:[%s375 + $0x5c] sm:$0xf]
        %v3189 = vld [vmem:[%s375 + $0x60] sm:$0xf]
        %v3190 = vld [vmem:[%s375 + $0x64] sm:$0xf]
        %v3191 = vld [vmem:[%s375 + $0x68] sm:$0xf]
        %v3192 = vld [vmem:[%s375 + $0x6c] sm:$0xf]
        %v3193 = vld [vmem:[%s375 + $0x70] sm:$0xf]
        %v3194 = vld [vmem:[%s375 + $0x74] sm:$0xf]
        %v3195 = vld [vmem:[%s375 + $0x78] sm:$0xf]
        %v3196 = vld [vmem:[%s375 + $0x7c] sm:$0xf]
        %v3197 = vld [vmem:[%s375 + $0x80] sm:$0xf]
        %v3198 = vld [vmem:[%s375 + $0x84] sm:$0xf]
        %v3199 = vld [vmem:[%s375 + $0x88] sm:$0xf]
        %v3200 = vld [vmem:[%s375 + $0x8c] sm:$0xf]
        %v3201 = vld [vmem:[%s375 + $0x90] sm:$0xf]
        %v3202 = vld [vmem:[%s375 + $0x94] sm:$0xf]
        %v3203 = vld [vmem:[%s375 + $0x98] sm:$0xf]
        %v3204 = vld [vmem:[%s375 + $0x9c] sm:$0xf]
        %v3205 = vld [vmem:[%s375 + $0xa0] sm:$0xf]
        %v3206 = vld [vmem:[%s375 + $0xa4] sm:$0xf]
        %v3207 = vld [vmem:[%s375 + $0xa8] sm:$0xf]
        %v3208 = vld [vmem:[%s375 + $0xac] sm:$0xf]
        %v3209 = vld [vmem:[%s375 + $0xb0] sm:$0xf]
        %v3210 = vld [vmem:[%s375 + $0xb4] sm:$0xf]
        %v3211 = vld [vmem:[%s375 + $0xb8] sm:$0xf]
        %v3212 = vld [vmem:[%s375 + $0xbc] sm:$0xf]
        %v3213 = vld [vmem:[%s375 + $0xc0] sm:$0xf]
        %v3214 = vld [vmem:[%s375 + $0xc4] sm:$0xf]
        %v3215 = vld [vmem:[%s375 + $0xc8] sm:$0xf]
        %v3216 = vld [vmem:[%s375 + $0xcc] sm:$0xf]
        %v3217 = vld [vmem:[%s375 + $0xd0] sm:$0xf]
        %v3218 = vld [vmem:[%s375 + $0xd4] sm:$0xf]
        %v3219 = vld [vmem:[%s375 + $0xd8] sm:$0xf]
        %v3220 = vld [vmem:[%s375 + $0xdc] sm:$0xf]
        %v3221 = vld [vmem:[%s375 + $0xe0] sm:$0xf]
        %v3222 = vld [vmem:[%s375 + $0xe4] sm:$0xf]
        %v3223 = vld [vmem:[%s375 + $0xe8] sm:$0xf]
        %v3224 = vld [vmem:[%s375 + $0xec] sm:$0xf]
        %v3225 = vld [vmem:[%s375 + $0xf0] sm:$0xf]
        %v3226 = vld [vmem:[%s375 + $0xf4] sm:$0xf]
        %v3227 = vld [vmem:[%s375 + $0xf8] sm:$0xf]
        %v3228 = vld [vmem:[%s375 + $0xfc] sm:$0xf]
        %v3229 = vld [vmem:[%s375 + $0x100] sm:$0xf]
        %v3230 = vld [vmem:[%s375 + $0x104] sm:$0xf]
        %v3231 = vld [vmem:[%s375 + $0x108] sm:$0xf]
        %v3232 = vld [vmem:[%s375 + $0x10c] sm:$0xf]
        %v3233 = vld [vmem:[%s375 + $0x110] sm:$0xf]
        %v3234 = vld [vmem:[%s375 + $0x114] sm:$0xf]
        %v3235 = vld [vmem:[%s375 + $0x118] sm:$0xf]
        %v3236 = vld [vmem:[%s375 + $0x11c] sm:$0xf]
        %v3237 = vld [vmem:[%s375 + $0x120] sm:$0xf]
        %v3238 = vld [vmem:[%s375 + $0x124] sm:$0xf]
        %v3239 = vld [vmem:[%s375 + $0x128] sm:$0xf]
        %v3240 = vld [vmem:[%s375 + $0x12c] sm:$0xf]
        %v3241 = vld [vmem:[%s375 + $0x130] sm:$0xf]
        %v3242 = vld [vmem:[%s375 + $0x134] sm:$0xf]
        %v3243 = vld [vmem:[%s375 + $0x138] sm:$0xf]
        %v3244 = vld [vmem:[%s375 + $0x13c] sm:$0xf]
        %v3245 = vld [vmem:[%s375 + $0x140] sm:$0xf]
        %v3246 = vld [vmem:[%s375 + $0x144] sm:$0xf]
        %v3247 = vld [vmem:[%s375 + $0x148] sm:$0xf]
        %v3248 = vld [vmem:[%s375 + $0x14c] sm:$0xf]
        %v3249 = vld [vmem:[%s375 + $0x150] sm:$0xf]
        %v3250 = vld [vmem:[%s375 + $0x154] sm:$0xf]
        %v3251 = vld [vmem:[%s375 + $0x158] sm:$0xf]
        %v3252 = vld [vmem:[%s375 + $0x15c] sm:$0xf]
        %v3253 = vld [vmem:[%s375 + $0x160] sm:$0xf]
        %v3254 = vld [vmem:[%s375 + $0x164] sm:$0xf]
        %v3255 = vld [vmem:[%s375 + $0x168] sm:$0xf]
        %v3256 = vld [vmem:[%s375 + $0x16c] sm:$0xf]
        %v3257 = vld [vmem:[%s375 + $0x170] sm:$0xf]
        %v3258 = vld [vmem:[%s375 + $0x174] sm:$0xf]
        %v3259 = vld [vmem:[%s375 + $0x178] sm:$0xf]
        %v3260 = vld [vmem:[%s375 + $0x17c] sm:$0xf]
        %v3357 = vunpack.c.l.b16 %v3165
        %v3358 = vunpack.c.l.b16 %v3166
        %v3359 = vunpack.c.l.b16 %v3167
        %v3360 = vunpack.c.l.b16 %v3168
        %v3361 = vunpack.c.l.b16 %v3169
        %v3362 = vunpack.c.l.b16 %v3170
        %v3363 = vunpack.c.l.b16 %v3171
        %v3364 = vunpack.c.l.b16 %v3172
        %v3365 = vunpack.c.l.b16 %v3173
        %v3366 = vunpack.c.l.b16 %v3174
        %v3367 = vunpack.c.l.b16 %v3175
        %v3368 = vunpack.c.l.b16 %v3176
        %v3369 = vunpack.c.l.b16 %v3177
        %v3370 = vunpack.c.l.b16 %v3178
        %v3371 = vunpack.c.l.b16 %v3179
        %v3372 = vunpack.c.l.b16 %v3180
        %v3373 = vunpack.c.l.b16 %v3181
        %v3374 = vunpack.c.l.b16 %v3182
        %v3375 = vunpack.c.l.b16 %v3183
        %v3376 = vunpack.c.l.b16 %v3184
        %v3377 = vunpack.c.l.b16 %v3185
        %v3378 = vunpack.c.l.b16 %v3186
        %v3379 = vunpack.c.l.b16 %v3187
        %v3380 = vunpack.c.l.b16 %v3188
        %v3381 = vunpack.c.l.b16 %v3189
        %v3382 = vunpack.c.l.b16 %v3190
        %v3383 = vunpack.c.l.b16 %v3191
        %v3384 = vunpack.c.l.b16 %v3192
        %v3385 = vunpack.c.l.b16 %v3193
        %v3386 = vunpack.c.l.b16 %v3194
        %v3387 = vunpack.c.l.b16 %v3195
        %v3388 = vunpack.c.l.b16 %v3196
        %v3389 = vunpack.c.l.b16 %v3197
        %v3390 = vunpack.c.l.b16 %v3198
        %v3391 = vunpack.c.l.b16 %v3199
        %v3392 = vunpack.c.l.b16 %v3200
        %v3393 = vunpack.c.l.b16 %v3201
        %v3394 = vunpack.c.l.b16 %v3202
        %v3395 = vunpack.c.l.b16 %v3203
        %v3396 = vunpack.c.l.b16 %v3204
        %v3397 = vunpack.c.l.b16 %v3205
        %v3398 = vunpack.c.l.b16 %v3206
        %v3399 = vunpack.c.l.b16 %v3207
        %v3400 = vunpack.c.l.b16 %v3208
        %v3401 = vunpack.c.l.b16 %v3209
        %v3402 = vunpack.c.l.b16 %v3210
        %v3403 = vunpack.c.l.b16 %v3211
        %v3404 = vunpack.c.l.b16 %v3212
        %v3405 = vunpack.c.l.b16 %v3213
        %v3406 = vunpack.c.l.b16 %v3214
        %v3407 = vunpack.c.l.b16 %v3215
        %v3408 = vunpack.c.l.b16 %v3216
        %v3409 = vunpack.c.l.b16 %v3217
        %v3410 = vunpack.c.l.b16 %v3218
        %v3411 = vunpack.c.l.b16 %v3219
        %v3412 = vunpack.c.l.b16 %v3220
        %v3413 = vunpack.c.l.b16 %v3221
        %v3414 = vunpack.c.l.b16 %v3222
        %v3415 = vunpack.c.l.b16 %v3223
        %v3416 = vunpack.c.l.b16 %v3224
        %v3417 = vunpack.c.l.b16 %v3225
        %v3418 = vunpack.c.l.b16 %v3226
        %v3419 = vunpack.c.l.b16 %v3227
        %v3420 = vunpack.c.l.b16 %v3228
        %v3421 = vunpack.c.l.b16 %v3229
        %v3422 = vunpack.c.l.b16 %v3230
        %v3423 = vunpack.c.l.b16 %v3231
        %v3424 = vunpack.c.l.b16 %v3232
        %v3425 = vunpack.c.l.b16 %v3233
        %v3426 = vunpack.c.l.b16 %v3234
        %v3427 = vunpack.c.l.b16 %v3235
        %v3428 = vunpack.c.l.b16 %v3236
        %v3429 = vunpack.c.l.b16 %v3237
        %v3430 = vunpack.c.l.b16 %v3238
        %v3431 = vunpack.c.l.b16 %v3239
        %v3432 = vunpack.c.l.b16 %v3240
        %v3433 = vunpack.c.l.b16 %v3241
        %v3434 = vunpack.c.l.b16 %v3242
        %v3435 = vunpack.c.l.b16 %v3243
        %v3436 = vunpack.c.l.b16 %v3244
        %v3437 = vunpack.c.l.b16 %v3245
        %v3438 = vunpack.c.l.b16 %v3246
        %v3439 = vunpack.c.l.b16 %v3247
        %v3440 = vunpack.c.l.b16 %v3248
        %v3441 = vunpack.c.l.b16 %v3249
        %v3442 = vunpack.c.l.b16 %v3250
        %v3443 = vunpack.c.l.b16 %v3251
        %v3444 = vunpack.c.l.b16 %v3252
        %v3445 = vunpack.c.l.b16 %v3253
        %v3446 = vunpack.c.l.b16 %v3254
        %v3447 = vunpack.c.l.b16 %v3255
        %v3448 = vunpack.c.l.b16 %v3256
        %v3449 = vunpack.c.l.b16 %v3257
        %v3450 = vunpack.c.l.b16 %v3258
        %v3451 = vunpack.c.l.b16 %v3259
        %v3452 = vunpack.c.l.b16 %v3260
        %v3453 = vpack.c.b16 %v3358, %v3357
        %v3454 = vpack.c.b16 %v3360, %v3359
        %v3455 = vpack.c.b16 %v3362, %v3361
        %v3456 = vpack.c.b16 %v3364, %v3363
        %v3457 = vpack.c.b16 %v3366, %v3365
        %v3458 = vpack.c.b16 %v3368, %v3367
        %v3459 = vpack.c.b16 %v3370, %v3369
        %v3460 = vpack.c.b16 %v3372, %v3371
        %v3461 = vpack.c.b16 %v3374, %v3373
        %v3462 = vpack.c.b16 %v3376, %v3375
        %v3463 = vpack.c.b16 %v3378, %v3377
        %v3464 = vpack.c.b16 %v3380, %v3379
        %v3465 = vpack.c.b16 %v3382, %v3381
        %v3466 = vpack.c.b16 %v3384, %v3383
        %v3467 = vpack.c.b16 %v3386, %v3385
        %v3468 = vpack.c.b16 %v3388, %v3387
        %v3469 = vpack.c.b16 %v3390, %v3389
        %v3470 = vpack.c.b16 %v3392, %v3391
        %v3471 = vpack.c.b16 %v3394, %v3393
        %v3472 = vpack.c.b16 %v3396, %v3395
        %v3473 = vpack.c.b16 %v3398, %v3397
        %v3474 = vpack.c.b16 %v3400, %v3399
        %v3475 = vpack.c.b16 %v3402, %v3401
        %v3476 = vpack.c.b16 %v3404, %v3403
        %v3477 = vpack.c.b16 %v3406, %v3405
        %v3478 = vpack.c.b16 %v3408, %v3407
        %v3479 = vpack.c.b16 %v3410, %v3409
        %v3480 = vpack.c.b16 %v3412, %v3411
        %v3481 = vpack.c.b16 %v3414, %v3413
        %v3482 = vpack.c.b16 %v3416, %v3415
        %v3483 = vpack.c.b16 %v3418, %v3417
        %v3484 = vpack.c.b16 %v3420, %v3419
        %v3485 = vpack.c.b16 %v3422, %v3421
        %v3486 = vpack.c.b16 %v3424, %v3423
        %v3487 = vpack.c.b16 %v3426, %v3425
        %v3488 = vpack.c.b16 %v3428, %v3427
        %v3489 = vpack.c.b16 %v3430, %v3429
        %v3490 = vpack.c.b16 %v3432, %v3431
        %v3491 = vpack.c.b16 %v3434, %v3433
        %v3492 = vpack.c.b16 %v3436, %v3435
        %v3493 = vpack.c.b16 %v3438, %v3437
        %v3494 = vpack.c.b16 %v3440, %v3439
        %v3495 = vpack.c.b16 %v3442, %v3441
        %v3496 = vpack.c.b16 %v3444, %v3443
        %v3497 = vpack.c.b16 %v3446, %v3445
        %v3498 = vpack.c.b16 %v3448, %v3447
        %v3499 = vpack.c.b16 %v3450, %v3449
        %v3500 = vpack.c.b16 %v3452, %v3451
        %3549 = vmatprep.subr.bf16.mxu0 0
        %3550 = vmatpush1.bf16.msra.mxu0 %v3460
        %3551 = vmatprep.subr.bf16.mxu0 0
        %3552 = vmatpush1.bf16.msra.mxu0 %v3459
        %3553 = vmatprep.subr.bf16.mxu0 0
        %3554 = vmatpush1.bf16.msra.mxu0 %v3458
        %3555 = vmatprep.subr.bf16.mxu0 0
        %3556 = vmatpush1.bf16.msra.mxu0 %v3457
        %3557 = vmatprep.subr.bf16.mxu0 0
        %3558 = vmatpush1.bf16.msra.mxu0 %v3456
        %3559 = vmatprep.subr.bf16.mxu0 0
        %3560 = vmatpush1.bf16.msra.mxu0 %v3455
        %3561 = vmatprep.subr.bf16.mxu0 0
        %3562 = vmatpush1.bf16.msra.mxu0 %v3454
        %3563 = vmatprep.subr.bf16.mxu0 0
        %3564 = vmatpush1.bf16.msra.mxu0 %v3453
        %3565 = vmatprep.subr.bf16.mxu0 0
        %3566 = vmatpush2.bf16.msra.mxu0 %v3468
        %3567 = vmatprep.subr.bf16.mxu0 0
        %3568 = vmatpush2.bf16.msra.mxu0 %v3467
        %3569 = vmatprep.subr.bf16.mxu0 0
        %3570 = vmatpush2.bf16.msra.mxu0 %v3466
        %3571 = vmatprep.subr.bf16.mxu0 0
        %3572 = vmatpush2.bf16.msra.mxu0 %v3465
        %3573 = vmatprep.subr.bf16.mxu0 0
        %3574 = vmatpush2.bf16.msra.mxu0 %v3464
        %3575 = vmatprep.subr.bf16.mxu0 0
        %3576 = vmatpush2.bf16.msra.mxu0 %v3463
        %3577 = vmatprep.subr.bf16.mxu0 0
        %3578 = vmatpush2.bf16.msra.mxu0 %v3462
        %3579 = vmatprep.subr.bf16.mxu0 0
        %3580 = vmatpush2.bf16.msra.mxu0 %v3461
        %3581 = vmatprep.mubr.bf16.mxu0 %v3146
        %3582 = vmatmul.mubr.bf16.gmra.mxu0 %v3145
        %v3583 = vpop.f32.mrf.mxu0
        %v3584 = vadd.f32 0.0, %v3583
        %v3585 = vpop.f32.mrf.mxu0
        %v3586 = vpop.f32.mrf.mxu0
        %v3587 = vpop.f32.mrf.mxu0
        %3588 = vdwg.mxu0
        %3589 = vmatprep.subr.bf16.mxu0 0
        %3590 = vmatpush1.bf16.msra.mxu0 %v3476
        %3591 = vmatprep.subr.bf16.mxu0 0
        %3592 = vmatpush1.bf16.msra.mxu0 %v3475
        %3593 = vmatprep.subr.bf16.mxu0 0
        %3594 = vmatpush1.bf16.msra.mxu0 %v3474
        %3595 = vmatprep.subr.bf16.mxu0 0
        %3596 = vmatpush1.bf16.msra.mxu0 %v3473
        %3597 = vmatprep.subr.bf16.mxu0 0
        %3598 = vmatpush1.bf16.msra.mxu0 %v3472
        %3599 = vmatprep.subr.bf16.mxu0 0
        %3600 = vmatpush1.bf16.msra.mxu0 %v3471
        %3601 = vmatprep.subr.bf16.mxu0 0
        %3602 = vmatpush1.bf16.msra.mxu0 %v3470
        %3603 = vmatprep.subr.bf16.mxu0 0
        %3604 = vmatpush1.bf16.msra.mxu0 %v3469
        %3605 = vmatprep.subr.bf16.mxu0 0
        %3606 = vmatpush2.bf16.msra.mxu0 %v3484
        %3607 = vmatprep.subr.bf16.mxu0 0
        %3608 = vmatpush2.bf16.msra.mxu0 %v3483
        %3609 = vmatprep.subr.bf16.mxu0 0
        %3610 = vmatpush2.bf16.msra.mxu0 %v3482
        %3611 = vmatprep.subr.bf16.mxu0 0
        %3612 = vmatpush2.bf16.msra.mxu0 %v3481
        %3613 = vmatprep.subr.bf16.mxu0 0
        %3614 = vmatpush2.bf16.msra.mxu0 %v3480
        %3615 = vmatprep.subr.bf16.mxu0 0
        %3616 = vmatpush2.bf16.msra.mxu0 %v3479
        %3617 = vmatprep.subr.bf16.mxu0 0
        %3618 = vmatpush2.bf16.msra.mxu0 %v3478
        %3619 = vmatprep.subr.bf16.mxu0 0
        %3620 = vmatpush2.bf16.msra.mxu0 %v3477
        %3621 = vmatprep.mubr.bf16.mxu0 %v3148
        %3622 = vmatmul.mubr.bf16.gmra.mxu0 %v3147
        %v3623 = vpop.f32.mrf.mxu0
        %v3624 = vadd.f32 %v3584, %v3623
        %v3625 = vpop.f32.mrf.mxu0
        %v3626 = vpop.f32.mrf.mxu0
        %v3627 = vpop.f32.mrf.mxu0
        %3628 = vdwg.mxu0
        %3629 = vmatprep.subr.bf16.mxu0 0
        %3630 = vmatpush1.bf16.msra.mxu0 %v3492
        %3631 = vmatprep.subr.bf16.mxu0 0
        %3632 = vmatpush1.bf16.msra.mxu0 %v3491
        %3633 = vmatprep.subr.bf16.mxu0 0
        %3634 = vmatpush1.bf16.msra.mxu0 %v3490
        %3635 = vmatprep.subr.bf16.mxu0 0
        %3636 = vmatpush1.bf16.msra.mxu0 %v3489
        %3637 = vmatprep.subr.bf16.mxu0 0
        %3638 = vmatpush1.bf16.msra.mxu0 %v3488
        %3639 = vmatprep.subr.bf16.mxu0 0
        %3640 = vmatpush1.bf16.msra.mxu0 %v3487
        %3641 = vmatprep.subr.bf16.mxu0 0
        %3642 = vmatpush1.bf16.msra.mxu0 %v3486
        %3643 = vmatprep.subr.bf16.mxu0 0
        %3644 = vmatpush1.bf16.msra.mxu0 %v3485
        %3645 = vmatprep.subr.bf16.mxu0 0
        %3646 = vmatpush2.bf16.msra.mxu0 %v3500
        %3647 = vmatprep.subr.bf16.mxu0 0
        %3648 = vmatpush2.bf16.msra.mxu0 %v3499
        %3649 = vmatprep.subr.bf16.mxu0 0
        %3650 = vmatpush2.bf16.msra.mxu0 %v3498
        %3651 = vmatprep.subr.bf16.mxu0 0
        %3652 = vmatpush2.bf16.msra.mxu0 %v3497
        %3653 = vmatprep.subr.bf16.mxu0 0
        %3654 = vmatpush2.bf16.msra.mxu0 %v3496
        %3655 = vmatprep.subr.bf16.mxu0 0
        %3656 = vmatpush2.bf16.msra.mxu0 %v3495
        %3657 = vmatprep.subr.bf16.mxu0 0
        %3658 = vmatpush2.bf16.msra.mxu0 %v3494
        %3659 = vmatprep.subr.bf16.mxu0 0
        %3660 = vmatpush2.bf16.msra.mxu0 %v3493
        %3661 = vmatprep.mubr.bf16.mxu0 %v3150
        %3662 = vmatmul.mubr.bf16.gmra.mxu0 %v3149
        %v3663 = vpop.f32.mrf.mxu0
        %v3664 = vadd.f32 %v3624, %v3663
        %v3665 = vpop.f32.mrf.mxu0
        %v3666 = vpop.f32.mrf.mxu0
        %v3667 = vpop.f32.mrf.mxu0
        %3668 = vdwg.mxu0
        %v3669 = vadd.f32 %v3164, %v3664
        %vm3670 = vcmask 9216
        %3671 = vst.msk [vmem:[#allocation11] sm:$0x3] %vm3670, %v3669
        // Predicated region
        $region69: #{tpu_custom_call.1} parent=43 // pred_check
          %p3672 = pneg %p184
        $region70: #{tpu_custom_call.1} parent=43 // pred_check_branch
          %3674 = sbr.rel (%p3672) target = $region72
        $region71: #{tpu_custom_call.1} parent=43 // pred_region
          %s3676 = ssub.s32 32, 32
          %3677 = vsyncadd [#allocation4], %s3676
          %s3679 = sshll.u32 [#allocation11], 4
          %s3680 = int_to_ptr.vmem [resolvable:$true] %s3679
          %3682 = dma.vmem_to_hbm [thread:$0]  %s3680, 32, %s6, [#allocation4]
        $region72: #{tpu_custom_call.1} parent=43 // pred_fallthru
          _
        // Predicated region
        $region73: #{tpu_custom_call.1} parent=43 // pred_check
          %p3683 = pneg %p184
        $region74: #{tpu_custom_call.1} parent=43 // pred_check_branch
          %3685 = sbr.rel (%p3683) target = $region76
        $region75: #{tpu_custom_call.1} parent=43 // pred_region
          %3686 = dma.done [#allocation4], 32
        $region76: #{tpu_custom_call.1} parent=43 // pred_fallthru
          _
      $region44: #{tpu_custom_call.1} parent=5 // pred_fallthru
        _
      %p3687 = scmp.le.s32.totalorder 2, %s20
      // Predicated region
      $region77: #{tpu_custom_call.1} parent=5 // pred_check
        %p3688 = pneg %p3687
      $region78: #{tpu_custom_call.1} parent=5 // pred_check_branch
        %3690 = sbr.rel (%p3688) target = $region80
      $region79: #{tpu_custom_call.1} parent=5 // pred_region
        %s3691 = ssub.s32 %s20, 2
      $region80: #{tpu_custom_call.1} parent=5 // pred_fallthru
        _
    $region6: #{tpu_custom_call.1} parent=1 // loop_footer
      %s24 = sadd.s32 1, %s20
    $region7: #{tpu_custom_call.1} parent=1 // loop_footer_branch
      %19 = sbr.rel target = $region3
    $region8: #{tpu_custom_call.1} parent=1 // loop_exit
      _
    %3692 = vsyncpa [#allocation3], 1
    %s3693 = scalar_lea.sflag [#allocation3], 1
    %3694 = vsyncpa %s3693, 1
    %3695 = vsyncpa [#allocation6], 1
    %s3696 = scalar_lea.sflag [#allocation6], 1
    %3697 = vsyncpa %s3696, 1
    %3698 = vsyncpa [#allocation9], 1
    %s3699 = scalar_lea.sflag [#allocation9], 1
    %3700 = vsyncpa %s3699, 1
    %3701 = vsyncpa [#allocation4], 1
    %s3702 = scalar_lea.sflag [#allocation4], 1
    %3703 = vsyncpa %s3702, 1

</llo_original>
